<compile_context>
chip_gen: v6e
topology: v6e:2x2x1
jax: 0.10.0
libtpu: 0.0.40
codegen_flags: <defaults>
</compile_context>

<pallas_src>
import jax
import jax.numpy as jnp
from jax.scipy.linalg import expm
from jax.experimental import pallas as pl
from jax.experimental.pallas import tpu as pltpu

# ---------------- model configuration (small, forward-consistent) ------------
B = 2                        # batch
N = 128                      # points per cloud
C = 3                        # point feature dim (xyz)
C_IN = 8                     # zero-extended channel dim for the first matmul
TRANS_DIM = 32               # PointBERT "trans_dim" stand-in
FEAT_DIM = 2 * TRANS_DIM     # encoder output dim = trans_dim * 2
ENC_HID = 64                 # hidden width of the stand-in point MLP
DEC_L1, DEC_L2 = 128, 64     # decoder MLP layers (config['decoder']['layers'])
K = 4                        # num_gaussians
D = 3                        # output_dim
GMM_OUT = K * (D + D * D + 1)    # = 52 raw params per batch element
OUT_PAD = 128                # lane-dense output width
SIG0 = K * D + K             # start of sigma block in the reordered head (16)

# packed weight-slab row offsets (all multiples of 8 -> clean sublane slices)
ROW_EW1 = 0                   # enc_w1  (3->8 rows, ENC_HID cols)   rows   0:8
ROW_EW2 = 8                   # enc_w2  (ENC_HID, TRANS_DIM)        rows   8:72
ROW_DW1 = 72                  # dec_w1  (FEAT_DIM, DEC_L1)          rows  72:136
ROW_DW2 = 136                 # dec_w2  (DEC_L1, DEC_L2)            rows 136:264
ROW_DW3 = 264                 # dec_w3  (DEC_L2, GMM_OUT, reordered) rows 264:328
W_ROWS = ROW_DW3 + DEC_L2     # 328
B_ROWS = 8

# symmetric 3x3 expm (scaling-and-squaring + Taylor) settings
EXPM_SQUARINGS = 7            # scale sigma by 2^-7 before the Taylor series
EXPM_TAYLOR_ORDER = 8


# ------------------------------- fused kernel --------------------------------
def n2m_fused_kernel(pc_ref, w_ref, b_ref, o_ref):
    """Encoder + [max,mean] pool + decoder MLP + GMM head (expm, softmax)."""
    # ---- encoder: per-point MLP on a flat (B*N, C_IN) LHS --------------------
    x3 = pc_ref[...].reshape(B * N, C)                                  # (256, 3)
    x = jnp.concatenate(
        [x3, jnp.zeros((B * N, C_IN - C), jnp.float32)], axis=-1)      # (256, 8)
    h = jnp.dot(x, w_ref[ROW_EW1:ROW_EW1 + C_IN, 0:ENC_HID],
                preferred_element_type=jnp.float32)
    h = jnp.maximum(h + b_ref[0:1, 0:ENC_HID], 0.0)                    # (256, 64)
    t = (jnp.dot(h, w_ref[ROW_EW2:ROW_EW2 + ENC_HID, 0:TRANS_DIM],
                 preferred_element_type=jnp.float32)
         + b_ref[1:2, 0:TRANS_DIM])                                    # (256, 32)

    # ---- [max, mean] pooling over points: static sublane slices, no reshape --
    mx_parts, mn_parts = [], []
    for bi in range(B):
        tb = t[bi * N:(bi + 1) * N, :]                                 # (N, 32)
        mx_parts.append(jnp.max(tb, axis=0, keepdims=True))
        mn_parts.append(jnp.mean(tb, axis=0, keepdims=True))
    mx = jnp.concatenate(mx_parts, axis=0)                             # (B, 32)
    mn = jnp.concatenate(mn_parts, axis=0)                             # (B, 32)

    # ---- decoder MLP: dec_w1 consumed as two sublane halves (no feat concat) -
    h1 = (jnp.dot(mx, w_ref[ROW_DW1:ROW_DW1 + TRANS_DIM, 0:DEC_L1],
                  preferred_element_type=jnp.float32)
          + jnp.dot(mn, w_ref[ROW_DW1 + TRANS_DIM:ROW_DW1 + FEAT_DIM, 0:DEC_L1],
                    preferred_element_type=jnp.float32)
          + b_ref[2:3, 0:DEC_L1])
    h1 = jnp.maximum(h1, 0.0)                                          # (B, 128)
    h2 = (jnp.dot(h1, w_ref[ROW_DW2:ROW_DW2 + DEC_L1, 0:DEC_L2],
                  preferred_element_type=jnp.float32)
          + b_ref[3:4, 0:DEC_L2])
    h2 = jnp.maximum(h2, 0.0)                                          # (B, 64)
    # final layer columns are host-reordered to [means | logits | sigma e-major]
    g = (jnp.dot(h2, w_ref[ROW_DW3:ROW_DW3 + DEC_L2, 0:GMM_OUT],
                 preferred_element_type=jnp.float32)
         + b_ref[4:5, 0:GMM_OUT])                                      # (B, 52)

    means = g[:, 0:K * D]                                              # (B, 12)
    logits = g[:, K * D:K * D + K]                                     # (B, 4)

    # ---- GMM head, fused: symmetric 3x3 expm on nine (B, K) entry slabs ------
    s = [g[:, SIG0 + 4 * e:SIG0 + 4 * (e + 1)] for e in range(D * D)]  # 9 x (B,K)
    a = []
    for i in range(D):
        for j in range(D):
            v = 0.5 * (s[D * i + j] + s[D * j + i])       # symmetrize
            if i == j:
                v = v + 1e-6                              # + eps * I
            a.append(v)
    scale = 1.0 / (2.0 ** EXPM_SQUARINGS)
    a = [v * scale for v in a]

    eye = (1.0, 0.0, 0.0, 0.0, 1.0, 0.0, 0.0, 0.0, 1.0)

    def mat_mul(xm, ym):        # 3x3 product on entry slabs, pure elementwise
        return [sum(xm[D * i + kk] * ym[kk * D + j] for kk in range(D))
                for i in range(D) for j in range(D)]

    # Horner-form Taylor: exp(A_s) ~= I + A_s(I + A_s/2(... (I + A_s/m)))
    expa = [jnp.full((B, K), ev, jnp.float32) for ev in eye]
    for n in range(EXPM_TAYLOR_ORDER, 0, -1):
        prod = mat_mul(a, expa)
        expa = [eye[e] + prod[e] * (1.0 / n) for e in range(D * D)]
    # undo the scaling: exp(A) = exp(A_s)^(2^EXPM_SQUARINGS)
    for _ in range(EXPM_SQUARINGS):
        expa = mat_mul(expa, expa)
    covs_em = jnp.concatenate(expa, axis=-1)                           # (B, 36)

    # softmax over the K mixture logits
    lmax = jnp.max(logits, axis=-1, keepdims=True)
    le = jnp.exp(logits - lmax)
    wts = le / jnp.sum(le, axis=-1, keepdims=True)                     # (B, 4)

    pad = jnp.zeros((B, OUT_PAD - GMM_OUT), jnp.float32)
    # single lane-dense unmasked store
    o_ref[...] = jnp.concatenate([means, covs_em, wts, pad], axis=-1)  # (B, 128)


# ------------------------------- wrapper --------------------------------------
def n2mnet_forward(point_cloud, params):
    """point_cloud (B,N,C) -> (means (B,K,D), covs (B,K,D,D), weights (B,K))."""
    out = pl.pallas_call(
        n2m_fused_kernel,
        out_shape=jax.ShapeDtypeStruct((B, OUT_PAD), jnp.float32),
        grid=(1,),
        in_specs=[
            pl.BlockSpec((B, N, C), lambda i: (0, 0, 0)),
            pl.BlockSpec((W_ROWS, 128), lambda i: (0, 0)),
            pl.BlockSpec((B_ROWS, 128), lambda i: (0, 0)),
        ],
        out_specs=pl.BlockSpec((B, OUT_PAD), lambda i: (0, 0)),
        compiler_params=pltpu.CompilerParams(dimension_semantics=("arbitrary",)),
        cost_estimate=pl.CostEstimate(flops=1_500_000, transcendentals=16,
                                      bytes_accessed=180_000),
    )(point_cloud, params["w_slab"], params["b_slab"])

    means = out[:, :K * D].reshape(B, K, D)
    covs = out[:, K * D:K * D + K * D * D].reshape(B, D * D, K)        # entry-major
    covs = jnp.transpose(covs, (0, 2, 1)).reshape(B, K, D, D)
    weights = out[:, K * D + K * D * D:K * D + K * D * D + K]
    return means, covs, weights


# --------------------------- parameter construction ---------------------------
def _reorder_head_cols(m):
    """(..., 52) k-major gmm columns -> [means | logits | sigma entry-major]."""
    lead = m.shape[:-1]
    means = m[..., :K * D]
    sig = m[..., K * D:K * D + K * D * D].reshape(*lead, K, D * D)
    sig_em = jnp.swapaxes(sig, -1, -2).reshape(*lead, K * D * D)       # col = e*K + k
    logits = m[..., -K:]
    return jnp.concatenate([means, logits, sig_em], axis=-1)


def pack_params(p):
    """Build the two DMA slabs once, host-side."""
    w = jnp.zeros((W_ROWS, 128), jnp.float32)
    w = w.at[ROW_EW1:ROW_EW1 + C, 0:ENC_HID].set(p["enc_w1"])
    w = w.at[ROW_EW2:ROW_EW2 + ENC_HID, 0:TRANS_DIM].set(p["enc_w2"])
    w = w.at[ROW_DW1:ROW_DW1 + FEAT_DIM, 0:DEC_L1].set(p["dec_w1"])
    w = w.at[ROW_DW2:ROW_DW2 + DEC_L1, 0:DEC_L2].set(p["dec_w2"])
    w = w.at[ROW_DW3:ROW_DW3 + DEC_L2, 0:GMM_OUT].set(_reorder_head_cols(p["dec_w3"]))

    bm = jnp.zeros((B_ROWS, 128), jnp.float32)
    bm = bm.at[0, 0:ENC_HID].set(p["enc_b1"][0])
    bm = bm.at[1, 0:TRANS_DIM].set(p["enc_b2"][0])
    bm = bm.at[2, 0:DEC_L1].set(p["dec_b1"][0])
    bm = bm.at[3, 0:DEC_L2].set(p["dec_b2"][0])
    bm = bm.at[4, 0:GMM_OUT].set(_reorder_head_cols(p["dec_b3"])[0])
    return w, bm


def init_params(key):
    def dense(k, fan_in, fan_out):
        kw, kb = jax.random.split(k)
        s = 1.0 / jnp.sqrt(jnp.float32(fan_in))
        wgt = jax.random.uniform(kw, (fan_in, fan_out), jnp.float32, -s, s)
        bias = jax.random.uniform(kb, (1, fan_out), jnp.float32, -s, s)
        return wgt, bias

    ks = jax.random.split(key, 5)
    p = {}
    p["enc_w1"], p["enc_b1"] = dense(ks[0], C, ENC_HID)
    p["enc_w2"], p["enc_b2"] = dense(ks[1], ENC_HID, TRANS_DIM)
    p["dec_w1"], p["dec_b1"] = dense(ks[2], FEAT_DIM, DEC_L1)
    p["dec_w2"], p["dec_b2"] = dense(ks[3], DEC_L1, DEC_L2)
    p["dec_w3"], p["dec_b3"] = dense(ks[4], DEC_L2, GMM_OUT)
    p["w_slab"], p["b_slab"] = pack_params(p)
    return p


# ------------------------------ pure-JAX reference ----------------------------
def reference_forward(pc, p):
    h = jnp.maximum(jnp.einsum("bnc,ch->bnh", pc, p["enc_w1"]) + p["enc_b1"], 0.0)
    t = jnp.einsum("bnh,ht->bnt", h, p["enc_w2"]) + p["enc_b2"]
    f = jnp.concatenate([t.max(axis=1), t.mean(axis=1)], axis=-1)
    h1 = jnp.maximum(f @ p["dec_w1"] + p["dec_b1"], 0.0)
    h2 = jnp.maximum(h1 @ p["dec_w2"] + p["dec_b2"], 0.0)
    gmm = h2 @ p["dec_w3"] + p["dec_b3"]
    means = gmm[:, :K * D].reshape(B, K, D)
    sigma = gmm[:, K * D:K * D + K * D * D].reshape(B, K, D, D)
    sigma = 0.5 * (sigma + jnp.swapaxes(sigma, -2, -1))
    sigma = sigma + 1e-6 * jnp.eye(D, dtype=sigma.dtype)[None, None]
    covs = jax.vmap(jax.vmap(expm))(sigma)            # reference: Pade expm
    weights = jax.nn.softmax(gmm[:, -K:], axis=-1)
    return means, covs, weights


# ----------------------------------- main --------------------------------------
if __name__ == "__main__":
    key = jax.random.PRNGKey(0)
    k_pc, k_par = jax.random.split(key)
    point_cloud = jax.random.normal(k_pc, (B, N, C), dtype=jnp.float32)
    params = init_params(k_par)

    fwd = jax.jit(n2mnet_forward)
    means, covs, weights = jax.block_until_ready(fwd(point_cloud, params))

    assert means.shape == (B, K, D)
    assert covs.shape == (B, K, D, D)
    assert weights.shape == (B, K)

    # sanity-check the fully fused Pallas path against the pure-JAX reference
    means_ref, covs_ref, weights_ref = reference_forward(point_cloud, params)
    assert jnp.allclose(means, means_ref, atol=1e-3, rtol=1e-3), "means mismatch"
    assert jnp.allclose(covs, covs_ref, atol=1e-3, rtol=1e-3), "covs mismatch"
    assert jnp.allclose(weights, weights_ref, atol=1e-4, rtol=1e-3), "weights mismatch"
    assert jnp.allclose(weights.sum(-1), 1.0, atol=1e-5)

    print("KERNEL_OK")
</pallas_src>

<mosaic_0001>
module attributes {stable_mosaic.version = 11 : i64} {
  func.func @n2m_fused_kernel(%arg0: i32, %arg1: memref<2x128x3xf32, #tpu.memory_space<vmem>>, %arg2: memref<328x128xf32, #tpu.memory_space<vmem>>, %arg3: memref<8x128xf32, #tpu.memory_space<vmem>>, %arg4: memref<2x128xf32, #tpu.memory_space<vmem>>) attributes {dimension_semantics = [#tpu.dimension_semantics<arbitrary>], iteration_bounds = array<i64: 1>, scalar_prefetch = 0 : i64, scratch_operands = 0 : i64, tpu.core_type = #tpu.core_type<tc>, window_params = [{pipeline_mode = #tpu.pipeline_mode<synchronous>, transform_indices = @transform_0, window_bounds = array<i64: 2, 128, 3>}, {pipeline_mode = #tpu.pipeline_mode<synchronous>, transform_indices = @transform_1, window_bounds = array<i64: 328, 128>}, {pipeline_mode = #tpu.pipeline_mode<synchronous>, transform_indices = @transform_2, window_bounds = array<i64: 8, 128>}, {pipeline_mode = #tpu.pipeline_mode<synchronous>, transform_indices = @transform_3, window_bounds = array<i64: 2, 128>}]} {
    %c0 = arith.constant 0 : index
    %c0_0 = arith.constant 0 : index
    %c0_1 = arith.constant 0 : index
    %0 = vector.load %arg1[%c0, %c0_0, %c0_1] : memref<2x128x3xf32, #tpu.memory_space<vmem>>, vector<2x128x3xf32>
    %1 = vector.shape_cast %0 : vector<2x128x3xf32> to vector<256x3xf32>
    %cst = arith.constant 0.000000e+00 : f32
    %2 = vector.broadcast %cst : f32 to vector<256x5xf32>
    %3 = tpu.concatenate %1, %2 in 1 : vector<256x3xf32>, vector<256x5xf32> -> vector<256x8xf32>
    %c0_2 = arith.constant 0 : index
    %c0_3 = arith.constant 0 : index
    %4 = vector.load %arg2[%c0_2, %c0_3] : memref<328x128xf32, #tpu.memory_space<vmem>>, vector<8x64xf32>
    %cst_4 = arith.constant dense<0.000000e+00> : vector<256x64xf32>
    %5 = tpu.matmul %3, %4, %cst_4 {dimension_numbers = #tpu.dot_dimension_numbers<[1], [0], [0], [1], [0, 0, 1, 1], [], []>} : vector<256x8xf32>, vector<8x64xf32>, vector<256x64xf32> -> vector<256x64xf32>
    %c0_5 = arith.constant 0 : index
    %c0_6 = arith.constant 0 : index
    %6 = vector.load %arg3[%c0_5, %c0_6] : memref<8x128xf32, #tpu.memory_space<vmem>>, vector<1x64xf32>
    %7 = vector.broadcast %6 : vector<1x64xf32> to vector<256x64xf32>
    %8 = arith.addf %5, %7 : vector<256x64xf32>
    %cst_7 = arith.constant 0.000000e+00 : f32
    %9 = vector.broadcast %cst_7 : f32 to vector<256x64xf32>
    %10 = arith.maximumf %8, %9 : vector<256x64xf32>
    %c8 = arith.constant 8 : index
    %c0_8 = arith.constant 0 : index
    %11 = vector.load %arg2[%c8, %c0_8] : memref<328x128xf32, #tpu.memory_space<vmem>>, vector<64x32xf32>
    %cst_9 = arith.constant dense<0.000000e+00> : vector<256x32xf32>
    %12 = tpu.matmul %10, %11, %cst_9 {dimension_numbers = #tpu.dot_dimension_numbers<[1], [0], [0], [1], [0, 0, 1, 1], [], []>} : vector<256x64xf32>, vector<64x32xf32>, vector<256x32xf32> -> vector<256x32xf32>
    %c1 = arith.constant 1 : index
    %c0_10 = arith.constant 0 : index
    %13 = vector.load %arg3[%c1, %c0_10] : memref<8x128xf32, #tpu.memory_space<vmem>>, vector<1x32xf32>
    %14 = vector.broadcast %13 : vector<1x32xf32> to vector<256x32xf32>
    %15 = arith.addf %12, %14 : vector<256x32xf32>
    %16 = vector.extract_strided_slice %15 {offsets = [0, 0], sizes = [128, 32], strides = [1, 1]} : vector<256x32xf32> to vector<128x32xf32>
    %cst_11 = arith.constant dense<0xFF800000> : vector<32xf32>
    %17 = vector.multi_reduction <maximumf>, %16, %cst_11 [0] : vector<128x32xf32> to vector<32xf32>
    %18 = vector.shape_cast %17 : vector<32xf32> to vector<1x32xf32>
    %cst_12 = arith.constant dense<0.000000e+00> : vector<32xf32>
    %19 = vector.multi_reduction <add>, %16, %cst_12 [0] : vector<128x32xf32> to vector<32xf32>
    %20 = vector.shape_cast %19 : vector<32xf32> to vector<1x32xf32>
    %cst_13 = arith.constant 1.280000e+02 : f32
    %21 = vector.broadcast %cst_13 : f32 to vector<1x32xf32>
    %22 = arith.divf %20, %21 : vector<1x32xf32>
    %23 = vector.extract_strided_slice %15 {offsets = [128, 0], sizes = [128, 32], strides = [1, 1]} : vector<256x32xf32> to vector<128x32xf32>
    %cst_14 = arith.constant dense<0xFF800000> : vector<32xf32>
    %24 = vector.multi_reduction <maximumf>, %23, %cst_14 [0] : vector<128x32xf32> to vector<32xf32>
    %25 = vector.shape_cast %24 : vector<32xf32> to vector<1x32xf32>
    %cst_15 = arith.constant dense<0.000000e+00> : vector<32xf32>
    %26 = vector.multi_reduction <add>, %23, %cst_15 [0] : vector<128x32xf32> to vector<32xf32>
    %27 = vector.shape_cast %26 : vector<32xf32> to vector<1x32xf32>
    %cst_16 = arith.constant 1.280000e+02 : f32
    %28 = vector.broadcast %cst_16 : f32 to vector<1x32xf32>
    %29 = arith.divf %27, %28 : vector<1x32xf32>
    %30 = tpu.concatenate %18, %25 in 0 : vector<1x32xf32>, vector<1x32xf32> -> vector<2x32xf32>
    %31 = tpu.concatenate %22, %29 in 0 : vector<1x32xf32>, vector<1x32xf32> -> vector<2x32xf32>
    %c72 = arith.constant 72 : index
    %c0_17 = arith.constant 0 : index
    %32 = vector.load %arg2[%c72, %c0_17] : memref<328x128xf32, #tpu.memory_space<vmem>>, vector<32x128xf32>
    %cst_18 = arith.constant dense<0.000000e+00> : vector<2x128xf32>
    %33 = tpu.matmul %30, %32, %cst_18 {dimension_numbers = #tpu.dot_dimension_numbers<[1], [0], [0], [1], [0, 0, 1, 1], [], []>} : vector<2x32xf32>, vector<32x128xf32>, vector<2x128xf32> -> vector<2x128xf32>
    %c104 = arith.constant 104 : index
    %c0_19 = arith.constant 0 : index
    %34 = vector.load %arg2[%c104, %c0_19] : memref<328x128xf32, #tpu.memory_space<vmem>>, vector<32x128xf32>
    %cst_20 = arith.constant dense<0.000000e+00> : vector<2x128xf32>
    %35 = tpu.matmul %31, %34, %cst_20 {dimension_numbers = #tpu.dot_dimension_numbers<[1], [0], [0], [1], [0, 0, 1, 1], [], []>} : vector<2x32xf32>, vector<32x128xf32>, vector<2x128xf32> -> vector<2x128xf32>
    %36 = arith.addf %33, %35 : vector<2x128xf32>
    %c2 = arith.constant 2 : index
    %c0_21 = arith.constant 0 : index
    %37 = vector.load %arg3[%c2, %c0_21] : memref<8x128xf32, #tpu.memory_space<vmem>>, vector<1x128xf32>
    %38 = vector.broadcast %37 : vector<1x128xf32> to vector<2x128xf32>
    %39 = arith.addf %36, %38 : vector<2x128xf32>
    %cst_22 = arith.constant 0.000000e+00 : f32
    %40 = vector.broadcast %cst_22 : f32 to vector<2x128xf32>
    %41 = arith.maximumf %39, %40 : vector<2x128xf32>
    %c136 = arith.constant 136 : index
    %c0_23 = arith.constant 0 : index
    %42 = vector.load %arg2[%c136, %c0_23] : memref<328x128xf32, #tpu.memory_space<vmem>>, vector<128x64xf32>
    %cst_24 = arith.constant dense<0.000000e+00> : vector<2x64xf32>
    %43 = tpu.matmul %41, %42, %cst_24 {dimension_numbers = #tpu.dot_dimension_numbers<[1], [0], [0], [1], [0, 0, 1, 1], [], []>} : vector<2x128xf32>, vector<128x64xf32>, vector<2x64xf32> -> vector<2x64xf32>
    %c3 = arith.constant 3 : index
    %c0_25 = arith.constant 0 : index
    %44 = vector.load %arg3[%c3, %c0_25] : memref<8x128xf32, #tpu.memory_space<vmem>>, vector<1x64xf32>
    %45 = vector.broadcast %44 : vector<1x64xf32> to vector<2x64xf32>
    %46 = arith.addf %43, %45 : vector<2x64xf32>
    %cst_26 = arith.constant 0.000000e+00 : f32
    %47 = vector.broadcast %cst_26 : f32 to vector<2x64xf32>
    %48 = arith.maximumf %46, %47 : vector<2x64xf32>
    %c264 = arith.constant 264 : index
    %c0_27 = arith.constant 0 : index
    %49 = vector.load %arg2[%c264, %c0_27] : memref<328x128xf32, #tpu.memory_space<vmem>>, vector<64x52xf32>
    %cst_28 = arith.constant dense<0.000000e+00> : vector<2x52xf32>
    %50 = tpu.matmul %48, %49, %cst_28 {dimension_numbers = #tpu.dot_dimension_numbers<[1], [0], [0], [1], [0, 0, 1, 1], [], []>} : vector<2x64xf32>, vector<64x52xf32>, vector<2x52xf32> -> vector<2x52xf32>
    %c4 = arith.constant 4 : index
    %c0_29 = arith.constant 0 : index
    %51 = vector.load %arg3[%c4, %c0_29] : memref<8x128xf32, #tpu.memory_space<vmem>>, vector<1x52xf32>
    %52 = vector.broadcast %51 : vector<1x52xf32> to vector<2x52xf32>
    %53 = arith.addf %50, %52 : vector<2x52xf32>
    %54 = vector.extract_strided_slice %53 {offsets = [0, 0], sizes = [2, 12], strides = [1, 1]} : vector<2x52xf32> to vector<2x12xf32>
    %55 = vector.extract_strided_slice %53 {offsets = [0, 12], sizes = [2, 4], strides = [1, 1]} : vector<2x52xf32> to vector<2x4xf32>
    %56 = vector.extract_strided_slice %53 {offsets = [0, 16], sizes = [2, 4], strides = [1, 1]} : vector<2x52xf32> to vector<2x4xf32>
    %57 = vector.extract_strided_slice %53 {offsets = [0, 20], sizes = [2, 4], strides = [1, 1]} : vector<2x52xf32> to vector<2x4xf32>
    %58 = vector.extract_strided_slice %53 {offsets = [0, 24], sizes = [2, 4], strides = [1, 1]} : vector<2x52xf32> to vector<2x4xf32>
    %59 = vector.extract_strided_slice %53 {offsets = [0, 28], sizes = [2, 4], strides = [1, 1]} : vector<2x52xf32> to vector<2x4xf32>
    %60 = vector.extract_strided_slice %53 {offsets = [0, 32], sizes = [2, 4], strides = [1, 1]} : vector<2x52xf32> to vector<2x4xf32>
    %61 = vector.extract_strided_slice %53 {offsets = [0, 36], sizes = [2, 4], strides = [1, 1]} : vector<2x52xf32> to vector<2x4xf32>
    %62 = vector.extract_strided_slice %53 {offsets = [0, 40], sizes = [2, 4], strides = [1, 1]} : vector<2x52xf32> to vector<2x4xf32>
    %63 = vector.extract_strided_slice %53 {offsets = [0, 44], sizes = [2, 4], strides = [1, 1]} : vector<2x52xf32> to vector<2x4xf32>
    %64 = vector.extract_strided_slice %53 {offsets = [0, 48], sizes = [2, 4], strides = [1, 1]} : vector<2x52xf32> to vector<2x4xf32>
    %65 = arith.addf %56, %56 : vector<2x4xf32>
    %cst_30 = arith.constant 5.000000e-01 : f32
    %66 = vector.broadcast %cst_30 : f32 to vector<2x4xf32>
    %67 = arith.mulf %66, %65 : vector<2x4xf32>
    %cst_31 = arith.constant 9.99999997E-7 : f32
    %68 = vector.broadcast %cst_31 : f32 to vector<2x4xf32>
    %69 = arith.addf %67, %68 : vector<2x4xf32>
    %70 = arith.addf %57, %59 : vector<2x4xf32>
    %cst_32 = arith.constant 5.000000e-01 : f32
    %71 = vector.broadcast %cst_32 : f32 to vector<2x4xf32>
    %72 = arith.mulf %71, %70 : vector<2x4xf32>
    %73 = arith.addf %58, %62 : vector<2x4xf32>
    %cst_33 = arith.constant 5.000000e-01 : f32
    %74 = vector.broadcast %cst_33 : f32 to vector<2x4xf32>
    %75 = arith.mulf %74, %73 : vector<2x4xf32>
    %76 = arith.addf %59, %57 : vector<2x4xf32>
    %cst_34 = arith.constant 5.000000e-01 : f32
    %77 = vector.broadcast %cst_34 : f32 to vector<2x4xf32>
    %78 = arith.mulf %77, %76 : vector<2x4xf32>
    %79 = arith.addf %60, %60 : vector<2x4xf32>
    %cst_35 = arith.constant 5.000000e-01 : f32
    %80 = vector.broadcast %cst_35 : f32 to vector<2x4xf32>
    %81 = arith.mulf %80, %79 : vector<2x4xf32>
    %cst_36 = arith.constant 9.99999997E-7 : f32
    %82 = vector.broadcast %cst_36 : f32 to vector<2x4xf32>
    %83 = arith.addf %81, %82 : vector<2x4xf32>
    %84 = arith.addf %61, %63 : vector<2x4xf32>
    %cst_37 = arith.constant 5.000000e-01 : f32
    %85 = vector.broadcast %cst_37 : f32 to vector<2x4xf32>
    %86 = arith.mulf %85, %84 : vector<2x4xf32>
    %87 = arith.addf %62, %58 : vector<2x4xf32>
    %cst_38 = arith.constant 5.000000e-01 : f32
    %88 = vector.broadcast %cst_38 : f32 to vector<2x4xf32>
    %89 = arith.mulf %88, %87 : vector<2x4xf32>
    %90 = arith.addf %63, %61 : vector<2x4xf32>
    %cst_39 = arith.constant 5.000000e-01 : f32
    %91 = vector.broadcast %cst_39 : f32 to vector<2x4xf32>
    %92 = arith.mulf %91, %90 : vector<2x4xf32>
    %93 = arith.addf %64, %64 : vector<2x4xf32>
    %cst_40 = arith.constant 5.000000e-01 : f32
    %94 = vector.broadcast %cst_40 : f32 to vector<2x4xf32>
    %95 = arith.mulf %94, %93 : vector<2x4xf32>
    %cst_41 = arith.constant 9.99999997E-7 : f32
    %96 = vector.broadcast %cst_41 : f32 to vector<2x4xf32>
    %97 = arith.addf %95, %96 : vector<2x4xf32>
    %cst_42 = arith.constant 7.812500e-03 : f32
    %98 = vector.broadcast %cst_42 : f32 to vector<2x4xf32>
    %99 = arith.mulf %69, %98 : vector<2x4xf32>
    %cst_43 = arith.constant 7.812500e-03 : f32
    %100 = vector.broadcast %cst_43 : f32 to vector<2x4xf32>
    %101 = arith.mulf %72, %100 : vector<2x4xf32>
    %cst_44 = arith.constant 7.812500e-03 : f32
    %102 = vector.broadcast %cst_44 : f32 to vector<2x4xf32>
    %103 = arith.mulf %75, %102 : vector<2x4xf32>
    %cst_45 = arith.constant 7.812500e-03 : f32
    %104 = vector.broadcast %cst_45 : f32 to vector<2x4xf32>
    %105 = arith.mulf %78, %104 : vector<2x4xf32>
    %cst_46 = arith.constant 7.812500e-03 : f32
    %106 = vector.broadcast %cst_46 : f32 to vector<2x4xf32>
    %107 = arith.mulf %83, %106 : vector<2x4xf32>
    %cst_47 = arith.constant 7.812500e-03 : f32
    %108 = vector.broadcast %cst_47 : f32 to vector<2x4xf32>
    %109 = arith.mulf %86, %108 : vector<2x4xf32>
    %cst_48 = arith.constant 7.812500e-03 : f32
    %110 = vector.broadcast %cst_48 : f32 to vector<2x4xf32>
    %111 = arith.mulf %89, %110 : vector<2x4xf32>
    %cst_49 = arith.constant 7.812500e-03 : f32
    %112 = vector.broadcast %cst_49 : f32 to vector<2x4xf32>
    %113 = arith.mulf %92, %112 : vector<2x4xf32>
    %cst_50 = arith.constant 7.812500e-03 : f32
    %114 = vector.broadcast %cst_50 : f32 to vector<2x4xf32>
    %115 = arith.mulf %97, %114 : vector<2x4xf32>
    %cst_51 = arith.constant 1.000000e+00 : f32
    %116 = vector.broadcast %cst_51 : f32 to vector<2x4xf32>
    %cst_52 = arith.constant 0.000000e+00 : f32
    %117 = vector.broadcast %cst_52 : f32 to vector<2x4xf32>
    %cst_53 = arith.constant 0.000000e+00 : f32
    %118 = vector.broadcast %cst_53 : f32 to vector<2x4xf32>
    %cst_54 = arith.constant 0.000000e+00 : f32
    %119 = vector.broadcast %cst_54 : f32 to vector<2x4xf32>
    %cst_55 = arith.constant 1.000000e+00 : f32
    %120 = vector.broadcast %cst_55 : f32 to vector<2x4xf32>
    %cst_56 = arith.constant 0.000000e+00 : f32
    %121 = vector.broadcast %cst_56 : f32 to vector<2x4xf32>
    %cst_57 = arith.constant 0.000000e+00 : f32
    %122 = vector.broadcast %cst_57 : f32 to vector<2x4xf32>
    %cst_58 = arith.constant 0.000000e+00 : f32
    %123 = vector.broadcast %cst_58 : f32 to vector<2x4xf32>
    %cst_59 = arith.constant 1.000000e+00 : f32
    %124 = vector.broadcast %cst_59 : f32 to vector<2x4xf32>
    %125 = arith.mulf %99, %116 : vector<2x4xf32>
    %cst_60 = arith.constant 0.000000e+00 : f32
    %126 = vector.broadcast %cst_60 : f32 to vector<2x4xf32>
    %127 = arith.addf %126, %125 : vector<2x4xf32>
    %128 = arith.mulf %101, %119 : vector<2x4xf32>
    %129 = arith.addf %127, %128 : vector<2x4xf32>
    %130 = arith.mulf %103, %122 : vector<2x4xf32>
    %131 = arith.addf %129, %130 : vector<2x4xf32>
    %132 = arith.mulf %99, %117 : vector<2x4xf32>
    %cst_61 = arith.constant 0.000000e+00 : f32
    %133 = vector.broadcast %cst_61 : f32 to vector<2x4xf32>
    %134 = arith.addf %133, %132 : vector<2x4xf32>
    %135 = arith.mulf %101, %120 : vector<2x4xf32>
    %136 = arith.addf %134, %135 : vector<2x4xf32>
    %137 = arith.mulf %103, %123 : vector<2x4xf32>
    %138 = arith.addf %136, %137 : vector<2x4xf32>
    %139 = arith.mulf %99, %118 : vector<2x4xf32>
    %cst_62 = arith.constant 0.000000e+00 : f32
    %140 = vector.broadcast %cst_62 : f32 to vector<2x4xf32>
    %141 = arith.addf %140, %139 : vector<2x4xf32>
    %142 = arith.mulf %101, %121 : vector<2x4xf32>
    %143 = arith.addf %141, %142 : vector<2x4xf32>
    %144 = arith.mulf %103, %124 : vector<2x4xf32>
    %145 = arith.addf %143, %144 : vector<2x4xf32>
    %146 = arith.mulf %105, %116 : vector<2x4xf32>
    %cst_63 = arith.constant 0.000000e+00 : f32
    %147 = vector.broadcast %cst_63 : f32 to vector<2x4xf32>
    %148 = arith.addf %147, %146 : vector<2x4xf32>
    %149 = arith.mulf %107, %119 : vector<2x4xf32>
    %150 = arith.addf %148, %149 : vector<2x4xf32>
    %151 = arith.mulf %109, %122 : vector<2x4xf32>
    %152 = arith.addf %150, %151 : vector<2x4xf32>
    %153 = arith.mulf %105, %117 : vector<2x4xf32>
    %cst_64 = arith.constant 0.000000e+00 : f32
    %154 = vector.broadcast %cst_64 : f32 to vector<2x4xf32>
    %155 = arith.addf %154, %153 : vector<2x4xf32>
    %156 = arith.mulf %107, %120 : vector<2x4xf32>
    %157 = arith.addf %155, %156 : vector<2x4xf32>
    %158 = arith.mulf %109, %123 : vector<2x4xf32>
    %159 = arith.addf %157, %158 : vector<2x4xf32>
    %160 = arith.mulf %105, %118 : vector<2x4xf32>
    %cst_65 = arith.constant 0.000000e+00 : f32
    %161 = vector.broadcast %cst_65 : f32 to vector<2x4xf32>
    %162 = arith.addf %161, %160 : vector<2x4xf32>
    %163 = arith.mulf %107, %121 : vector<2x4xf32>
    %164 = arith.addf %162, %163 : vector<2x4xf32>
    %165 = arith.mulf %109, %124 : vector<2x4xf32>
    %166 = arith.addf %164, %165 : vector<2x4xf32>
    %167 = arith.mulf %111, %116 : vector<2x4xf32>
    %cst_66 = arith.constant 0.000000e+00 : f32
    %168 = vector.broadcast %cst_66 : f32 to vector<2x4xf32>
    %169 = arith.addf %168, %167 : vector<2x4xf32>
    %170 = arith.mulf %113, %119 : vector<2x4xf32>
    %171 = arith.addf %169, %170 : vector<2x4xf32>
    %172 = arith.mulf %115, %122 : vector<2x4xf32>
    %173 = arith.addf %171, %172 : vector<2x4xf32>
    %174 = arith.mulf %111, %117 : vector<2x4xf32>
    %cst_67 = arith.constant 0.000000e+00 : f32
    %175 = vector.broadcast %cst_67 : f32 to vector<2x4xf32>
    %176 = arith.addf %175, %174 : vector<2x4xf32>
    %177 = arith.mulf %113, %120 : vector<2x4xf32>
    %178 = arith.addf %176, %177 : vector<2x4xf32>
    %179 = arith.mulf %115, %123 : vector<2x4xf32>
    %180 = arith.addf %178, %179 : vector<2x4xf32>
    %181 = arith.mulf %111, %118 : vector<2x4xf32>
    %cst_68 = arith.constant 0.000000e+00 : f32
    %182 = vector.broadcast %cst_68 : f32 to vector<2x4xf32>
    %183 = arith.addf %182, %181 : vector<2x4xf32>
    %184 = arith.mulf %113, %121 : vector<2x4xf32>
    %185 = arith.addf %183, %184 : vector<2x4xf32>
    %186 = arith.mulf %115, %124 : vector<2x4xf32>
    %187 = arith.addf %185, %186 : vector<2x4xf32>
    %cst_69 = arith.constant 1.250000e-01 : f32
    %188 = vector.broadcast %cst_69 : f32 to vector<2x4xf32>
    %189 = arith.mulf %131, %188 : vector<2x4xf32>
    %cst_70 = arith.constant 1.000000e+00 : f32
    %190 = vector.broadcast %cst_70 : f32 to vector<2x4xf32>
    %191 = arith.addf %190, %189 : vector<2x4xf32>
    %cst_71 = arith.constant 1.250000e-01 : f32
    %192 = vector.broadcast %cst_71 : f32 to vector<2x4xf32>
    %193 = arith.mulf %138, %192 : vector<2x4xf32>
    %cst_72 = arith.constant 0.000000e+00 : f32
    %194 = vector.broadcast %cst_72 : f32 to vector<2x4xf32>
    %195 = arith.addf %194, %193 : vector<2x4xf32>
    %cst_73 = arith.constant 1.250000e-01 : f32
    %196 = vector.broadcast %cst_73 : f32 to vector<2x4xf32>
    %197 = arith.mulf %145, %196 : vector<2x4xf32>
    %cst_74 = arith.constant 0.000000e+00 : f32
    %198 = vector.broadcast %cst_74 : f32 to vector<2x4xf32>
    %199 = arith.addf %198, %197 : vector<2x4xf32>
    %cst_75 = arith.constant 1.250000e-01 : f32
    %200 = vector.broadcast %cst_75 : f32 to vector<2x4xf32>
    %201 = arith.mulf %152, %200 : vector<2x4xf32>
    %cst_76 = arith.constant 0.000000e+00 : f32
    %202 = vector.broadcast %cst_76 : f32 to vector<2x4xf32>
    %203 = arith.addf %202, %201 : vector<2x4xf32>
    %cst_77 = arith.constant 1.250000e-01 : f32
    %204 = vector.broadcast %cst_77 : f32 to vector<2x4xf32>
    %205 = arith.mulf %159, %204 : vector<2x4xf32>
    %cst_78 = arith.constant 1.000000e+00 : f32
    %206 = vector.broadcast %cst_78 : f32 to vector<2x4xf32>
    %207 = arith.addf %206, %205 : vector<2x4xf32>
    %cst_79 = arith.constant 1.250000e-01 : f32
    %208 = vector.broadcast %cst_79 : f32 to vector<2x4xf32>
    %209 = arith.mulf %166, %208 : vector<2x4xf32>
    %cst_80 = arith.constant 0.000000e+00 : f32
    %210 = vector.broadcast %cst_80 : f32 to vector<2x4xf32>
    %211 = arith.addf %210, %209 : vector<2x4xf32>
    %cst_81 = arith.constant 1.250000e-01 : f32
    %212 = vector.broadcast %cst_81 : f32 to vector<2x4xf32>
    %213 = arith.mulf %173, %212 : vector<2x4xf32>
    %cst_82 = arith.constant 0.000000e+00 : f32
    %214 = vector.broadcast %cst_82 : f32 to vector<2x4xf32>
    %215 = arith.addf %214, %213 : vector<2x4xf32>
    %cst_83 = arith.constant 1.250000e-01 : f32
    %216 = vector.broadcast %cst_83 : f32 to vector<2x4xf32>
    %217 = arith.mulf %180, %216 : vector<2x4xf32>
    %cst_84 = arith.constant 0.000000e+00 : f32
    %218 = vector.broadcast %cst_84 : f32 to vector<2x4xf32>
    %219 = arith.addf %218, %217 : vector<2x4xf32>
    %cst_85 = arith.constant 1.250000e-01 : f32
    %220 = vector.broadcast %cst_85 : f32 to vector<2x4xf32>
    %221 = arith.mulf %187, %220 : vector<2x4xf32>
    %cst_86 = arith.constant 1.000000e+00 : f32
    %222 = vector.broadcast %cst_86 : f32 to vector<2x4xf32>
    %223 = arith.addf %222, %221 : vector<2x4xf32>
    %224 = arith.mulf %99, %191 : vector<2x4xf32>
    %cst_87 = arith.constant 0.000000e+00 : f32
    %225 = vector.broadcast %cst_87 : f32 to vector<2x4xf32>
    %226 = arith.addf %225, %224 : vector<2x4xf32>
    %227 = arith.mulf %101, %203 : vector<2x4xf32>
    %228 = arith.addf %226, %227 : vector<2x4xf32>
    %229 = arith.mulf %103, %215 : vector<2x4xf32>
    %230 = arith.addf %228, %229 : vector<2x4xf32>
    %231 = arith.mulf %99, %195 : vector<2x4xf32>
    %cst_88 = arith.constant 0.000000e+00 : f32
    %232 = vector.broadcast %cst_88 : f32 to vector<2x4xf32>
    %233 = arith.addf %232, %231 : vector<2x4xf32>
    %234 = arith.mulf %101, %207 : vector<2x4xf32>
    %235 = arith.addf %233, %234 : vector<2x4xf32>
    %236 = arith.mulf %103, %219 : vector<2x4xf32>
    %237 = arith.addf %235, %236 : vector<2x4xf32>
    %238 = arith.mulf %99, %199 : vector<2x4xf32>
    %cst_89 = arith.constant 0.000000e+00 : f32
    %239 = vector.broadcast %cst_89 : f32 to vector<2x4xf32>
    %240 = arith.addf %239, %238 : vector<2x4xf32>
    %241 = arith.mulf %101, %211 : vector<2x4xf32>
    %242 = arith.addf %240, %241 : vector<2x4xf32>
    %243 = arith.mulf %103, %223 : vector<2x4xf32>
    %244 = arith.addf %242, %243 : vector<2x4xf32>
    %245 = arith.mulf %105, %191 : vector<2x4xf32>
    %cst_90 = arith.constant 0.000000e+00 : f32
    %246 = vector.broadcast %cst_90 : f32 to vector<2x4xf32>
    %247 = arith.addf %246, %245 : vector<2x4xf32>
    %248 = arith.mulf %107, %203 : vector<2x4xf32>
    %249 = arith.addf %247, %248 : vector<2x4xf32>
    %250 = arith.mulf %109, %215 : vector<2x4xf32>
    %251 = arith.addf %249, %250 : vector<2x4xf32>
    %252 = arith.mulf %105, %195 : vector<2x4xf32>
    %cst_91 = arith.constant 0.000000e+00 : f32
    %253 = vector.broadcast %cst_91 : f32 to vector<2x4xf32>
    %254 = arith.addf %253, %252 : vector<2x4xf32>
    %255 = arith.mulf %107, %207 : vector<2x4xf32>
    %256 = arith.addf %254, %255 : vector<2x4xf32>
    %257 = arith.mulf %109, %219 : vector<2x4xf32>
    %258 = arith.addf %256, %257 : vector<2x4xf32>
    %259 = arith.mulf %105, %199 : vector<2x4xf32>
    %cst_92 = arith.constant 0.000000e+00 : f32
    %260 = vector.broadcast %cst_92 : f32 to vector<2x4xf32>
    %261 = arith.addf %260, %259 : vector<2x4xf32>
    %262 = arith.mulf %107, %211 : vector<2x4xf32>
    %263 = arith.addf %261, %262 : vector<2x4xf32>
    %264 = arith.mulf %109, %223 : vector<2x4xf32>
    %265 = arith.addf %263, %264 : vector<2x4xf32>
    %266 = arith.mulf %111, %191 : vector<2x4xf32>
    %cst_93 = arith.constant 0.000000e+00 : f32
    %267 = vector.broadcast %cst_93 : f32 to vector<2x4xf32>
    %268 = arith.addf %267, %266 : vector<2x4xf32>
    %269 = arith.mulf %113, %203 : vector<2x4xf32>
    %270 = arith.addf %268, %269 : vector<2x4xf32>
    %271 = arith.mulf %115, %215 : vector<2x4xf32>
    %272 = arith.addf %270, %271 : vector<2x4xf32>
    %273 = arith.mulf %111, %195 : vector<2x4xf32>
    %cst_94 = arith.constant 0.000000e+00 : f32
    %274 = vector.broadcast %cst_94 : f32 to vector<2x4xf32>
    %275 = arith.addf %274, %273 : vector<2x4xf32>
    %276 = arith.mulf %113, %207 : vector<2x4xf32>
    %277 = arith.addf %275, %276 : vector<2x4xf32>
    %278 = arith.mulf %115, %219 : vector<2x4xf32>
    %279 = arith.addf %277, %278 : vector<2x4xf32>
    %280 = arith.mulf %111, %199 : vector<2x4xf32>
    %cst_95 = arith.constant 0.000000e+00 : f32
    %281 = vector.broadcast %cst_95 : f32 to vector<2x4xf32>
    %282 = arith.addf %281, %280 : vector<2x4xf32>
    %283 = arith.mulf %113, %211 : vector<2x4xf32>
    %284 = arith.addf %282, %283 : vector<2x4xf32>
    %285 = arith.mulf %115, %223 : vector<2x4xf32>
    %286 = arith.addf %284, %285 : vector<2x4xf32>
    %cst_96 = arith.constant 0.142857149 : f32
    %287 = vector.broadcast %cst_96 : f32 to vector<2x4xf32>
    %288 = arith.mulf %230, %287 : vector<2x4xf32>
    %cst_97 = arith.constant 1.000000e+00 : f32
    %289 = vector.broadcast %cst_97 : f32 to vector<2x4xf32>
    %290 = arith.addf %289, %288 : vector<2x4xf32>
    %cst_98 = arith.constant 0.142857149 : f32
    %291 = vector.broadcast %cst_98 : f32 to vector<2x4xf32>
    %292 = arith.mulf %237, %291 : vector<2x4xf32>
    %cst_99 = arith.constant 0.000000e+00 : f32
    %293 = vector.broadcast %cst_99 : f32 to vector<2x4xf32>
    %294 = arith.addf %293, %292 : vector<2x4xf32>
    %cst_100 = arith.constant 0.142857149 : f32
    %295 = vector.broadcast %cst_100 : f32 to vector<2x4xf32>
    %296 = arith.mulf %244, %295 : vector<2x4xf32>
    %cst_101 = arith.constant 0.000000e+00 : f32
    %297 = vector.broadcast %cst_101 : f32 to vector<2x4xf32>
    %298 = arith.addf %297, %296 : vector<2x4xf32>
    %cst_102 = arith.constant 0.142857149 : f32
    %299 = vector.broadcast %cst_102 : f32 to vector<2x4xf32>
    %300 = arith.mulf %251, %299 : vector<2x4xf32>
    %cst_103 = arith.constant 0.000000e+00 : f32
    %301 = vector.broadcast %cst_103 : f32 to vector<2x4xf32>
    %302 = arith.addf %301, %300 : vector<2x4xf32>
    %cst_104 = arith.constant 0.142857149 : f32
    %303 = vector.broadcast %cst_104 : f32 to vector<2x4xf32>
    %304 = arith.mulf %258, %303 : vector<2x4xf32>
    %cst_105 = arith.constant 1.000000e+00 : f32
    %305 = vector.broadcast %cst_105 : f32 to vector<2x4xf32>
    %306 = arith.addf %305, %304 : vector<2x4xf32>
    %cst_106 = arith.constant 0.142857149 : f32
    %307 = vector.broadcast %cst_106 : f32 to vector<2x4xf32>
    %308 = arith.mulf %265, %307 : vector<2x4xf32>
    %cst_107 = arith.constant 0.000000e+00 : f32
    %309 = vector.broadcast %cst_107 : f32 to vector<2x4xf32>
    %310 = arith.addf %309, %308 : vector<2x4xf32>
    %cst_108 = arith.constant 0.142857149 : f32
    %311 = vector.broadcast %cst_108 : f32 to vector<2x4xf32>
    %312 = arith.mulf %272, %311 : vector<2x4xf32>
    %cst_109 = arith.constant 0.000000e+00 : f32
    %313 = vector.broadcast %cst_109 : f32 to vector<2x4xf32>
    %314 = arith.addf %313, %312 : vector<2x4xf32>
    %cst_110 = arith.constant 0.142857149 : f32
    %315 = vector.broadcast %cst_110 : f32 to vector<2x4xf32>
    %316 = arith.mulf %279, %315 : vector<2x4xf32>
    %cst_111 = arith.constant 0.000000e+00 : f32
    %317 = vector.broadcast %cst_111 : f32 to vector<2x4xf32>
    %318 = arith.addf %317, %316 : vector<2x4xf32>
    %cst_112 = arith.constant 0.142857149 : f32
    %319 = vector.broadcast %cst_112 : f32 to vector<2x4xf32>
    %320 = arith.mulf %286, %319 : vector<2x4xf32>
    %cst_113 = arith.constant 1.000000e+00 : f32
    %321 = vector.broadcast %cst_113 : f32 to vector<2x4xf32>
    %322 = arith.addf %321, %320 : vector<2x4xf32>
    %323 = arith.mulf %99, %290 : vector<2x4xf32>
    %cst_114 = arith.constant 0.000000e+00 : f32
    %324 = vector.broadcast %cst_114 : f32 to vector<2x4xf32>
    %325 = arith.addf %324, %323 : vector<2x4xf32>
    %326 = arith.mulf %101, %302 : vector<2x4xf32>
    %327 = arith.addf %325, %326 : vector<2x4xf32>
    %328 = arith.mulf %103, %314 : vector<2x4xf32>
    %329 = arith.addf %327, %328 : vector<2x4xf32>
    %330 = arith.mulf %99, %294 : vector<2x4xf32>
    %cst_115 = arith.constant 0.000000e+00 : f32
    %331 = vector.broadcast %cst_115 : f32 to vector<2x4xf32>
    %332 = arith.addf %331, %330 : vector<2x4xf32>
    %333 = arith.mulf %101, %306 : vector<2x4xf32>
    %334 = arith.addf %332, %333 : vector<2x4xf32>
    %335 = arith.mulf %103, %318 : vector<2x4xf32>
    %336 = arith.addf %334, %335 : vector<2x4xf32>
    %337 = arith.mulf %99, %298 : vector<2x4xf32>
    %cst_116 = arith.constant 0.000000e+00 : f32
    %338 = vector.broadcast %cst_116 : f32 to vector<2x4xf32>
    %339 = arith.addf %338, %337 : vector<2x4xf32>
    %340 = arith.mulf %101, %310 : vector<2x4xf32>
    %341 = arith.addf %339, %340 : vector<2x4xf32>
    %342 = arith.mulf %103, %322 : vector<2x4xf32>
    %343 = arith.addf %341, %342 : vector<2x4xf32>
    %344 = arith.mulf %105, %290 : vector<2x4xf32>
    %cst_117 = arith.constant 0.000000e+00 : f32
    %345 = vector.broadcast %cst_117 : f32 to vector<2x4xf32>
    %346 = arith.addf %345, %344 : vector<2x4xf32>
    %347 = arith.mulf %107, %302 : vector<2x4xf32>
    %348 = arith.addf %346, %347 : vector<2x4xf32>
    %349 = arith.mulf %109, %314 : vector<2x4xf32>
    %350 = arith.addf %348, %349 : vector<2x4xf32>
    %351 = arith.mulf %105, %294 : vector<2x4xf32>
    %cst_118 = arith.constant 0.000000e+00 : f32
    %352 = vector.broadcast %cst_118 : f32 to vector<2x4xf32>
    %353 = arith.addf %352, %351 : vector<2x4xf32>
    %354 = arith.mulf %107, %306 : vector<2x4xf32>
    %355 = arith.addf %353, %354 : vector<2x4xf32>
    %356 = arith.mulf %109, %318 : vector<2x4xf32>
    %357 = arith.addf %355, %356 : vector<2x4xf32>
    %358 = arith.mulf %105, %298 : vector<2x4xf32>
    %cst_119 = arith.constant 0.000000e+00 : f32
    %359 = vector.broadcast %cst_119 : f32 to vector<2x4xf32>
    %360 = arith.addf %359, %358 : vector<2x4xf32>
    %361 = arith.mulf %107, %310 : vector<2x4xf32>
    %362 = arith.addf %360, %361 : vector<2x4xf32>
    %363 = arith.mulf %109, %322 : vector<2x4xf32>
    %364 = arith.addf %362, %363 : vector<2x4xf32>
    %365 = arith.mulf %111, %290 : vector<2x4xf32>
    %cst_120 = arith.constant 0.000000e+00 : f32
    %366 = vector.broadcast %cst_120 : f32 to vector<2x4xf32>
    %367 = arith.addf %366, %365 : vector<2x4xf32>
    %368 = arith.mulf %113, %302 : vector<2x4xf32>
    %369 = arith.addf %367, %368 : vector<2x4xf32>
    %370 = arith.mulf %115, %314 : vector<2x4xf32>
    %371 = arith.addf %369, %370 : vector<2x4xf32>
    %372 = arith.mulf %111, %294 : vector<2x4xf32>
    %cst_121 = arith.constant 0.000000e+00 : f32
    %373 = vector.broadcast %cst_121 : f32 to vector<2x4xf32>
    %374 = arith.addf %373, %372 : vector<2x4xf32>
    %375 = arith.mulf %113, %306 : vector<2x4xf32>
    %376 = arith.addf %374, %375 : vector<2x4xf32>
    %377 = arith.mulf %115, %318 : vector<2x4xf32>
    %378 = arith.addf %376, %377 : vector<2x4xf32>
    %379 = arith.mulf %111, %298 : vector<2x4xf32>
    %cst_122 = arith.constant 0.000000e+00 : f32
    %380 = vector.broadcast %cst_122 : f32 to vector<2x4xf32>
    %381 = arith.addf %380, %379 : vector<2x4xf32>
    %382 = arith.mulf %113, %310 : vector<2x4xf32>
    %383 = arith.addf %381, %382 : vector<2x4xf32>
    %384 = arith.mulf %115, %322 : vector<2x4xf32>
    %385 = arith.addf %383, %384 : vector<2x4xf32>
    %cst_123 = arith.constant 0.166666672 : f32
    %386 = vector.broadcast %cst_123 : f32 to vector<2x4xf32>
    %387 = arith.mulf %329, %386 : vector<2x4xf32>
    %cst_124 = arith.constant 1.000000e+00 : f32
    %388 = vector.broadcast %cst_124 : f32 to vector<2x4xf32>
    %389 = arith.addf %388, %387 : vector<2x4xf32>
    %cst_125 = arith.constant 0.166666672 : f32
    %390 = vector.broadcast %cst_125 : f32 to vector<2x4xf32>
    %391 = arith.mulf %336, %390 : vector<2x4xf32>
    %cst_126 = arith.constant 0.000000e+00 : f32
    %392 = vector.broadcast %cst_126 : f32 to vector<2x4xf32>
    %393 = arith.addf %392, %391 : vector<2x4xf32>
    %cst_127 = arith.constant 0.166666672 : f32
    %394 = vector.broadcast %cst_127 : f32 to vector<2x4xf32>
    %395 = arith.mulf %343, %394 : vector<2x4xf32>
    %cst_128 = arith.constant 0.000000e+00 : f32
    %396 = vector.broadcast %cst_128 : f32 to vector<2x4xf32>
    %397 = arith.addf %396, %395 : vector<2x4xf32>
    %cst_129 = arith.constant 0.166666672 : f32
    %398 = vector.broadcast %cst_129 : f32 to vector<2x4xf32>
    %399 = arith.mulf %350, %398 : vector<2x4xf32>
    %cst_130 = arith.constant 0.000000e+00 : f32
    %400 = vector.broadcast %cst_130 : f32 to vector<2x4xf32>
    %401 = arith.addf %400, %399 : vector<2x4xf32>
    %cst_131 = arith.constant 0.166666672 : f32
    %402 = vector.broadcast %cst_131 : f32 to vector<2x4xf32>
    %403 = arith.mulf %357, %402 : vector<2x4xf32>
    %cst_132 = arith.constant 1.000000e+00 : f32
    %404 = vector.broadcast %cst_132 : f32 to vector<2x4xf32>
    %405 = arith.addf %404, %403 : vector<2x4xf32>
    %cst_133 = arith.constant 0.166666672 : f32
    %406 = vector.broadcast %cst_133 : f32 to vector<2x4xf32>
    %407 = arith.mulf %364, %406 : vector<2x4xf32>
    %cst_134 = arith.constant 0.000000e+00 : f32
    %408 = vector.broadcast %cst_134 : f32 to vector<2x4xf32>
    %409 = arith.addf %408, %407 : vector<2x4xf32>
    %cst_135 = arith.constant 0.166666672 : f32
    %410 = vector.broadcast %cst_135 : f32 to vector<2x4xf32>
    %411 = arith.mulf %371, %410 : vector<2x4xf32>
    %cst_136 = arith.constant 0.000000e+00 : f32
    %412 = vector.broadcast %cst_136 : f32 to vector<2x4xf32>
    %413 = arith.addf %412, %411 : vector<2x4xf32>
    %cst_137 = arith.constant 0.166666672 : f32
    %414 = vector.broadcast %cst_137 : f32 to vector<2x4xf32>
    %415 = arith.mulf %378, %414 : vector<2x4xf32>
    %cst_138 = arith.constant 0.000000e+00 : f32
    %416 = vector.broadcast %cst_138 : f32 to vector<2x4xf32>
    %417 = arith.addf %416, %415 : vector<2x4xf32>
    %cst_139 = arith.constant 0.166666672 : f32
    %418 = vector.broadcast %cst_139 : f32 to vector<2x4xf32>
    %419 = arith.mulf %385, %418 : vector<2x4xf32>
    %cst_140 = arith.constant 1.000000e+00 : f32
    %420 = vector.broadcast %cst_140 : f32 to vector<2x4xf32>
    %421 = arith.addf %420, %419 : vector<2x4xf32>
    %422 = arith.mulf %99, %389 : vector<2x4xf32>
    %cst_141 = arith.constant 0.000000e+00 : f32
    %423 = vector.broadcast %cst_141 : f32 to vector<2x4xf32>
    %424 = arith.addf %423, %422 : vector<2x4xf32>
    %425 = arith.mulf %101, %401 : vector<2x4xf32>
    %426 = arith.addf %424, %425 : vector<2x4xf32>
    %427 = arith.mulf %103, %413 : vector<2x4xf32>
    %428 = arith.addf %426, %427 : vector<2x4xf32>
    %429 = arith.mulf %99, %393 : vector<2x4xf32>
    %cst_142 = arith.constant 0.000000e+00 : f32
    %430 = vector.broadcast %cst_142 : f32 to vector<2x4xf32>
    %431 = arith.addf %430, %429 : vector<2x4xf32>
    %432 = arith.mulf %101, %405 : vector<2x4xf32>
    %433 = arith.addf %431, %432 : vector<2x4xf32>
    %434 = arith.mulf %103, %417 : vector<2x4xf32>
    %435 = arith.addf %433, %434 : vector<2x4xf32>
    %436 = arith.mulf %99, %397 : vector<2x4xf32>
    %cst_143 = arith.constant 0.000000e+00 : f32
    %437 = vector.broadcast %cst_143 : f32 to vector<2x4xf32>
    %438 = arith.addf %437, %436 : vector<2x4xf32>
    %439 = arith.mulf %101, %409 : vector<2x4xf32>
    %440 = arith.addf %438, %439 : vector<2x4xf32>
    %441 = arith.mulf %103, %421 : vector<2x4xf32>
    %442 = arith.addf %440, %441 : vector<2x4xf32>
    %443 = arith.mulf %105, %389 : vector<2x4xf32>
    %cst_144 = arith.constant 0.000000e+00 : f32
    %444 = vector.broadcast %cst_144 : f32 to vector<2x4xf32>
    %445 = arith.addf %444, %443 : vector<2x4xf32>
    %446 = arith.mulf %107, %401 : vector<2x4xf32>
    %447 = arith.addf %445, %446 : vector<2x4xf32>
    %448 = arith.mulf %109, %413 : vector<2x4xf32>
    %449 = arith.addf %447, %448 : vector<2x4xf32>
    %450 = arith.mulf %105, %393 : vector<2x4xf32>
    %cst_145 = arith.constant 0.000000e+00 : f32
    %451 = vector.broadcast %cst_145 : f32 to vector<2x4xf32>
    %452 = arith.addf %451, %450 : vector<2x4xf32>
    %453 = arith.mulf %107, %405 : vector<2x4xf32>
    %454 = arith.addf %452, %453 : vector<2x4xf32>
    %455 = arith.mulf %109, %417 : vector<2x4xf32>
    %456 = arith.addf %454, %455 : vector<2x4xf32>
    %457 = arith.mulf %105, %397 : vector<2x4xf32>
    %cst_146 = arith.constant 0.000000e+00 : f32
    %458 = vector.broadcast %cst_146 : f32 to vector<2x4xf32>
    %459 = arith.addf %458, %457 : vector<2x4xf32>
    %460 = arith.mulf %107, %409 : vector<2x4xf32>
    %461 = arith.addf %459, %460 : vector<2x4xf32>
    %462 = arith.mulf %109, %421 : vector<2x4xf32>
    %463 = arith.addf %461, %462 : vector<2x4xf32>
    %464 = arith.mulf %111, %389 : vector<2x4xf32>
    %cst_147 = arith.constant 0.000000e+00 : f32
    %465 = vector.broadcast %cst_147 : f32 to vector<2x4xf32>
    %466 = arith.addf %465, %464 : vector<2x4xf32>
    %467 = arith.mulf %113, %401 : vector<2x4xf32>
    %468 = arith.addf %466, %467 : vector<2x4xf32>
    %469 = arith.mulf %115, %413 : vector<2x4xf32>
    %470 = arith.addf %468, %469 : vector<2x4xf32>
    %471 = arith.mulf %111, %393 : vector<2x4xf32>
    %cst_148 = arith.constant 0.000000e+00 : f32
    %472 = vector.broadcast %cst_148 : f32 to vector<2x4xf32>
    %473 = arith.addf %472, %471 : vector<2x4xf32>
    %474 = arith.mulf %113, %405 : vector<2x4xf32>
    %475 = arith.addf %473, %474 : vector<2x4xf32>
    %476 = arith.mulf %115, %417 : vector<2x4xf32>
    %477 = arith.addf %475, %476 : vector<2x4xf32>
    %478 = arith.mulf %111, %397 : vector<2x4xf32>
    %cst_149 = arith.constant 0.000000e+00 : f32
    %479 = vector.broadcast %cst_149 : f32 to vector<2x4xf32>
    %480 = arith.addf %479, %478 : vector<2x4xf32>
    %481 = arith.mulf %113, %409 : vector<2x4xf32>
    %482 = arith.addf %480, %481 : vector<2x4xf32>
    %483 = arith.mulf %115, %421 : vector<2x4xf32>
    %484 = arith.addf %482, %483 : vector<2x4xf32>
    %cst_150 = arith.constant 2.000000e-01 : f32
    %485 = vector.broadcast %cst_150 : f32 to vector<2x4xf32>
    %486 = arith.mulf %428, %485 : vector<2x4xf32>
    %cst_151 = arith.constant 1.000000e+00 : f32
    %487 = vector.broadcast %cst_151 : f32 to vector<2x4xf32>
    %488 = arith.addf %487, %486 : vector<2x4xf32>
    %cst_152 = arith.constant 2.000000e-01 : f32
    %489 = vector.broadcast %cst_152 : f32 to vector<2x4xf32>
    %490 = arith.mulf %435, %489 : vector<2x4xf32>
    %cst_153 = arith.constant 0.000000e+00 : f32
    %491 = vector.broadcast %cst_153 : f32 to vector<2x4xf32>
    %492 = arith.addf %491, %490 : vector<2x4xf32>
    %cst_154 = arith.constant 2.000000e-01 : f32
    %493 = vector.broadcast %cst_154 : f32 to vector<2x4xf32>
    %494 = arith.mulf %442, %493 : vector<2x4xf32>
    %cst_155 = arith.constant 0.000000e+00 : f32
    %495 = vector.broadcast %cst_155 : f32 to vector<2x4xf32>
    %496 = arith.addf %495, %494 : vector<2x4xf32>
    %cst_156 = arith.constant 2.000000e-01 : f32
    %497 = vector.broadcast %cst_156 : f32 to vector<2x4xf32>
    %498 = arith.mulf %449, %497 : vector<2x4xf32>
    %cst_157 = arith.constant 0.000000e+00 : f32
    %499 = vector.broadcast %cst_157 : f32 to vector<2x4xf32>
    %500 = arith.addf %499, %498 : vector<2x4xf32>
    %cst_158 = arith.constant 2.000000e-01 : f32
    %501 = vector.broadcast %cst_158 : f32 to vector<2x4xf32>
    %502 = arith.mulf %456, %501 : vector<2x4xf32>
    %cst_159 = arith.constant 1.000000e+00 : f32
    %503 = vector.broadcast %cst_159 : f32 to vector<2x4xf32>
    %504 = arith.addf %503, %502 : vector<2x4xf32>
    %cst_160 = arith.constant 2.000000e-01 : f32
    %505 = vector.broadcast %cst_160 : f32 to vector<2x4xf32>
    %506 = arith.mulf %463, %505 : vector<2x4xf32>
    %cst_161 = arith.constant 0.000000e+00 : f32
    %507 = vector.broadcast %cst_161 : f32 to vector<2x4xf32>
    %508 = arith.addf %507, %506 : vector<2x4xf32>
    %cst_162 = arith.constant 2.000000e-01 : f32
    %509 = vector.broadcast %cst_162 : f32 to vector<2x4xf32>
    %510 = arith.mulf %470, %509 : vector<2x4xf32>
    %cst_163 = arith.constant 0.000000e+00 : f32
    %511 = vector.broadcast %cst_163 : f32 to vector<2x4xf32>
    %512 = arith.addf %511, %510 : vector<2x4xf32>
    %cst_164 = arith.constant 2.000000e-01 : f32
    %513 = vector.broadcast %cst_164 : f32 to vector<2x4xf32>
    %514 = arith.mulf %477, %513 : vector<2x4xf32>
    %cst_165 = arith.constant 0.000000e+00 : f32
    %515 = vector.broadcast %cst_165 : f32 to vector<2x4xf32>
    %516 = arith.addf %515, %514 : vector<2x4xf32>
    %cst_166 = arith.constant 2.000000e-01 : f32
    %517 = vector.broadcast %cst_166 : f32 to vector<2x4xf32>
    %518 = arith.mulf %484, %517 : vector<2x4xf32>
    %cst_167 = arith.constant 1.000000e+00 : f32
    %519 = vector.broadcast %cst_167 : f32 to vector<2x4xf32>
    %520 = arith.addf %519, %518 : vector<2x4xf32>
    %521 = arith.mulf %99, %488 : vector<2x4xf32>
    %cst_168 = arith.constant 0.000000e+00 : f32
    %522 = vector.broadcast %cst_168 : f32 to vector<2x4xf32>
    %523 = arith.addf %522, %521 : vector<2x4xf32>
    %524 = arith.mulf %101, %500 : vector<2x4xf32>
    %525 = arith.addf %523, %524 : vector<2x4xf32>
    %526 = arith.mulf %103, %512 : vector<2x4xf32>
    %527 = arith.addf %525, %526 : vector<2x4xf32>
    %528 = arith.mulf %99, %492 : vector<2x4xf32>
    %cst_169 = arith.constant 0.000000e+00 : f32
    %529 = vector.broadcast %cst_169 : f32 to vector<2x4xf32>
    %530 = arith.addf %529, %528 : vector<2x4xf32>
    %531 = arith.mulf %101, %504 : vector<2x4xf32>
    %532 = arith.addf %530, %531 : vector<2x4xf32>
    %533 = arith.mulf %103, %516 : vector<2x4xf32>
    %534 = arith.addf %532, %533 : vector<2x4xf32>
    %535 = arith.mulf %99, %496 : vector<2x4xf32>
    %cst_170 = arith.constant 0.000000e+00 : f32
    %536 = vector.broadcast %cst_170 : f32 to vector<2x4xf32>
    %537 = arith.addf %536, %535 : vector<2x4xf32>
    %538 = arith.mulf %101, %508 : vector<2x4xf32>
    %539 = arith.addf %537, %538 : vector<2x4xf32>
    %540 = arith.mulf %103, %520 : vector<2x4xf32>
    %541 = arith.addf %539, %540 : vector<2x4xf32>
    %542 = arith.mulf %105, %488 : vector<2x4xf32>
    %cst_171 = arith.constant 0.000000e+00 : f32
    %543 = vector.broadcast %cst_171 : f32 to vector<2x4xf32>
    %544 = arith.addf %543, %542 : vector<2x4xf32>
    %545 = arith.mulf %107, %500 : vector<2x4xf32>
    %546 = arith.addf %544, %545 : vector<2x4xf32>
    %547 = arith.mulf %109, %512 : vector<2x4xf32>
    %548 = arith.addf %546, %547 : vector<2x4xf32>
    %549 = arith.mulf %105, %492 : vector<2x4xf32>
    %cst_172 = arith.constant 0.000000e+00 : f32
    %550 = vector.broadcast %cst_172 : f32 to vector<2x4xf32>
    %551 = arith.addf %550, %549 : vector<2x4xf32>
    %552 = arith.mulf %107, %504 : vector<2x4xf32>
    %553 = arith.addf %551, %552 : vector<2x4xf32>
    %554 = arith.mulf %109, %516 : vector<2x4xf32>
    %555 = arith.addf %553, %554 : vector<2x4xf32>
    %556 = arith.mulf %105, %496 : vector<2x4xf32>
    %cst_173 = arith.constant 0.000000e+00 : f32
    %557 = vector.broadcast %cst_173 : f32 to vector<2x4xf32>
    %558 = arith.addf %557, %556 : vector<2x4xf32>
    %559 = arith.mulf %107, %508 : vector<2x4xf32>
    %560 = arith.addf %558, %559 : vector<2x4xf32>
    %561 = arith.mulf %109, %520 : vector<2x4xf32>
    %562 = arith.addf %560, %561 : vector<2x4xf32>
    %563 = arith.mulf %111, %488 : vector<2x4xf32>
    %cst_174 = arith.constant 0.000000e+00 : f32
    %564 = vector.broadcast %cst_174 : f32 to vector<2x4xf32>
    %565 = arith.addf %564, %563 : vector<2x4xf32>
    %566 = arith.mulf %113, %500 : vector<2x4xf32>
    %567 = arith.addf %565, %566 : vector<2x4xf32>
    %568 = arith.mulf %115, %512 : vector<2x4xf32>
    %569 = arith.addf %567, %568 : vector<2x4xf32>
    %570 = arith.mulf %111, %492 : vector<2x4xf32>
    %cst_175 = arith.constant 0.000000e+00 : f32
    %571 = vector.broadcast %cst_175 : f32 to vector<2x4xf32>
    %572 = arith.addf %571, %570 : vector<2x4xf32>
    %573 = arith.mulf %113, %504 : vector<2x4xf32>
    %574 = arith.addf %572, %573 : vector<2x4xf32>
    %575 = arith.mulf %115, %516 : vector<2x4xf32>
    %576 = arith.addf %574, %575 : vector<2x4xf32>
    %577 = arith.mulf %111, %496 : vector<2x4xf32>
    %cst_176 = arith.constant 0.000000e+00 : f32
    %578 = vector.broadcast %cst_176 : f32 to vector<2x4xf32>
    %579 = arith.addf %578, %577 : vector<2x4xf32>
    %580 = arith.mulf %113, %508 : vector<2x4xf32>
    %581 = arith.addf %579, %580 : vector<2x4xf32>
    %582 = arith.mulf %115, %520 : vector<2x4xf32>
    %583 = arith.addf %581, %582 : vector<2x4xf32>
    %cst_177 = arith.constant 2.500000e-01 : f32
    %584 = vector.broadcast %cst_177 : f32 to vector<2x4xf32>
    %585 = arith.mulf %527, %584 : vector<2x4xf32>
    %cst_178 = arith.constant 1.000000e+00 : f32
    %586 = vector.broadcast %cst_178 : f32 to vector<2x4xf32>
    %587 = arith.addf %586, %585 : vector<2x4xf32>
    %cst_179 = arith.constant 2.500000e-01 : f32
    %588 = vector.broadcast %cst_179 : f32 to vector<2x4xf32>
    %589 = arith.mulf %534, %588 : vector<2x4xf32>
    %cst_180 = arith.constant 0.000000e+00 : f32
    %590 = vector.broadcast %cst_180 : f32 to vector<2x4xf32>
    %591 = arith.addf %590, %589 : vector<2x4xf32>
    %cst_181 = arith.constant 2.500000e-01 : f32
    %592 = vector.broadcast %cst_181 : f32 to vector<2x4xf32>
    %593 = arith.mulf %541, %592 : vector<2x4xf32>
    %cst_182 = arith.constant 0.000000e+00 : f32
    %594 = vector.broadcast %cst_182 : f32 to vector<2x4xf32>
    %595 = arith.addf %594, %593 : vector<2x4xf32>
    %cst_183 = arith.constant 2.500000e-01 : f32
    %596 = vector.broadcast %cst_183 : f32 to vector<2x4xf32>
    %597 = arith.mulf %548, %596 : vector<2x4xf32>
    %cst_184 = arith.constant 0.000000e+00 : f32
    %598 = vector.broadcast %cst_184 : f32 to vector<2x4xf32>
    %599 = arith.addf %598, %597 : vector<2x4xf32>
    %cst_185 = arith.constant 2.500000e-01 : f32
    %600 = vector.broadcast %cst_185 : f32 to vector<2x4xf32>
    %601 = arith.mulf %555, %600 : vector<2x4xf32>
    %cst_186 = arith.constant 1.000000e+00 : f32
    %602 = vector.broadcast %cst_186 : f32 to vector<2x4xf32>
    %603 = arith.addf %602, %601 : vector<2x4xf32>
    %cst_187 = arith.constant 2.500000e-01 : f32
    %604 = vector.broadcast %cst_187 : f32 to vector<2x4xf32>
    %605 = arith.mulf %562, %604 : vector<2x4xf32>
    %cst_188 = arith.constant 0.000000e+00 : f32
    %606 = vector.broadcast %cst_188 : f32 to vector<2x4xf32>
    %607 = arith.addf %606, %605 : vector<2x4xf32>
    %cst_189 = arith.constant 2.500000e-01 : f32
    %608 = vector.broadcast %cst_189 : f32 to vector<2x4xf32>
    %609 = arith.mulf %569, %608 : vector<2x4xf32>
    %cst_190 = arith.constant 0.000000e+00 : f32
    %610 = vector.broadcast %cst_190 : f32 to vector<2x4xf32>
    %611 = arith.addf %610, %609 : vector<2x4xf32>
    %cst_191 = arith.constant 2.500000e-01 : f32
    %612 = vector.broadcast %cst_191 : f32 to vector<2x4xf32>
    %613 = arith.mulf %576, %612 : vector<2x4xf32>
    %cst_192 = arith.constant 0.000000e+00 : f32
    %614 = vector.broadcast %cst_192 : f32 to vector<2x4xf32>
    %615 = arith.addf %614, %613 : vector<2x4xf32>
    %cst_193 = arith.constant 2.500000e-01 : f32
    %616 = vector.broadcast %cst_193 : f32 to vector<2x4xf32>
    %617 = arith.mulf %583, %616 : vector<2x4xf32>
    %cst_194 = arith.constant 1.000000e+00 : f32
    %618 = vector.broadcast %cst_194 : f32 to vector<2x4xf32>
    %619 = arith.addf %618, %617 : vector<2x4xf32>
    %620 = arith.mulf %99, %587 : vector<2x4xf32>
    %cst_195 = arith.constant 0.000000e+00 : f32
    %621 = vector.broadcast %cst_195 : f32 to vector<2x4xf32>
    %622 = arith.addf %621, %620 : vector<2x4xf32>
    %623 = arith.mulf %101, %599 : vector<2x4xf32>
    %624 = arith.addf %622, %623 : vector<2x4xf32>
    %625 = arith.mulf %103, %611 : vector<2x4xf32>
    %626 = arith.addf %624, %625 : vector<2x4xf32>
    %627 = arith.mulf %99, %591 : vector<2x4xf32>
    %cst_196 = arith.constant 0.000000e+00 : f32
    %628 = vector.broadcast %cst_196 : f32 to vector<2x4xf32>
    %629 = arith.addf %628, %627 : vector<2x4xf32>
    %630 = arith.mulf %101, %603 : vector<2x4xf32>
    %631 = arith.addf %629, %630 : vector<2x4xf32>
    %632 = arith.mulf %103, %615 : vector<2x4xf32>
    %633 = arith.addf %631, %632 : vector<2x4xf32>
    %634 = arith.mulf %99, %595 : vector<2x4xf32>
    %cst_197 = arith.constant 0.000000e+00 : f32
    %635 = vector.broadcast %cst_197 : f32 to vector<2x4xf32>
    %636 = arith.addf %635, %634 : vector<2x4xf32>
    %637 = arith.mulf %101, %607 : vector<2x4xf32>
    %638 = arith.addf %636, %637 : vector<2x4xf32>
    %639 = arith.mulf %103, %619 : vector<2x4xf32>
    %640 = arith.addf %638, %639 : vector<2x4xf32>
    %641 = arith.mulf %105, %587 : vector<2x4xf32>
    %cst_198 = arith.constant 0.000000e+00 : f32
    %642 = vector.broadcast %cst_198 : f32 to vector<2x4xf32>
    %643 = arith.addf %642, %641 : vector<2x4xf32>
    %644 = arith.mulf %107, %599 : vector<2x4xf32>
    %645 = arith.addf %643, %644 : vector<2x4xf32>
    %646 = arith.mulf %109, %611 : vector<2x4xf32>
    %647 = arith.addf %645, %646 : vector<2x4xf32>
    %648 = arith.mulf %105, %591 : vector<2x4xf32>
    %cst_199 = arith.constant 0.000000e+00 : f32
    %649 = vector.broadcast %cst_199 : f32 to vector<2x4xf32>
    %650 = arith.addf %649, %648 : vector<2x4xf32>
    %651 = arith.mulf %107, %603 : vector<2x4xf32>
    %652 = arith.addf %650, %651 : vector<2x4xf32>
    %653 = arith.mulf %109, %615 : vector<2x4xf32>
    %654 = arith.addf %652, %653 : vector<2x4xf32>
    %655 = arith.mulf %105, %595 : vector<2x4xf32>
    %cst_200 = arith.constant 0.000000e+00 : f32
    %656 = vector.broadcast %cst_200 : f32 to vector<2x4xf32>
    %657 = arith.addf %656, %655 : vector<2x4xf32>
    %658 = arith.mulf %107, %607 : vector<2x4xf32>
    %659 = arith.addf %657, %658 : vector<2x4xf32>
    %660 = arith.mulf %109, %619 : vector<2x4xf32>
    %661 = arith.addf %659, %660 : vector<2x4xf32>
    %662 = arith.mulf %111, %587 : vector<2x4xf32>
    %cst_201 = arith.constant 0.000000e+00 : f32
    %663 = vector.broadcast %cst_201 : f32 to vector<2x4xf32>
    %664 = arith.addf %663, %662 : vector<2x4xf32>
    %665 = arith.mulf %113, %599 : vector<2x4xf32>
    %666 = arith.addf %664, %665 : vector<2x4xf32>
    %667 = arith.mulf %115, %611 : vector<2x4xf32>
    %668 = arith.addf %666, %667 : vector<2x4xf32>
    %669 = arith.mulf %111, %591 : vector<2x4xf32>
    %cst_202 = arith.constant 0.000000e+00 : f32
    %670 = vector.broadcast %cst_202 : f32 to vector<2x4xf32>
    %671 = arith.addf %670, %669 : vector<2x4xf32>
    %672 = arith.mulf %113, %603 : vector<2x4xf32>
    %673 = arith.addf %671, %672 : vector<2x4xf32>
    %674 = arith.mulf %115, %615 : vector<2x4xf32>
    %675 = arith.addf %673, %674 : vector<2x4xf32>
    %676 = arith.mulf %111, %595 : vector<2x4xf32>
    %cst_203 = arith.constant 0.000000e+00 : f32
    %677 = vector.broadcast %cst_203 : f32 to vector<2x4xf32>
    %678 = arith.addf %677, %676 : vector<2x4xf32>
    %679 = arith.mulf %113, %607 : vector<2x4xf32>
    %680 = arith.addf %678, %679 : vector<2x4xf32>
    %681 = arith.mulf %115, %619 : vector<2x4xf32>
    %682 = arith.addf %680, %681 : vector<2x4xf32>
    %cst_204 = arith.constant 0.333333343 : f32
    %683 = vector.broadcast %cst_204 : f32 to vector<2x4xf32>
    %684 = arith.mulf %626, %683 : vector<2x4xf32>
    %cst_205 = arith.constant 1.000000e+00 : f32
    %685 = vector.broadcast %cst_205 : f32 to vector<2x4xf32>
    %686 = arith.addf %685, %684 : vector<2x4xf32>
    %cst_206 = arith.constant 0.333333343 : f32
    %687 = vector.broadcast %cst_206 : f32 to vector<2x4xf32>
    %688 = arith.mulf %633, %687 : vector<2x4xf32>
    %cst_207 = arith.constant 0.000000e+00 : f32
    %689 = vector.broadcast %cst_207 : f32 to vector<2x4xf32>
    %690 = arith.addf %689, %688 : vector<2x4xf32>
    %cst_208 = arith.constant 0.333333343 : f32
    %691 = vector.broadcast %cst_208 : f32 to vector<2x4xf32>
    %692 = arith.mulf %640, %691 : vector<2x4xf32>
    %cst_209 = arith.constant 0.000000e+00 : f32
    %693 = vector.broadcast %cst_209 : f32 to vector<2x4xf32>
    %694 = arith.addf %693, %692 : vector<2x4xf32>
    %cst_210 = arith.constant 0.333333343 : f32
    %695 = vector.broadcast %cst_210 : f32 to vector<2x4xf32>
    %696 = arith.mulf %647, %695 : vector<2x4xf32>
    %cst_211 = arith.constant 0.000000e+00 : f32
    %697 = vector.broadcast %cst_211 : f32 to vector<2x4xf32>
    %698 = arith.addf %697, %696 : vector<2x4xf32>
    %cst_212 = arith.constant 0.333333343 : f32
    %699 = vector.broadcast %cst_212 : f32 to vector<2x4xf32>
    %700 = arith.mulf %654, %699 : vector<2x4xf32>
    %cst_213 = arith.constant 1.000000e+00 : f32
    %701 = vector.broadcast %cst_213 : f32 to vector<2x4xf32>
    %702 = arith.addf %701, %700 : vector<2x4xf32>
    %cst_214 = arith.constant 0.333333343 : f32
    %703 = vector.broadcast %cst_214 : f32 to vector<2x4xf32>
    %704 = arith.mulf %661, %703 : vector<2x4xf32>
    %cst_215 = arith.constant 0.000000e+00 : f32
    %705 = vector.broadcast %cst_215 : f32 to vector<2x4xf32>
    %706 = arith.addf %705, %704 : vector<2x4xf32>
    %cst_216 = arith.constant 0.333333343 : f32
    %707 = vector.broadcast %cst_216 : f32 to vector<2x4xf32>
    %708 = arith.mulf %668, %707 : vector<2x4xf32>
    %cst_217 = arith.constant 0.000000e+00 : f32
    %709 = vector.broadcast %cst_217 : f32 to vector<2x4xf32>
    %710 = arith.addf %709, %708 : vector<2x4xf32>
    %cst_218 = arith.constant 0.333333343 : f32
    %711 = vector.broadcast %cst_218 : f32 to vector<2x4xf32>
    %712 = arith.mulf %675, %711 : vector<2x4xf32>
    %cst_219 = arith.constant 0.000000e+00 : f32
    %713 = vector.broadcast %cst_219 : f32 to vector<2x4xf32>
    %714 = arith.addf %713, %712 : vector<2x4xf32>
    %cst_220 = arith.constant 0.333333343 : f32
    %715 = vector.broadcast %cst_220 : f32 to vector<2x4xf32>
    %716 = arith.mulf %682, %715 : vector<2x4xf32>
    %cst_221 = arith.constant 1.000000e+00 : f32
    %717 = vector.broadcast %cst_221 : f32 to vector<2x4xf32>
    %718 = arith.addf %717, %716 : vector<2x4xf32>
    %719 = arith.mulf %99, %686 : vector<2x4xf32>
    %cst_222 = arith.constant 0.000000e+00 : f32
    %720 = vector.broadcast %cst_222 : f32 to vector<2x4xf32>
    %721 = arith.addf %720, %719 : vector<2x4xf32>
    %722 = arith.mulf %101, %698 : vector<2x4xf32>
    %723 = arith.addf %721, %722 : vector<2x4xf32>
    %724 = arith.mulf %103, %710 : vector<2x4xf32>
    %725 = arith.addf %723, %724 : vector<2x4xf32>
    %726 = arith.mulf %99, %690 : vector<2x4xf32>
    %cst_223 = arith.constant 0.000000e+00 : f32
    %727 = vector.broadcast %cst_223 : f32 to vector<2x4xf32>
    %728 = arith.addf %727, %726 : vector<2x4xf32>
    %729 = arith.mulf %101, %702 : vector<2x4xf32>
    %730 = arith.addf %728, %729 : vector<2x4xf32>
    %731 = arith.mulf %103, %714 : vector<2x4xf32>
    %732 = arith.addf %730, %731 : vector<2x4xf32>
    %733 = arith.mulf %99, %694 : vector<2x4xf32>
    %cst_224 = arith.constant 0.000000e+00 : f32
    %734 = vector.broadcast %cst_224 : f32 to vector<2x4xf32>
    %735 = arith.addf %734, %733 : vector<2x4xf32>
    %736 = arith.mulf %101, %706 : vector<2x4xf32>
    %737 = arith.addf %735, %736 : vector<2x4xf32>
    %738 = arith.mulf %103, %718 : vector<2x4xf32>
    %739 = arith.addf %737, %738 : vector<2x4xf32>
    %740 = arith.mulf %105, %686 : vector<2x4xf32>
    %cst_225 = arith.constant 0.000000e+00 : f32
    %741 = vector.broadcast %cst_225 : f32 to vector<2x4xf32>
    %742 = arith.addf %741, %740 : vector<2x4xf32>
    %743 = arith.mulf %107, %698 : vector<2x4xf32>
    %744 = arith.addf %742, %743 : vector<2x4xf32>
    %745 = arith.mulf %109, %710 : vector<2x4xf32>
    %746 = arith.addf %744, %745 : vector<2x4xf32>
    %747 = arith.mulf %105, %690 : vector<2x4xf32>
    %cst_226 = arith.constant 0.000000e+00 : f32
    %748 = vector.broadcast %cst_226 : f32 to vector<2x4xf32>
    %749 = arith.addf %748, %747 : vector<2x4xf32>
    %750 = arith.mulf %107, %702 : vector<2x4xf32>
    %751 = arith.addf %749, %750 : vector<2x4xf32>
    %752 = arith.mulf %109, %714 : vector<2x4xf32>
    %753 = arith.addf %751, %752 : vector<2x4xf32>
    %754 = arith.mulf %105, %694 : vector<2x4xf32>
    %cst_227 = arith.constant 0.000000e+00 : f32
    %755 = vector.broadcast %cst_227 : f32 to vector<2x4xf32>
    %756 = arith.addf %755, %754 : vector<2x4xf32>
    %757 = arith.mulf %107, %706 : vector<2x4xf32>
    %758 = arith.addf %756, %757 : vector<2x4xf32>
    %759 = arith.mulf %109, %718 : vector<2x4xf32>
    %760 = arith.addf %758, %759 : vector<2x4xf32>
    %761 = arith.mulf %111, %686 : vector<2x4xf32>
    %cst_228 = arith.constant 0.000000e+00 : f32
    %762 = vector.broadcast %cst_228 : f32 to vector<2x4xf32>
    %763 = arith.addf %762, %761 : vector<2x4xf32>
    %764 = arith.mulf %113, %698 : vector<2x4xf32>
    %765 = arith.addf %763, %764 : vector<2x4xf32>
    %766 = arith.mulf %115, %710 : vector<2x4xf32>
    %767 = arith.addf %765, %766 : vector<2x4xf32>
    %768 = arith.mulf %111, %690 : vector<2x4xf32>
    %cst_229 = arith.constant 0.000000e+00 : f32
    %769 = vector.broadcast %cst_229 : f32 to vector<2x4xf32>
    %770 = arith.addf %769, %768 : vector<2x4xf32>
    %771 = arith.mulf %113, %702 : vector<2x4xf32>
    %772 = arith.addf %770, %771 : vector<2x4xf32>
    %773 = arith.mulf %115, %714 : vector<2x4xf32>
    %774 = arith.addf %772, %773 : vector<2x4xf32>
    %775 = arith.mulf %111, %694 : vector<2x4xf32>
    %cst_230 = arith.constant 0.000000e+00 : f32
    %776 = vector.broadcast %cst_230 : f32 to vector<2x4xf32>
    %777 = arith.addf %776, %775 : vector<2x4xf32>
    %778 = arith.mulf %113, %706 : vector<2x4xf32>
    %779 = arith.addf %777, %778 : vector<2x4xf32>
    %780 = arith.mulf %115, %718 : vector<2x4xf32>
    %781 = arith.addf %779, %780 : vector<2x4xf32>
    %cst_231 = arith.constant 5.000000e-01 : f32
    %782 = vector.broadcast %cst_231 : f32 to vector<2x4xf32>
    %783 = arith.mulf %725, %782 : vector<2x4xf32>
    %cst_232 = arith.constant 1.000000e+00 : f32
    %784 = vector.broadcast %cst_232 : f32 to vector<2x4xf32>
    %785 = arith.addf %784, %783 : vector<2x4xf32>
    %cst_233 = arith.constant 5.000000e-01 : f32
    %786 = vector.broadcast %cst_233 : f32 to vector<2x4xf32>
    %787 = arith.mulf %732, %786 : vector<2x4xf32>
    %cst_234 = arith.constant 0.000000e+00 : f32
    %788 = vector.broadcast %cst_234 : f32 to vector<2x4xf32>
    %789 = arith.addf %788, %787 : vector<2x4xf32>
    %cst_235 = arith.constant 5.000000e-01 : f32
    %790 = vector.broadcast %cst_235 : f32 to vector<2x4xf32>
    %791 = arith.mulf %739, %790 : vector<2x4xf32>
    %cst_236 = arith.constant 0.000000e+00 : f32
    %792 = vector.broadcast %cst_236 : f32 to vector<2x4xf32>
    %793 = arith.addf %792, %791 : vector<2x4xf32>
    %cst_237 = arith.constant 5.000000e-01 : f32
    %794 = vector.broadcast %cst_237 : f32 to vector<2x4xf32>
    %795 = arith.mulf %746, %794 : vector<2x4xf32>
    %cst_238 = arith.constant 0.000000e+00 : f32
    %796 = vector.broadcast %cst_238 : f32 to vector<2x4xf32>
    %797 = arith.addf %796, %795 : vector<2x4xf32>
    %cst_239 = arith.constant 5.000000e-01 : f32
    %798 = vector.broadcast %cst_239 : f32 to vector<2x4xf32>
    %799 = arith.mulf %753, %798 : vector<2x4xf32>
    %cst_240 = arith.constant 1.000000e+00 : f32
    %800 = vector.broadcast %cst_240 : f32 to vector<2x4xf32>
    %801 = arith.addf %800, %799 : vector<2x4xf32>
    %cst_241 = arith.constant 5.000000e-01 : f32
    %802 = vector.broadcast %cst_241 : f32 to vector<2x4xf32>
    %803 = arith.mulf %760, %802 : vector<2x4xf32>
    %cst_242 = arith.constant 0.000000e+00 : f32
    %804 = vector.broadcast %cst_242 : f32 to vector<2x4xf32>
    %805 = arith.addf %804, %803 : vector<2x4xf32>
    %cst_243 = arith.constant 5.000000e-01 : f32
    %806 = vector.broadcast %cst_243 : f32 to vector<2x4xf32>
    %807 = arith.mulf %767, %806 : vector<2x4xf32>
    %cst_244 = arith.constant 0.000000e+00 : f32
    %808 = vector.broadcast %cst_244 : f32 to vector<2x4xf32>
    %809 = arith.addf %808, %807 : vector<2x4xf32>
    %cst_245 = arith.constant 5.000000e-01 : f32
    %810 = vector.broadcast %cst_245 : f32 to vector<2x4xf32>
    %811 = arith.mulf %774, %810 : vector<2x4xf32>
    %cst_246 = arith.constant 0.000000e+00 : f32
    %812 = vector.broadcast %cst_246 : f32 to vector<2x4xf32>
    %813 = arith.addf %812, %811 : vector<2x4xf32>
    %cst_247 = arith.constant 5.000000e-01 : f32
    %814 = vector.broadcast %cst_247 : f32 to vector<2x4xf32>
    %815 = arith.mulf %781, %814 : vector<2x4xf32>
    %cst_248 = arith.constant 1.000000e+00 : f32
    %816 = vector.broadcast %cst_248 : f32 to vector<2x4xf32>
    %817 = arith.addf %816, %815 : vector<2x4xf32>
    %818 = arith.mulf %99, %785 : vector<2x4xf32>
    %cst_249 = arith.constant 0.000000e+00 : f32
    %819 = vector.broadcast %cst_249 : f32 to vector<2x4xf32>
    %820 = arith.addf %819, %818 : vector<2x4xf32>
    %821 = arith.mulf %101, %797 : vector<2x4xf32>
    %822 = arith.addf %820, %821 : vector<2x4xf32>
    %823 = arith.mulf %103, %809 : vector<2x4xf32>
    %824 = arith.addf %822, %823 : vector<2x4xf32>
    %825 = arith.mulf %99, %789 : vector<2x4xf32>
    %cst_250 = arith.constant 0.000000e+00 : f32
    %826 = vector.broadcast %cst_250 : f32 to vector<2x4xf32>
    %827 = arith.addf %826, %825 : vector<2x4xf32>
    %828 = arith.mulf %101, %801 : vector<2x4xf32>
    %829 = arith.addf %827, %828 : vector<2x4xf32>
    %830 = arith.mulf %103, %813 : vector<2x4xf32>
    %831 = arith.addf %829, %830 : vector<2x4xf32>
    %832 = arith.mulf %99, %793 : vector<2x4xf32>
    %cst_251 = arith.constant 0.000000e+00 : f32
    %833 = vector.broadcast %cst_251 : f32 to vector<2x4xf32>
    %834 = arith.addf %833, %832 : vector<2x4xf32>
    %835 = arith.mulf %101, %805 : vector<2x4xf32>
    %836 = arith.addf %834, %835 : vector<2x4xf32>
    %837 = arith.mulf %103, %817 : vector<2x4xf32>
    %838 = arith.addf %836, %837 : vector<2x4xf32>
    %839 = arith.mulf %105, %785 : vector<2x4xf32>
    %cst_252 = arith.constant 0.000000e+00 : f32
    %840 = vector.broadcast %cst_252 : f32 to vector<2x4xf32>
    %841 = arith.addf %840, %839 : vector<2x4xf32>
    %842 = arith.mulf %107, %797 : vector<2x4xf32>
    %843 = arith.addf %841, %842 : vector<2x4xf32>
    %844 = arith.mulf %109, %809 : vector<2x4xf32>
    %845 = arith.addf %843, %844 : vector<2x4xf32>
    %846 = arith.mulf %105, %789 : vector<2x4xf32>
    %cst_253 = arith.constant 0.000000e+00 : f32
    %847 = vector.broadcast %cst_253 : f32 to vector<2x4xf32>
    %848 = arith.addf %847, %846 : vector<2x4xf32>
    %849 = arith.mulf %107, %801 : vector<2x4xf32>
    %850 = arith.addf %848, %849 : vector<2x4xf32>
    %851 = arith.mulf %109, %813 : vector<2x4xf32>
    %852 = arith.addf %850, %851 : vector<2x4xf32>
    %853 = arith.mulf %105, %793 : vector<2x4xf32>
    %cst_254 = arith.constant 0.000000e+00 : f32
    %854 = vector.broadcast %cst_254 : f32 to vector<2x4xf32>
    %855 = arith.addf %854, %853 : vector<2x4xf32>
    %856 = arith.mulf %107, %805 : vector<2x4xf32>
    %857 = arith.addf %855, %856 : vector<2x4xf32>
    %858 = arith.mulf %109, %817 : vector<2x4xf32>
    %859 = arith.addf %857, %858 : vector<2x4xf32>
    %860 = arith.mulf %111, %785 : vector<2x4xf32>
    %cst_255 = arith.constant 0.000000e+00 : f32
    %861 = vector.broadcast %cst_255 : f32 to vector<2x4xf32>
    %862 = arith.addf %861, %860 : vector<2x4xf32>
    %863 = arith.mulf %113, %797 : vector<2x4xf32>
    %864 = arith.addf %862, %863 : vector<2x4xf32>
    %865 = arith.mulf %115, %809 : vector<2x4xf32>
    %866 = arith.addf %864, %865 : vector<2x4xf32>
    %867 = arith.mulf %111, %789 : vector<2x4xf32>
    %cst_256 = arith.constant 0.000000e+00 : f32
    %868 = vector.broadcast %cst_256 : f32 to vector<2x4xf32>
    %869 = arith.addf %868, %867 : vector<2x4xf32>
    %870 = arith.mulf %113, %801 : vector<2x4xf32>
    %871 = arith.addf %869, %870 : vector<2x4xf32>
    %872 = arith.mulf %115, %813 : vector<2x4xf32>
    %873 = arith.addf %871, %872 : vector<2x4xf32>
    %874 = arith.mulf %111, %793 : vector<2x4xf32>
    %cst_257 = arith.constant 0.000000e+00 : f32
    %875 = vector.broadcast %cst_257 : f32 to vector<2x4xf32>
    %876 = arith.addf %875, %874 : vector<2x4xf32>
    %877 = arith.mulf %113, %805 : vector<2x4xf32>
    %878 = arith.addf %876, %877 : vector<2x4xf32>
    %879 = arith.mulf %115, %817 : vector<2x4xf32>
    %880 = arith.addf %878, %879 : vector<2x4xf32>
    %cst_258 = arith.constant 1.000000e+00 : f32
    %881 = vector.broadcast %cst_258 : f32 to vector<2x4xf32>
    %882 = arith.mulf %824, %881 : vector<2x4xf32>
    %cst_259 = arith.constant 1.000000e+00 : f32
    %883 = vector.broadcast %cst_259 : f32 to vector<2x4xf32>
    %884 = arith.addf %883, %882 : vector<2x4xf32>
    %cst_260 = arith.constant 1.000000e+00 : f32
    %885 = vector.broadcast %cst_260 : f32 to vector<2x4xf32>
    %886 = arith.mulf %831, %885 : vector<2x4xf32>
    %cst_261 = arith.constant 0.000000e+00 : f32
    %887 = vector.broadcast %cst_261 : f32 to vector<2x4xf32>
    %888 = arith.addf %887, %886 : vector<2x4xf32>
    %cst_262 = arith.constant 1.000000e+00 : f32
    %889 = vector.broadcast %cst_262 : f32 to vector<2x4xf32>
    %890 = arith.mulf %838, %889 : vector<2x4xf32>
    %cst_263 = arith.constant 0.000000e+00 : f32
    %891 = vector.broadcast %cst_263 : f32 to vector<2x4xf32>
    %892 = arith.addf %891, %890 : vector<2x4xf32>
    %cst_264 = arith.constant 1.000000e+00 : f32
    %893 = vector.broadcast %cst_264 : f32 to vector<2x4xf32>
    %894 = arith.mulf %845, %893 : vector<2x4xf32>
    %cst_265 = arith.constant 0.000000e+00 : f32
    %895 = vector.broadcast %cst_265 : f32 to vector<2x4xf32>
    %896 = arith.addf %895, %894 : vector<2x4xf32>
    %cst_266 = arith.constant 1.000000e+00 : f32
    %897 = vector.broadcast %cst_266 : f32 to vector<2x4xf32>
    %898 = arith.mulf %852, %897 : vector<2x4xf32>
    %cst_267 = arith.constant 1.000000e+00 : f32
    %899 = vector.broadcast %cst_267 : f32 to vector<2x4xf32>
    %900 = arith.addf %899, %898 : vector<2x4xf32>
    %cst_268 = arith.constant 1.000000e+00 : f32
    %901 = vector.broadcast %cst_268 : f32 to vector<2x4xf32>
    %902 = arith.mulf %859, %901 : vector<2x4xf32>
    %cst_269 = arith.constant 0.000000e+00 : f32
    %903 = vector.broadcast %cst_269 : f32 to vector<2x4xf32>
    %904 = arith.addf %903, %902 : vector<2x4xf32>
    %cst_270 = arith.constant 1.000000e+00 : f32
    %905 = vector.broadcast %cst_270 : f32 to vector<2x4xf32>
    %906 = arith.mulf %866, %905 : vector<2x4xf32>
    %cst_271 = arith.constant 0.000000e+00 : f32
    %907 = vector.broadcast %cst_271 : f32 to vector<2x4xf32>
    %908 = arith.addf %907, %906 : vector<2x4xf32>
    %cst_272 = arith.constant 1.000000e+00 : f32
    %909 = vector.broadcast %cst_272 : f32 to vector<2x4xf32>
    %910 = arith.mulf %873, %909 : vector<2x4xf32>
    %cst_273 = arith.constant 0.000000e+00 : f32
    %911 = vector.broadcast %cst_273 : f32 to vector<2x4xf32>
    %912 = arith.addf %911, %910 : vector<2x4xf32>
    %cst_274 = arith.constant 1.000000e+00 : f32
    %913 = vector.broadcast %cst_274 : f32 to vector<2x4xf32>
    %914 = arith.mulf %880, %913 : vector<2x4xf32>
    %cst_275 = arith.constant 1.000000e+00 : f32
    %915 = vector.broadcast %cst_275 : f32 to vector<2x4xf32>
    %916 = arith.addf %915, %914 : vector<2x4xf32>
    %917 = arith.mulf %884, %884 : vector<2x4xf32>
    %cst_276 = arith.constant 0.000000e+00 : f32
    %918 = vector.broadcast %cst_276 : f32 to vector<2x4xf32>
    %919 = arith.addf %918, %917 : vector<2x4xf32>
    %920 = arith.mulf %888, %896 : vector<2x4xf32>
    %921 = arith.addf %919, %920 : vector<2x4xf32>
    %922 = arith.mulf %892, %908 : vector<2x4xf32>
    %923 = arith.addf %921, %922 : vector<2x4xf32>
    %924 = arith.mulf %884, %888 : vector<2x4xf32>
    %cst_277 = arith.constant 0.000000e+00 : f32
    %925 = vector.broadcast %cst_277 : f32 to vector<2x4xf32>
    %926 = arith.addf %925, %924 : vector<2x4xf32>
    %927 = arith.mulf %888, %900 : vector<2x4xf32>
    %928 = arith.addf %926, %927 : vector<2x4xf32>
    %929 = arith.mulf %892, %912 : vector<2x4xf32>
    %930 = arith.addf %928, %929 : vector<2x4xf32>
    %931 = arith.mulf %884, %892 : vector<2x4xf32>
    %cst_278 = arith.constant 0.000000e+00 : f32
    %932 = vector.broadcast %cst_278 : f32 to vector<2x4xf32>
    %933 = arith.addf %932, %931 : vector<2x4xf32>
    %934 = arith.mulf %888, %904 : vector<2x4xf32>
    %935 = arith.addf %933, %934 : vector<2x4xf32>
    %936 = arith.mulf %892, %916 : vector<2x4xf32>
    %937 = arith.addf %935, %936 : vector<2x4xf32>
    %938 = arith.mulf %896, %884 : vector<2x4xf32>
    %cst_279 = arith.constant 0.000000e+00 : f32
    %939 = vector.broadcast %cst_279 : f32 to vector<2x4xf32>
    %940 = arith.addf %939, %938 : vector<2x4xf32>
    %941 = arith.mulf %900, %896 : vector<2x4xf32>
    %942 = arith.addf %940, %941 : vector<2x4xf32>
    %943 = arith.mulf %904, %908 : vector<2x4xf32>
    %944 = arith.addf %942, %943 : vector<2x4xf32>
    %945 = arith.mulf %896, %888 : vector<2x4xf32>
    %cst_280 = arith.constant 0.000000e+00 : f32
    %946 = vector.broadcast %cst_280 : f32 to vector<2x4xf32>
    %947 = arith.addf %946, %945 : vector<2x4xf32>
    %948 = arith.mulf %900, %900 : vector<2x4xf32>
    %949 = arith.addf %947, %948 : vector<2x4xf32>
    %950 = arith.mulf %904, %912 : vector<2x4xf32>
    %951 = arith.addf %949, %950 : vector<2x4xf32>
    %952 = arith.mulf %896, %892 : vector<2x4xf32>
    %cst_281 = arith.constant 0.000000e+00 : f32
    %953 = vector.broadcast %cst_281 : f32 to vector<2x4xf32>
    %954 = arith.addf %953, %952 : vector<2x4xf32>
    %955 = arith.mulf %900, %904 : vector<2x4xf32>
    %956 = arith.addf %954, %955 : vector<2x4xf32>
    %957 = arith.mulf %904, %916 : vector<2x4xf32>
    %958 = arith.addf %956, %957 : vector<2x4xf32>
    %959 = arith.mulf %908, %884 : vector<2x4xf32>
    %cst_282 = arith.constant 0.000000e+00 : f32
    %960 = vector.broadcast %cst_282 : f32 to vector<2x4xf32>
    %961 = arith.addf %960, %959 : vector<2x4xf32>
    %962 = arith.mulf %912, %896 : vector<2x4xf32>
    %963 = arith.addf %961, %962 : vector<2x4xf32>
    %964 = arith.mulf %916, %908 : vector<2x4xf32>
    %965 = arith.addf %963, %964 : vector<2x4xf32>
    %966 = arith.mulf %908, %888 : vector<2x4xf32>
    %cst_283 = arith.constant 0.000000e+00 : f32
    %967 = vector.broadcast %cst_283 : f32 to vector<2x4xf32>
    %968 = arith.addf %967, %966 : vector<2x4xf32>
    %969 = arith.mulf %912, %900 : vector<2x4xf32>
    %970 = arith.addf %968, %969 : vector<2x4xf32>
    %971 = arith.mulf %916, %912 : vector<2x4xf32>
    %972 = arith.addf %970, %971 : vector<2x4xf32>
    %973 = arith.mulf %908, %892 : vector<2x4xf32>
    %cst_284 = arith.constant 0.000000e+00 : f32
    %974 = vector.broadcast %cst_284 : f32 to vector<2x4xf32>
    %975 = arith.addf %974, %973 : vector<2x4xf32>
    %976 = arith.mulf %912, %904 : vector<2x4xf32>
    %977 = arith.addf %975, %976 : vector<2x4xf32>
    %978 = arith.mulf %916, %916 : vector<2x4xf32>
    %979 = arith.addf %977, %978 : vector<2x4xf32>
    %980 = arith.mulf %923, %923 : vector<2x4xf32>
    %cst_285 = arith.constant 0.000000e+00 : f32
    %981 = vector.broadcast %cst_285 : f32 to vector<2x4xf32>
    %982 = arith.addf %981, %980 : vector<2x4xf32>
    %983 = arith.mulf %930, %944 : vector<2x4xf32>
    %984 = arith.addf %982, %983 : vector<2x4xf32>
    %985 = arith.mulf %937, %965 : vector<2x4xf32>
    %986 = arith.addf %984, %985 : vector<2x4xf32>
    %987 = arith.mulf %923, %930 : vector<2x4xf32>
    %cst_286 = arith.constant 0.000000e+00 : f32
    %988 = vector.broadcast %cst_286 : f32 to vector<2x4xf32>
    %989 = arith.addf %988, %987 : vector<2x4xf32>
    %990 = arith.mulf %930, %951 : vector<2x4xf32>
    %991 = arith.addf %989, %990 : vector<2x4xf32>
    %992 = arith.mulf %937, %972 : vector<2x4xf32>
    %993 = arith.addf %991, %992 : vector<2x4xf32>
    %994 = arith.mulf %923, %937 : vector<2x4xf32>
    %cst_287 = arith.constant 0.000000e+00 : f32
    %995 = vector.broadcast %cst_287 : f32 to vector<2x4xf32>
    %996 = arith.addf %995, %994 : vector<2x4xf32>
    %997 = arith.mulf %930, %958 : vector<2x4xf32>
    %998 = arith.addf %996, %997 : vector<2x4xf32>
    %999 = arith.mulf %937, %979 : vector<2x4xf32>
    %1000 = arith.addf %998, %999 : vector<2x4xf32>
    %1001 = arith.mulf %944, %923 : vector<2x4xf32>
    %cst_288 = arith.constant 0.000000e+00 : f32
    %1002 = vector.broadcast %cst_288 : f32 to vector<2x4xf32>
    %1003 = arith.addf %1002, %1001 : vector<2x4xf32>
    %1004 = arith.mulf %951, %944 : vector<2x4xf32>
    %1005 = arith.addf %1003, %1004 : vector<2x4xf32>
    %1006 = arith.mulf %958, %965 : vector<2x4xf32>
    %1007 = arith.addf %1005, %1006 : vector<2x4xf32>
    %1008 = arith.mulf %944, %930 : vector<2x4xf32>
    %cst_289 = arith.constant 0.000000e+00 : f32
    %1009 = vector.broadcast %cst_289 : f32 to vector<2x4xf32>
    %1010 = arith.addf %1009, %1008 : vector<2x4xf32>
    %1011 = arith.mulf %951, %951 : vector<2x4xf32>
    %1012 = arith.addf %1010, %1011 : vector<2x4xf32>
    %1013 = arith.mulf %958, %972 : vector<2x4xf32>
    %1014 = arith.addf %1012, %1013 : vector<2x4xf32>
    %1015 = arith.mulf %944, %937 : vector<2x4xf32>
    %cst_290 = arith.constant 0.000000e+00 : f32
    %1016 = vector.broadcast %cst_290 : f32 to vector<2x4xf32>
    %1017 = arith.addf %1016, %1015 : vector<2x4xf32>
    %1018 = arith.mulf %951, %958 : vector<2x4xf32>
    %1019 = arith.addf %1017, %1018 : vector<2x4xf32>
    %1020 = arith.mulf %958, %979 : vector<2x4xf32>
    %1021 = arith.addf %1019, %1020 : vector<2x4xf32>
    %1022 = arith.mulf %965, %923 : vector<2x4xf32>
    %cst_291 = arith.constant 0.000000e+00 : f32
    %1023 = vector.broadcast %cst_291 : f32 to vector<2x4xf32>
    %1024 = arith.addf %1023, %1022 : vector<2x4xf32>
    %1025 = arith.mulf %972, %944 : vector<2x4xf32>
    %1026 = arith.addf %1024, %1025 : vector<2x4xf32>
    %1027 = arith.mulf %979, %965 : vector<2x4xf32>
    %1028 = arith.addf %1026, %1027 : vector<2x4xf32>
    %1029 = arith.mulf %965, %930 : vector<2x4xf32>
    %cst_292 = arith.constant 0.000000e+00 : f32
    %1030 = vector.broadcast %cst_292 : f32 to vector<2x4xf32>
    %1031 = arith.addf %1030, %1029 : vector<2x4xf32>
    %1032 = arith.mulf %972, %951 : vector<2x4xf32>
    %1033 = arith.addf %1031, %1032 : vector<2x4xf32>
    %1034 = arith.mulf %979, %972 : vector<2x4xf32>
    %1035 = arith.addf %1033, %1034 : vector<2x4xf32>
    %1036 = arith.mulf %965, %937 : vector<2x4xf32>
    %cst_293 = arith.constant 0.000000e+00 : f32
    %1037 = vector.broadcast %cst_293 : f32 to vector<2x4xf32>
    %1038 = arith.addf %1037, %1036 : vector<2x4xf32>
    %1039 = arith.mulf %972, %958 : vector<2x4xf32>
    %1040 = arith.addf %1038, %1039 : vector<2x4xf32>
    %1041 = arith.mulf %979, %979 : vector<2x4xf32>
    %1042 = arith.addf %1040, %1041 : vector<2x4xf32>
    %1043 = arith.mulf %986, %986 : vector<2x4xf32>
    %cst_294 = arith.constant 0.000000e+00 : f32
    %1044 = vector.broadcast %cst_294 : f32 to vector<2x4xf32>
    %1045 = arith.addf %1044, %1043 : vector<2x4xf32>
    %1046 = arith.mulf %993, %1007 : vector<2x4xf32>
    %1047 = arith.addf %1045, %1046 : vector<2x4xf32>
    %1048 = arith.mulf %1000, %1028 : vector<2x4xf32>
    %1049 = arith.addf %1047, %1048 : vector<2x4xf32>
    %1050 = arith.mulf %986, %993 : vector<2x4xf32>
    %cst_295 = arith.constant 0.000000e+00 : f32
    %1051 = vector.broadcast %cst_295 : f32 to vector<2x4xf32>
    %1052 = arith.addf %1051, %1050 : vector<2x4xf32>
    %1053 = arith.mulf %993, %1014 : vector<2x4xf32>
    %1054 = arith.addf %1052, %1053 : vector<2x4xf32>
    %1055 = arith.mulf %1000, %1035 : vector<2x4xf32>
    %1056 = arith.addf %1054, %1055 : vector<2x4xf32>
    %1057 = arith.mulf %986, %1000 : vector<2x4xf32>
    %cst_296 = arith.constant 0.000000e+00 : f32
    %1058 = vector.broadcast %cst_296 : f32 to vector<2x4xf32>
    %1059 = arith.addf %1058, %1057 : vector<2x4xf32>
    %1060 = arith.mulf %993, %1021 : vector<2x4xf32>
    %1061 = arith.addf %1059, %1060 : vector<2x4xf32>
    %1062 = arith.mulf %1000, %1042 : vector<2x4xf32>
    %1063 = arith.addf %1061, %1062 : vector<2x4xf32>
    %1064 = arith.mulf %1007, %986 : vector<2x4xf32>
    %cst_297 = arith.constant 0.000000e+00 : f32
    %1065 = vector.broadcast %cst_297 : f32 to vector<2x4xf32>
    %1066 = arith.addf %1065, %1064 : vector<2x4xf32>
    %1067 = arith.mulf %1014, %1007 : vector<2x4xf32>
    %1068 = arith.addf %1066, %1067 : vector<2x4xf32>
    %1069 = arith.mulf %1021, %1028 : vector<2x4xf32>
    %1070 = arith.addf %1068, %1069 : vector<2x4xf32>
    %1071 = arith.mulf %1007, %993 : vector<2x4xf32>
    %cst_298 = arith.constant 0.000000e+00 : f32
    %1072 = vector.broadcast %cst_298 : f32 to vector<2x4xf32>
    %1073 = arith.addf %1072, %1071 : vector<2x4xf32>
    %1074 = arith.mulf %1014, %1014 : vector<2x4xf32>
    %1075 = arith.addf %1073, %1074 : vector<2x4xf32>
    %1076 = arith.mulf %1021, %1035 : vector<2x4xf32>
    %1077 = arith.addf %1075, %1076 : vector<2x4xf32>
    %1078 = arith.mulf %1007, %1000 : vector<2x4xf32>
    %cst_299 = arith.constant 0.000000e+00 : f32
    %1079 = vector.broadcast %cst_299 : f32 to vector<2x4xf32>
    %1080 = arith.addf %1079, %1078 : vector<2x4xf32>
    %1081 = arith.mulf %1014, %1021 : vector<2x4xf32>
    %1082 = arith.addf %1080, %1081 : vector<2x4xf32>
    %1083 = arith.mulf %1021, %1042 : vector<2x4xf32>
    %1084 = arith.addf %1082, %1083 : vector<2x4xf32>
    %1085 = arith.mulf %1028, %986 : vector<2x4xf32>
    %cst_300 = arith.constant 0.000000e+00 : f32
    %1086 = vector.broadcast %cst_300 : f32 to vector<2x4xf32>
    %1087 = arith.addf %1086, %1085 : vector<2x4xf32>
    %1088 = arith.mulf %1035, %1007 : vector<2x4xf32>
    %1089 = arith.addf %1087, %1088 : vector<2x4xf32>
    %1090 = arith.mulf %1042, %1028 : vector<2x4xf32>
    %1091 = arith.addf %1089, %1090 : vector<2x4xf32>
    %1092 = arith.mulf %1028, %993 : vector<2x4xf32>
    %cst_301 = arith.constant 0.000000e+00 : f32
    %1093 = vector.broadcast %cst_301 : f32 to vector<2x4xf32>
    %1094 = arith.addf %1093, %1092 : vector<2x4xf32>
    %1095 = arith.mulf %1035, %1014 : vector<2x4xf32>
    %1096 = arith.addf %1094, %1095 : vector<2x4xf32>
    %1097 = arith.mulf %1042, %1035 : vector<2x4xf32>
    %1098 = arith.addf %1096, %1097 : vector<2x4xf32>
    %1099 = arith.mulf %1028, %1000 : vector<2x4xf32>
    %cst_302 = arith.constant 0.000000e+00 : f32
    %1100 = vector.broadcast %cst_302 : f32 to vector<2x4xf32>
    %1101 = arith.addf %1100, %1099 : vector<2x4xf32>
    %1102 = arith.mulf %1035, %1021 : vector<2x4xf32>
    %1103 = arith.addf %1101, %1102 : vector<2x4xf32>
    %1104 = arith.mulf %1042, %1042 : vector<2x4xf32>
    %1105 = arith.addf %1103, %1104 : vector<2x4xf32>
    %1106 = arith.mulf %1049, %1049 : vector<2x4xf32>
    %cst_303 = arith.constant 0.000000e+00 : f32
    %1107 = vector.broadcast %cst_303 : f32 to vector<2x4xf32>
    %1108 = arith.addf %1107, %1106 : vector<2x4xf32>
    %1109 = arith.mulf %1056, %1070 : vector<2x4xf32>
    %1110 = arith.addf %1108, %1109 : vector<2x4xf32>
    %1111 = arith.mulf %1063, %1091 : vector<2x4xf32>
    %1112 = arith.addf %1110, %1111 : vector<2x4xf32>
    %1113 = arith.mulf %1049, %1056 : vector<2x4xf32>
    %cst_304 = arith.constant 0.000000e+00 : f32
    %1114 = vector.broadcast %cst_304 : f32 to vector<2x4xf32>
    %1115 = arith.addf %1114, %1113 : vector<2x4xf32>
    %1116 = arith.mulf %1056, %1077 : vector<2x4xf32>
    %1117 = arith.addf %1115, %1116 : vector<2x4xf32>
    %1118 = arith.mulf %1063, %1098 : vector<2x4xf32>
    %1119 = arith.addf %1117, %1118 : vector<2x4xf32>
    %1120 = arith.mulf %1049, %1063 : vector<2x4xf32>
    %cst_305 = arith.constant 0.000000e+00 : f32
    %1121 = vector.broadcast %cst_305 : f32 to vector<2x4xf32>
    %1122 = arith.addf %1121, %1120 : vector<2x4xf32>
    %1123 = arith.mulf %1056, %1084 : vector<2x4xf32>
    %1124 = arith.addf %1122, %1123 : vector<2x4xf32>
    %1125 = arith.mulf %1063, %1105 : vector<2x4xf32>
    %1126 = arith.addf %1124, %1125 : vector<2x4xf32>
    %1127 = arith.mulf %1070, %1049 : vector<2x4xf32>
    %cst_306 = arith.constant 0.000000e+00 : f32
    %1128 = vector.broadcast %cst_306 : f32 to vector<2x4xf32>
    %1129 = arith.addf %1128, %1127 : vector<2x4xf32>
    %1130 = arith.mulf %1077, %1070 : vector<2x4xf32>
    %1131 = arith.addf %1129, %1130 : vector<2x4xf32>
    %1132 = arith.mulf %1084, %1091 : vector<2x4xf32>
    %1133 = arith.addf %1131, %1132 : vector<2x4xf32>
    %1134 = arith.mulf %1070, %1056 : vector<2x4xf32>
    %cst_307 = arith.constant 0.000000e+00 : f32
    %1135 = vector.broadcast %cst_307 : f32 to vector<2x4xf32>
    %1136 = arith.addf %1135, %1134 : vector<2x4xf32>
    %1137 = arith.mulf %1077, %1077 : vector<2x4xf32>
    %1138 = arith.addf %1136, %1137 : vector<2x4xf32>
    %1139 = arith.mulf %1084, %1098 : vector<2x4xf32>
    %1140 = arith.addf %1138, %1139 : vector<2x4xf32>
    %1141 = arith.mulf %1070, %1063 : vector<2x4xf32>
    %cst_308 = arith.constant 0.000000e+00 : f32
    %1142 = vector.broadcast %cst_308 : f32 to vector<2x4xf32>
    %1143 = arith.addf %1142, %1141 : vector<2x4xf32>
    %1144 = arith.mulf %1077, %1084 : vector<2x4xf32>
    %1145 = arith.addf %1143, %1144 : vector<2x4xf32>
    %1146 = arith.mulf %1084, %1105 : vector<2x4xf32>
    %1147 = arith.addf %1145, %1146 : vector<2x4xf32>
    %1148 = arith.mulf %1091, %1049 : vector<2x4xf32>
    %cst_309 = arith.constant 0.000000e+00 : f32
    %1149 = vector.broadcast %cst_309 : f32 to vector<2x4xf32>
    %1150 = arith.addf %1149, %1148 : vector<2x4xf32>
    %1151 = arith.mulf %1098, %1070 : vector<2x4xf32>
    %1152 = arith.addf %1150, %1151 : vector<2x4xf32>
    %1153 = arith.mulf %1105, %1091 : vector<2x4xf32>
    %1154 = arith.addf %1152, %1153 : vector<2x4xf32>
    %1155 = arith.mulf %1091, %1056 : vector<2x4xf32>
    %cst_310 = arith.constant 0.000000e+00 : f32
    %1156 = vector.broadcast %cst_310 : f32 to vector<2x4xf32>
    %1157 = arith.addf %1156, %1155 : vector<2x4xf32>
    %1158 = arith.mulf %1098, %1077 : vector<2x4xf32>
    %1159 = arith.addf %1157, %1158 : vector<2x4xf32>
    %1160 = arith.mulf %1105, %1098 : vector<2x4xf32>
    %1161 = arith.addf %1159, %1160 : vector<2x4xf32>
    %1162 = arith.mulf %1091, %1063 : vector<2x4xf32>
    %cst_311 = arith.constant 0.000000e+00 : f32
    %1163 = vector.broadcast %cst_311 : f32 to vector<2x4xf32>
    %1164 = arith.addf %1163, %1162 : vector<2x4xf32>
    %1165 = arith.mulf %1098, %1084 : vector<2x4xf32>
    %1166 = arith.addf %1164, %1165 : vector<2x4xf32>
    %1167 = arith.mulf %1105, %1105 : vector<2x4xf32>
    %1168 = arith.addf %1166, %1167 : vector<2x4xf32>
    %1169 = arith.mulf %1112, %1112 : vector<2x4xf32>
    %cst_312 = arith.constant 0.000000e+00 : f32
    %1170 = vector.broadcast %cst_312 : f32 to vector<2x4xf32>
    %1171 = arith.addf %1170, %1169 : vector<2x4xf32>
    %1172 = arith.mulf %1119, %1133 : vector<2x4xf32>
    %1173 = arith.addf %1171, %1172 : vector<2x4xf32>
    %1174 = arith.mulf %1126, %1154 : vector<2x4xf32>
    %1175 = arith.addf %1173, %1174 : vector<2x4xf32>
    %1176 = arith.mulf %1112, %1119 : vector<2x4xf32>
    %cst_313 = arith.constant 0.000000e+00 : f32
    %1177 = vector.broadcast %cst_313 : f32 to vector<2x4xf32>
    %1178 = arith.addf %1177, %1176 : vector<2x4xf32>
    %1179 = arith.mulf %1119, %1140 : vector<2x4xf32>
    %1180 = arith.addf %1178, %1179 : vector<2x4xf32>
    %1181 = arith.mulf %1126, %1161 : vector<2x4xf32>
    %1182 = arith.addf %1180, %1181 : vector<2x4xf32>
    %1183 = arith.mulf %1112, %1126 : vector<2x4xf32>
    %cst_314 = arith.constant 0.000000e+00 : f32
    %1184 = vector.broadcast %cst_314 : f32 to vector<2x4xf32>
    %1185 = arith.addf %1184, %1183 : vector<2x4xf32>
    %1186 = arith.mulf %1119, %1147 : vector<2x4xf32>
    %1187 = arith.addf %1185, %1186 : vector<2x4xf32>
    %1188 = arith.mulf %1126, %1168 : vector<2x4xf32>
    %1189 = arith.addf %1187, %1188 : vector<2x4xf32>
    %1190 = arith.mulf %1133, %1112 : vector<2x4xf32>
    %cst_315 = arith.constant 0.000000e+00 : f32
    %1191 = vector.broadcast %cst_315 : f32 to vector<2x4xf32>
    %1192 = arith.addf %1191, %1190 : vector<2x4xf32>
    %1193 = arith.mulf %1140, %1133 : vector<2x4xf32>
    %1194 = arith.addf %1192, %1193 : vector<2x4xf32>
    %1195 = arith.mulf %1147, %1154 : vector<2x4xf32>
    %1196 = arith.addf %1194, %1195 : vector<2x4xf32>
    %1197 = arith.mulf %1133, %1119 : vector<2x4xf32>
    %cst_316 = arith.constant 0.000000e+00 : f32
    %1198 = vector.broadcast %cst_316 : f32 to vector<2x4xf32>
    %1199 = arith.addf %1198, %1197 : vector<2x4xf32>
    %1200 = arith.mulf %1140, %1140 : vector<2x4xf32>
    %1201 = arith.addf %1199, %1200 : vector<2x4xf32>
    %1202 = arith.mulf %1147, %1161 : vector<2x4xf32>
    %1203 = arith.addf %1201, %1202 : vector<2x4xf32>
    %1204 = arith.mulf %1133, %1126 : vector<2x4xf32>
    %cst_317 = arith.constant 0.000000e+00 : f32
    %1205 = vector.broadcast %cst_317 : f32 to vector<2x4xf32>
    %1206 = arith.addf %1205, %1204 : vector<2x4xf32>
    %1207 = arith.mulf %1140, %1147 : vector<2x4xf32>
    %1208 = arith.addf %1206, %1207 : vector<2x4xf32>
    %1209 = arith.mulf %1147, %1168 : vector<2x4xf32>
    %1210 = arith.addf %1208, %1209 : vector<2x4xf32>
    %1211 = arith.mulf %1154, %1112 : vector<2x4xf32>
    %cst_318 = arith.constant 0.000000e+00 : f32
    %1212 = vector.broadcast %cst_318 : f32 to vector<2x4xf32>
    %1213 = arith.addf %1212, %1211 : vector<2x4xf32>
    %1214 = arith.mulf %1161, %1133 : vector<2x4xf32>
    %1215 = arith.addf %1213, %1214 : vector<2x4xf32>
    %1216 = arith.mulf %1168, %1154 : vector<2x4xf32>
    %1217 = arith.addf %1215, %1216 : vector<2x4xf32>
    %1218 = arith.mulf %1154, %1119 : vector<2x4xf32>
    %cst_319 = arith.constant 0.000000e+00 : f32
    %1219 = vector.broadcast %cst_319 : f32 to vector<2x4xf32>
    %1220 = arith.addf %1219, %1218 : vector<2x4xf32>
    %1221 = arith.mulf %1161, %1140 : vector<2x4xf32>
    %1222 = arith.addf %1220, %1221 : vector<2x4xf32>
    %1223 = arith.mulf %1168, %1161 : vector<2x4xf32>
    %1224 = arith.addf %1222, %1223 : vector<2x4xf32>
    %1225 = arith.mulf %1154, %1126 : vector<2x4xf32>
    %cst_320 = arith.constant 0.000000e+00 : f32
    %1226 = vector.broadcast %cst_320 : f32 to vector<2x4xf32>
    %1227 = arith.addf %1226, %1225 : vector<2x4xf32>
    %1228 = arith.mulf %1161, %1147 : vector<2x4xf32>
    %1229 = arith.addf %1227, %1228 : vector<2x4xf32>
    %1230 = arith.mulf %1168, %1168 : vector<2x4xf32>
    %1231 = arith.addf %1229, %1230 : vector<2x4xf32>
    %1232 = arith.mulf %1175, %1175 : vector<2x4xf32>
    %cst_321 = arith.constant 0.000000e+00 : f32
    %1233 = vector.broadcast %cst_321 : f32 to vector<2x4xf32>
    %1234 = arith.addf %1233, %1232 : vector<2x4xf32>
    %1235 = arith.mulf %1182, %1196 : vector<2x4xf32>
    %1236 = arith.addf %1234, %1235 : vector<2x4xf32>
    %1237 = arith.mulf %1189, %1217 : vector<2x4xf32>
    %1238 = arith.addf %1236, %1237 : vector<2x4xf32>
    %1239 = arith.mulf %1175, %1182 : vector<2x4xf32>
    %cst_322 = arith.constant 0.000000e+00 : f32
    %1240 = vector.broadcast %cst_322 : f32 to vector<2x4xf32>
    %1241 = arith.addf %1240, %1239 : vector<2x4xf32>
    %1242 = arith.mulf %1182, %1203 : vector<2x4xf32>
    %1243 = arith.addf %1241, %1242 : vector<2x4xf32>
    %1244 = arith.mulf %1189, %1224 : vector<2x4xf32>
    %1245 = arith.addf %1243, %1244 : vector<2x4xf32>
    %1246 = arith.mulf %1175, %1189 : vector<2x4xf32>
    %cst_323 = arith.constant 0.000000e+00 : f32
    %1247 = vector.broadcast %cst_323 : f32 to vector<2x4xf32>
    %1248 = arith.addf %1247, %1246 : vector<2x4xf32>
    %1249 = arith.mulf %1182, %1210 : vector<2x4xf32>
    %1250 = arith.addf %1248, %1249 : vector<2x4xf32>
    %1251 = arith.mulf %1189, %1231 : vector<2x4xf32>
    %1252 = arith.addf %1250, %1251 : vector<2x4xf32>
    %1253 = arith.mulf %1196, %1175 : vector<2x4xf32>
    %cst_324 = arith.constant 0.000000e+00 : f32
    %1254 = vector.broadcast %cst_324 : f32 to vector<2x4xf32>
    %1255 = arith.addf %1254, %1253 : vector<2x4xf32>
    %1256 = arith.mulf %1203, %1196 : vector<2x4xf32>
    %1257 = arith.addf %1255, %1256 : vector<2x4xf32>
    %1258 = arith.mulf %1210, %1217 : vector<2x4xf32>
    %1259 = arith.addf %1257, %1258 : vector<2x4xf32>
    %1260 = arith.mulf %1196, %1182 : vector<2x4xf32>
    %cst_325 = arith.constant 0.000000e+00 : f32
    %1261 = vector.broadcast %cst_325 : f32 to vector<2x4xf32>
    %1262 = arith.addf %1261, %1260 : vector<2x4xf32>
    %1263 = arith.mulf %1203, %1203 : vector<2x4xf32>
    %1264 = arith.addf %1262, %1263 : vector<2x4xf32>
    %1265 = arith.mulf %1210, %1224 : vector<2x4xf32>
    %1266 = arith.addf %1264, %1265 : vector<2x4xf32>
    %1267 = arith.mulf %1196, %1189 : vector<2x4xf32>
    %cst_326 = arith.constant 0.000000e+00 : f32
    %1268 = vector.broadcast %cst_326 : f32 to vector<2x4xf32>
    %1269 = arith.addf %1268, %1267 : vector<2x4xf32>
    %1270 = arith.mulf %1203, %1210 : vector<2x4xf32>
    %1271 = arith.addf %1269, %1270 : vector<2x4xf32>
    %1272 = arith.mulf %1210, %1231 : vector<2x4xf32>
    %1273 = arith.addf %1271, %1272 : vector<2x4xf32>
    %1274 = arith.mulf %1217, %1175 : vector<2x4xf32>
    %cst_327 = arith.constant 0.000000e+00 : f32
    %1275 = vector.broadcast %cst_327 : f32 to vector<2x4xf32>
    %1276 = arith.addf %1275, %1274 : vector<2x4xf32>
    %1277 = arith.mulf %1224, %1196 : vector<2x4xf32>
    %1278 = arith.addf %1276, %1277 : vector<2x4xf32>
    %1279 = arith.mulf %1231, %1217 : vector<2x4xf32>
    %1280 = arith.addf %1278, %1279 : vector<2x4xf32>
    %1281 = arith.mulf %1217, %1182 : vector<2x4xf32>
    %cst_328 = arith.constant 0.000000e+00 : f32
    %1282 = vector.broadcast %cst_328 : f32 to vector<2x4xf32>
    %1283 = arith.addf %1282, %1281 : vector<2x4xf32>
    %1284 = arith.mulf %1224, %1203 : vector<2x4xf32>
    %1285 = arith.addf %1283, %1284 : vector<2x4xf32>
    %1286 = arith.mulf %1231, %1224 : vector<2x4xf32>
    %1287 = arith.addf %1285, %1286 : vector<2x4xf32>
    %1288 = arith.mulf %1217, %1189 : vector<2x4xf32>
    %cst_329 = arith.constant 0.000000e+00 : f32
    %1289 = vector.broadcast %cst_329 : f32 to vector<2x4xf32>
    %1290 = arith.addf %1289, %1288 : vector<2x4xf32>
    %1291 = arith.mulf %1224, %1210 : vector<2x4xf32>
    %1292 = arith.addf %1290, %1291 : vector<2x4xf32>
    %1293 = arith.mulf %1231, %1231 : vector<2x4xf32>
    %1294 = arith.addf %1292, %1293 : vector<2x4xf32>
    %1295 = arith.mulf %1238, %1238 : vector<2x4xf32>
    %cst_330 = arith.constant 0.000000e+00 : f32
    %1296 = vector.broadcast %cst_330 : f32 to vector<2x4xf32>
    %1297 = arith.addf %1296, %1295 : vector<2x4xf32>
    %1298 = arith.mulf %1245, %1259 : vector<2x4xf32>
    %1299 = arith.addf %1297, %1298 : vector<2x4xf32>
    %1300 = arith.mulf %1252, %1280 : vector<2x4xf32>
    %1301 = arith.addf %1299, %1300 : vector<2x4xf32>
    %1302 = arith.mulf %1238, %1245 : vector<2x4xf32>
    %cst_331 = arith.constant 0.000000e+00 : f32
    %1303 = vector.broadcast %cst_331 : f32 to vector<2x4xf32>
    %1304 = arith.addf %1303, %1302 : vector<2x4xf32>
    %1305 = arith.mulf %1245, %1266 : vector<2x4xf32>
    %1306 = arith.addf %1304, %1305 : vector<2x4xf32>
    %1307 = arith.mulf %1252, %1287 : vector<2x4xf32>
    %1308 = arith.addf %1306, %1307 : vector<2x4xf32>
    %1309 = arith.mulf %1238, %1252 : vector<2x4xf32>
    %cst_332 = arith.constant 0.000000e+00 : f32
    %1310 = vector.broadcast %cst_332 : f32 to vector<2x4xf32>
    %1311 = arith.addf %1310, %1309 : vector<2x4xf32>
    %1312 = arith.mulf %1245, %1273 : vector<2x4xf32>
    %1313 = arith.addf %1311, %1312 : vector<2x4xf32>
    %1314 = arith.mulf %1252, %1294 : vector<2x4xf32>
    %1315 = arith.addf %1313, %1314 : vector<2x4xf32>
    %1316 = arith.mulf %1259, %1238 : vector<2x4xf32>
    %cst_333 = arith.constant 0.000000e+00 : f32
    %1317 = vector.broadcast %cst_333 : f32 to vector<2x4xf32>
    %1318 = arith.addf %1317, %1316 : vector<2x4xf32>
    %1319 = arith.mulf %1266, %1259 : vector<2x4xf32>
    %1320 = arith.addf %1318, %1319 : vector<2x4xf32>
    %1321 = arith.mulf %1273, %1280 : vector<2x4xf32>
    %1322 = arith.addf %1320, %1321 : vector<2x4xf32>
    %1323 = arith.mulf %1259, %1245 : vector<2x4xf32>
    %cst_334 = arith.constant 0.000000e+00 : f32
    %1324 = vector.broadcast %cst_334 : f32 to vector<2x4xf32>
    %1325 = arith.addf %1324, %1323 : vector<2x4xf32>
    %1326 = arith.mulf %1266, %1266 : vector<2x4xf32>
    %1327 = arith.addf %1325, %1326 : vector<2x4xf32>
    %1328 = arith.mulf %1273, %1287 : vector<2x4xf32>
    %1329 = arith.addf %1327, %1328 : vector<2x4xf32>
    %1330 = arith.mulf %1259, %1252 : vector<2x4xf32>
    %cst_335 = arith.constant 0.000000e+00 : f32
    %1331 = vector.broadcast %cst_335 : f32 to vector<2x4xf32>
    %1332 = arith.addf %1331, %1330 : vector<2x4xf32>
    %1333 = arith.mulf %1266, %1273 : vector<2x4xf32>
    %1334 = arith.addf %1332, %1333 : vector<2x4xf32>
    %1335 = arith.mulf %1273, %1294 : vector<2x4xf32>
    %1336 = arith.addf %1334, %1335 : vector<2x4xf32>
    %1337 = arith.mulf %1280, %1238 : vector<2x4xf32>
    %cst_336 = arith.constant 0.000000e+00 : f32
    %1338 = vector.broadcast %cst_336 : f32 to vector<2x4xf32>
    %1339 = arith.addf %1338, %1337 : vector<2x4xf32>
    %1340 = arith.mulf %1287, %1259 : vector<2x4xf32>
    %1341 = arith.addf %1339, %1340 : vector<2x4xf32>
    %1342 = arith.mulf %1294, %1280 : vector<2x4xf32>
    %1343 = arith.addf %1341, %1342 : vector<2x4xf32>
    %1344 = arith.mulf %1280, %1245 : vector<2x4xf32>
    %cst_337 = arith.constant 0.000000e+00 : f32
    %1345 = vector.broadcast %cst_337 : f32 to vector<2x4xf32>
    %1346 = arith.addf %1345, %1344 : vector<2x4xf32>
    %1347 = arith.mulf %1287, %1266 : vector<2x4xf32>
    %1348 = arith.addf %1346, %1347 : vector<2x4xf32>
    %1349 = arith.mulf %1294, %1287 : vector<2x4xf32>
    %1350 = arith.addf %1348, %1349 : vector<2x4xf32>
    %1351 = arith.mulf %1280, %1252 : vector<2x4xf32>
    %cst_338 = arith.constant 0.000000e+00 : f32
    %1352 = vector.broadcast %cst_338 : f32 to vector<2x4xf32>
    %1353 = arith.addf %1352, %1351 : vector<2x4xf32>
    %1354 = arith.mulf %1287, %1273 : vector<2x4xf32>
    %1355 = arith.addf %1353, %1354 : vector<2x4xf32>
    %1356 = arith.mulf %1294, %1294 : vector<2x4xf32>
    %1357 = arith.addf %1355, %1356 : vector<2x4xf32>
    %1358 = tpu.concatenate %1301, %1308, %1315, %1322, %1329, %1336, %1343, %1350, %1357 in 1 : vector<2x4xf32>, vector<2x4xf32>, vector<2x4xf32>, vector<2x4xf32>, vector<2x4xf32>, vector<2x4xf32>, vector<2x4xf32>, vector<2x4xf32>, vector<2x4xf32> -> vector<2x36xf32>
    %cst_339 = arith.constant dense<0xFF800000> : vector<2xf32>
    %1359 = vector.multi_reduction <maximumf>, %55, %cst_339 [1] : vector<2x4xf32> to vector<2xf32>
    %1360 = vector.shape_cast %1359 : vector<2xf32> to vector<2x1xf32>
    %1361 = vector.broadcast %1360 : vector<2x1xf32> to vector<2x4xf32>
    %1362 = arith.subf %55, %1361 : vector<2x4xf32>
    %1363 = math.exp %1362 : vector<2x4xf32>
    %cst_340 = arith.constant dense<0.000000e+00> : vector<2xf32>
    %1364 = vector.multi_reduction <add>, %1363, %cst_340 [1] : vector<2x4xf32> to vector<2xf32>
    %1365 = vector.shape_cast %1364 : vector<2xf32> to vector<2x1xf32>
    %1366 = vector.broadcast %1365 : vector<2x1xf32> to vector<2x4xf32>
    %1367 = arith.divf %1363, %1366 : vector<2x4xf32>
    %cst_341 = arith.constant 0.000000e+00 : f32
    %1368 = vector.broadcast %cst_341 : f32 to vector<2x76xf32>
    %1369 = tpu.concatenate %54, %1358, %1367, %1368 in 1 : vector<2x12xf32>, vector<2x36xf32>, vector<2x4xf32>, vector<2x76xf32> -> vector<2x128xf32>
    %c0_342 = arith.constant 0 : index
    %c0_343 = arith.constant 0 : index
    %1370 = vector.load %arg4[%c0_342, %c0_343] : memref<2x128xf32, #tpu.memory_space<vmem>>, vector<2x128xf32>
    tpu.vector_store %arg4[%c0_342, %c0_343], %1369 {strides = array<i32>} : memref<2x128xf32, #tpu.memory_space<vmem>>, vector<2x128xf32>,
    return
  }
  func.func @transform_0(%arg0: i32) -> (i32, i32, i32) {
    %c0_i32 = arith.constant 0 : i32
    %c0_i32_0 = arith.constant 0 : i32
    %c0_i32_1 = arith.constant 0 : i32
    %c0_i32_2 = arith.constant 0 : i32
    return %c0_i32, %c0_i32_0, %c0_i32_1 : i32, i32, i32
  }
  func.func @transform_1(%arg0: i32) -> (i32, i32) {
    %c0_i32 = arith.constant 0 : i32
    %c0_i32_0 = arith.constant 0 : i32
    %c0_i32_1 = arith.constant 0 : i32
    return %c0_i32, %c0_i32_0 : i32, i32
  }
  func.func @transform_2(%arg0: i32) -> (i32, i32) {
    %c0_i32 = arith.constant 0 : i32
    %c0_i32_0 = arith.constant 0 : i32
    %c0_i32_1 = arith.constant 0 : i32
    return %c0_i32, %c0_i32_0 : i32, i32
  }
  func.func @transform_3(%arg0: i32) -> (i32, i32) {
    %c0_i32 = arith.constant 0 : i32
    %c0_i32_0 = arith.constant 0 : i32
    %c0_i32_1 = arith.constant 0 : i32
    return %c0_i32, %c0_i32_0 : i32, i32
  }
}

</mosaic_0001>

<llo_original>
// kernel: n2mnet_forward.1
$region0: #{n2mnet_forward.1}
  #allocation0 [shape = 'u32[]', space=smem, size = 0x4, offset = 0x4, fixed_abs, tag = 'smem constant byte address 0x4 - core index']
  #allocation1 [shape = 'u32[144,128]{1,0:T(1,128)}', space=vmem, size = 0x12000, scoped, tag = 'internal scratch']
  %s0 = inlined_call_operand.vmem [shape: f32[2,128,3], index: 0, kind: input, shape index: {}]
  %s1 = inlined_call_operand.hbm [shape: f32[328,128], index: 1, kind: input, shape index: {}]
  %s2 = inlined_call_operand.vmem [shape: f32[8,128], index: 2, kind: input, shape index: {}]
  %s3 = inlined_call_operand.vmem [shape: f32[2,128], index: 3, kind: output, shape index: {}]
  %s4 = sld [smem:[#allocation0]]
  $region26: #{n2mnet_forward.1} parent=0
    _
  %s6 = ssub.s32 1, %s4
  %s7 = scalar_select 0, %s6, %s4
  $region1: #{n2mnet_forward.1} parent=0
    #allocation2 [shape = 'u8[167936]{0}', space=vmem, size = 0x29000, scoped, tag = 'input window, operand 1, single buffered']
    #allocation3 [shape = 's32[1]{0}', space=sflag, size = 0x4, scoped, tag = 'scoped memory for n2mnet_forward.1']
    %8 = vsyncpa [#allocation3], 0
    // Predicated region
    $region2: #{n2mnet_forward.1} parent=1 // pred_check
      _
    $region3: #{n2mnet_forward.1} parent=1 // pred_check_branch
      %10 = sbr.rel (0) target = $region5
    $region4: #{n2mnet_forward.1} parent=1 // pred_region
      _
    $region5: #{n2mnet_forward.1} parent=1 // pred_fallthru
      _
    // Predicated region
    $region6: #{n2mnet_forward.1} parent=1 // pred_check
      _
    $region7: #{n2mnet_forward.1} parent=1 // pred_check_branch
      %12 = sbr.rel (0) target = $region9
    $region8: #{n2mnet_forward.1} parent=1 // pred_region
      %s14 = ssub.s32 5248, 5248
      %15 = vsyncadd [#allocation3], %s14
      %s16 = sshll.u32 [#allocation2], 4
      %s17 = int_to_ptr.vmem [resolvable:$true] %s16
      %22 = dma.hbm_to_vmem [thread:$0]  %s1, 5248, %s17, [#allocation3], 128, 128, 8
    $region9: #{n2mnet_forward.1} parent=1 // pred_fallthru
      _
    // Predicated region
    $region10: #{n2mnet_forward.1} parent=1 // pred_check
      _
    $region11: #{n2mnet_forward.1} parent=1 // pred_check_branch
      %24 = sbr.rel (0) target = $region13
    $region12: #{n2mnet_forward.1} parent=1 // pred_region
      _
    $region13: #{n2mnet_forward.1} parent=1 // pred_fallthru
      _
    // Predicated region
    $region14: #{n2mnet_forward.1} parent=1 // pred_check
      _
    $region15: #{n2mnet_forward.1} parent=1 // pred_check_branch
      %26 = sbr.rel (0) target = $region17
    $region16: #{n2mnet_forward.1} parent=1 // pred_region
      %27 = dma.done [#allocation3], 5248
    $region17: #{n2mnet_forward.1} parent=1 // pred_fallthru
      _
    %v28 = vld [vmem:[%s0] sm:$0xff]
    %v29 = vld [vmem:[%s0 + $0x8] sm:$0xff]
    %v30 = vld [vmem:[%s0 + $0x10] sm:$0xff]
    %v31 = vld [vmem:[%s0 + $0x18] sm:$0xff]
    %v32 = vld [vmem:[%s0 + $0x20] sm:$0xff]
    %v33 = vld [vmem:[%s0 + $0x28] sm:$0xff]
    %v34 = vld [vmem:[%s0 + $0x30] sm:$0xff]
    %v35 = vld [vmem:[%s0 + $0x38] sm:$0xff]
    %v36 = vld [vmem:[%s0 + $0x40] sm:$0xff]
    %v37 = vld [vmem:[%s0 + $0x48] sm:$0xff]
    %v38 = vld [vmem:[%s0 + $0x50] sm:$0xff]
    %v39 = vld [vmem:[%s0 + $0x58] sm:$0xff]
    %v40 = vld [vmem:[%s0 + $0x60] sm:$0xff]
    %v41 = vld [vmem:[%s0 + $0x68] sm:$0xff]
    %v42 = vld [vmem:[%s0 + $0x70] sm:$0xff]
    %v43 = vld [vmem:[%s0 + $0x78] sm:$0xff]
    %v44 = vld [vmem:[%s0 + $0x80] sm:$0xff]
    %v45 = vld [vmem:[%s0 + $0x88] sm:$0xff]
    %v46 = vld [vmem:[%s0 + $0x90] sm:$0xff]
    %v47 = vld [vmem:[%s0 + $0x98] sm:$0xff]
    %v48 = vld [vmem:[%s0 + $0xa0] sm:$0xff]
    %v49 = vld [vmem:[%s0 + $0xa8] sm:$0xff]
    %v50 = vld [vmem:[%s0 + $0xb0] sm:$0xff]
    %v51 = vld [vmem:[%s0 + $0xb8] sm:$0xff]
    %v52 = vld [vmem:[%s0 + $0xc0] sm:$0xff]
    %v53 = vld [vmem:[%s0 + $0xc8] sm:$0xff]
    %v54 = vld [vmem:[%s0 + $0xd0] sm:$0xff]
    %v55 = vld [vmem:[%s0 + $0xd8] sm:$0xff]
    %v56 = vld [vmem:[%s0 + $0xe0] sm:$0xff]
    %v57 = vld [vmem:[%s0 + $0xe8] sm:$0xff]
    %v58 = vld [vmem:[%s0 + $0xf0] sm:$0xff]
    %v59 = vld [vmem:[%s0 + $0xf8] sm:$0xff]
    %vm60 = vcmask 23552
    %v61 = vsel %vm60, %v28, 0.0
    %v62 = vsel %vm60, %v29, 0.0
    %v63 = vsel %vm60, %v30, 0.0
    %v64 = vsel %vm60, %v31, 0.0
    %v65 = vsel %vm60, %v32, 0.0
    %v66 = vsel %vm60, %v33, 0.0
    %v67 = vsel %vm60, %v34, 0.0
    %v68 = vsel %vm60, %v35, 0.0
    %v69 = vsel %vm60, %v36, 0.0
    %v70 = vsel %vm60, %v37, 0.0
    %v71 = vsel %vm60, %v38, 0.0
    %v72 = vsel %vm60, %v39, 0.0
    %v73 = vsel %vm60, %v40, 0.0
    %v74 = vsel %vm60, %v41, 0.0
    %v75 = vsel %vm60, %v42, 0.0
    %v76 = vsel %vm60, %v43, 0.0
    %v77 = vsel %vm60, %v44, 0.0
    %v78 = vsel %vm60, %v45, 0.0
    %v79 = vsel %vm60, %v46, 0.0
    %v80 = vsel %vm60, %v47, 0.0
    %v81 = vsel %vm60, %v48, 0.0
    %v82 = vsel %vm60, %v49, 0.0
    %v83 = vsel %vm60, %v50, 0.0
    %v84 = vsel %vm60, %v51, 0.0
    %v85 = vsel %vm60, %v52, 0.0
    %v86 = vsel %vm60, %v53, 0.0
    %v87 = vsel %vm60, %v54, 0.0
    %v88 = vsel %vm60, %v55, 0.0
    %v89 = vsel %vm60, %v56, 0.0
    %v90 = vsel %vm60, %v57, 0.0
    %v91 = vsel %vm60, %v58, 0.0
    %v92 = vsel %vm60, %v59, 0.0
    %v93 = vld [vmem:[#allocation2] sm:$0xff]
    %v94 = vld [vmem:[%s2] sm:$0x1]
    %v95 = vlaneseq
    %v96 = vshrl.u32 %v95, 7
    %v97 = vsub.s32 0, %v96
    %v98 = vrot.slane %v94, %v97
    %vm99 = vcmask 64512
    %v101 = vsel %vm99, %v61, 0
    %v104 = vsel %vm99, %v62, 0
    %v107 = vsel %vm99, %v63, 0
    %v110 = vsel %vm99, %v64, 0
    %v113 = vsel %vm99, %v65, 0
    %v116 = vsel %vm99, %v66, 0
    %v119 = vsel %vm99, %v67, 0
    %v122 = vsel %vm99, %v68, 0
    %v125 = vsel %vm99, %v69, 0
    %v128 = vsel %vm99, %v70, 0
    %v131 = vsel %vm99, %v71, 0
    %v134 = vsel %vm99, %v72, 0
    %v137 = vsel %vm99, %v73, 0
    %v140 = vsel %vm99, %v74, 0
    %v143 = vsel %vm99, %v75, 0
    %v146 = vsel %vm99, %v76, 0
    %v149 = vsel %vm99, %v77, 0
    %v152 = vsel %vm99, %v78, 0
    %v155 = vsel %vm99, %v79, 0
    %v158 = vsel %vm99, %v80, 0
    %v161 = vsel %vm99, %v81, 0
    %v164 = vsel %vm99, %v82, 0
    %v167 = vsel %vm99, %v83, 0
    %v170 = vsel %vm99, %v84, 0
    %v173 = vsel %vm99, %v85, 0
    %v176 = vsel %vm99, %v86, 0
    %v179 = vsel %vm99, %v87, 0
    %v182 = vsel %vm99, %v88, 0
    %v185 = vsel %vm99, %v89, 0
    %v188 = vsel %vm99, %v90, 0
    %v191 = vsel %vm99, %v91, 0
    %v194 = vsel %vm99, %v92, 0
    %196 = vmatprep.subr.mxu0 0.0
    %197 = vmatpush1.msra.mxu0 0.0
    %198 = vmatprep.subr.mxu0 0.0
    %199 = vmatpush1.msra.mxu0 0.0
    %200 = vmatprep.subr.mxu0 0.0
    %201 = vmatpush1.msra.mxu0 0.0
    %202 = vmatprep.subr.mxu0 0.0
    %203 = vmatpush1.msra.mxu0 0.0
    %204 = vmatprep.subr.mxu0 0.0
    %205 = vmatpush1.msra.mxu0 0.0
    %206 = vmatprep.subr.mxu0 0.0
    %207 = vmatpush1.msra.mxu0 0.0
    %208 = vmatprep.subr.mxu0 0.0
    %209 = vmatpush1.msra.mxu0 0.0
    %210 = vmatprep.subr.mxu0 0.0
    %211 = vmatpush1.msra.mxu0 0.0
    %212 = vmatprep.subr.mxu0 0.0
    %213 = vmatpush1.msra.mxu0 0.0
    %214 = vmatprep.subr.mxu0 0.0
    %215 = vmatpush1.msra.mxu0 0.0
    %216 = vmatprep.subr.mxu0 0.0
    %217 = vmatpush1.msra.mxu0 0.0
    %218 = vmatprep.subr.mxu0 0.0
    %219 = vmatpush1.msra.mxu0 0.0
    %220 = vmatprep.subr.mxu0 0.0
    %221 = vmatpush1.msra.mxu0 0.0
    %222 = vmatprep.subr.mxu0 0.0
    %223 = vmatpush1.msra.mxu0 0.0
    %224 = vmatprep.subr.mxu0 0.0
    %225 = vmatpush1.msra.mxu0 0.0
    %226 = vmatprep.subr.mxu0 0.0
    %227 = vmatpush1.msra.mxu0 %v93
    %228 = vmatprep.subr.mxu0 0.0
    %229 = vmatpush2.msra.mxu0 0.0
    %230 = vmatprep.subr.mxu0 0.0
    %231 = vmatpush2.msra.mxu0 0.0
    %232 = vmatprep.subr.mxu0 0.0
    %233 = vmatpush2.msra.mxu0 0.0
    %234 = vmatprep.subr.mxu0 0.0
    %235 = vmatpush2.msra.mxu0 0.0
    %236 = vmatprep.subr.mxu0 0.0
    %237 = vmatpush2.msra.mxu0 0.0
    %238 = vmatprep.subr.mxu0 0.0
    %239 = vmatpush2.msra.mxu0 0.0
    %240 = vmatprep.subr.mxu0 0.0
    %241 = vmatpush2.msra.mxu0 0.0
    %242 = vmatprep.subr.mxu0 0.0
    %243 = vmatpush2.msra.mxu0 0.0
    %244 = vmatprep.subr.mxu0 0.0
    %245 = vmatpush2.msra.mxu0 0.0
    %246 = vmatprep.subr.mxu0 0.0
    %247 = vmatpush2.msra.mxu0 0.0
    %248 = vmatprep.subr.mxu0 0.0
    %249 = vmatpush2.msra.mxu0 0.0
    %250 = vmatprep.subr.mxu0 0.0
    %251 = vmatpush2.msra.mxu0 0.0
    %252 = vmatprep.subr.mxu0 0.0
    %253 = vmatpush2.msra.mxu0 0.0
    %254 = vmatprep.subr.mxu0 0.0
    %255 = vmatpush2.msra.mxu0 0.0
    %256 = vmatprep.subr.mxu0 0.0
    %257 = vmatpush2.msra.mxu0 0.0
    %258 = vmatprep.subr.mxu0 0.0
    %259 = vmatpush2.msra.mxu0 0.0
    %260 = vmatprep.mubr.f32.mxu0 0.0
    %261 = vmatmul.mubr.f32.gmra.mxu0 %v101
    %v262 = vpop.f32.mrf.mxu0
    %v263 = vadd.f32 %v98, %v262
    %v264 = vpop.f32.mrf.mxu0
    %265 = vmatprep.mubr.f32.mxu0 0.0
    %266 = vmatmul.mubr.f32.gmra.mxu0 %v104
    %v267 = vpop.f32.mrf.mxu0
    %v268 = vadd.f32 %v98, %v267
    %v269 = vpop.f32.mrf.mxu0
    %270 = vmatprep.mubr.f32.mxu0 0.0
    %271 = vmatmul.mubr.f32.gmra.mxu0 %v107
    %v272 = vpop.f32.mrf.mxu0
    %v273 = vadd.f32 %v98, %v272
    %v274 = vpop.f32.mrf.mxu0
    %275 = vmatprep.mubr.f32.mxu0 0.0
    %276 = vmatmul.mubr.f32.gmra.mxu0 %v110
    %v277 = vpop.f32.mrf.mxu0
    %v278 = vadd.f32 %v98, %v277
    %v279 = vpop.f32.mrf.mxu0
    %280 = vmatprep.mubr.f32.mxu0 0.0
    %281 = vmatmul.mubr.f32.gmra.mxu0 %v113
    %v282 = vpop.f32.mrf.mxu0
    %v283 = vadd.f32 %v98, %v282
    %v284 = vpop.f32.mrf.mxu0
    %285 = vmatprep.mubr.f32.mxu0 0.0
    %286 = vmatmul.mubr.f32.gmra.mxu0 %v116
    %v287 = vpop.f32.mrf.mxu0
    %v288 = vadd.f32 %v98, %v287
    %v289 = vpop.f32.mrf.mxu0
    %290 = vmatprep.mubr.f32.mxu0 0.0
    %291 = vmatmul.mubr.f32.gmra.mxu0 %v119
    %v292 = vpop.f32.mrf.mxu0
    %v293 = vadd.f32 %v98, %v292
    %v294 = vpop.f32.mrf.mxu0
    %295 = vmatprep.mubr.f32.mxu0 0.0
    %296 = vmatmul.mubr.f32.gmra.mxu0 %v122
    %v297 = vpop.f32.mrf.mxu0
    %v298 = vadd.f32 %v98, %v297
    %v299 = vpop.f32.mrf.mxu0
    %300 = vmatprep.mubr.f32.mxu0 0.0
    %301 = vmatmul.mubr.f32.gmra.mxu0 %v125
    %v302 = vpop.f32.mrf.mxu0
    %v303 = vadd.f32 %v98, %v302
    %v304 = vpop.f32.mrf.mxu0
    %305 = vmatprep.mubr.f32.mxu0 0.0
    %306 = vmatmul.mubr.f32.gmra.mxu0 %v128
    %v307 = vpop.f32.mrf.mxu0
    %v308 = vadd.f32 %v98, %v307
    %v309 = vpop.f32.mrf.mxu0
    %310 = vmatprep.mubr.f32.mxu0 0.0
    %311 = vmatmul.mubr.f32.gmra.mxu0 %v131
    %v312 = vpop.f32.mrf.mxu0
    %v313 = vadd.f32 %v98, %v312
    %v314 = vpop.f32.mrf.mxu0
    %315 = vmatprep.mubr.f32.mxu0 0.0
    %316 = vmatmul.mubr.f32.gmra.mxu0 %v134
    %v317 = vpop.f32.mrf.mxu0
    %v318 = vadd.f32 %v98, %v317
    %v319 = vpop.f32.mrf.mxu0
    %320 = vmatprep.mubr.f32.mxu0 0.0
    %321 = vmatmul.mubr.f32.gmra.mxu0 %v137
    %v322 = vpop.f32.mrf.mxu0
    %v323 = vadd.f32 %v98, %v322
    %v324 = vpop.f32.mrf.mxu0
    %325 = vmatprep.mubr.f32.mxu0 0.0
    %326 = vmatmul.mubr.f32.gmra.mxu0 %v140
    %v327 = vpop.f32.mrf.mxu0
    %v328 = vadd.f32 %v98, %v327
    %v329 = vpop.f32.mrf.mxu0
    %330 = vmatprep.mubr.f32.mxu0 0.0
    %331 = vmatmul.mubr.f32.gmra.mxu0 %v143
    %v332 = vpop.f32.mrf.mxu0
    %v333 = vadd.f32 %v98, %v332
    %v334 = vpop.f32.mrf.mxu0
    %335 = vmatprep.mubr.f32.mxu0 0.0
    %336 = vmatmul.mubr.f32.gmra.mxu0 %v146
    %v337 = vpop.f32.mrf.mxu0
    %v338 = vadd.f32 %v98, %v337
    %v339 = vpop.f32.mrf.mxu0
    %340 = vmatprep.mubr.f32.mxu0 0.0
    %341 = vmatmul.mubr.f32.gmra.mxu0 %v149
    %v342 = vpop.f32.mrf.mxu0
    %v343 = vadd.f32 %v98, %v342
    %v344 = vpop.f32.mrf.mxu0
    %345 = vmatprep.mubr.f32.mxu0 0.0
    %346 = vmatmul.mubr.f32.gmra.mxu0 %v152
    %v347 = vpop.f32.mrf.mxu0
    %v348 = vadd.f32 %v98, %v347
    %v349 = vpop.f32.mrf.mxu0
    %350 = vmatprep.mubr.f32.mxu0 0.0
    %351 = vmatmul.mubr.f32.gmra.mxu0 %v155
    %v352 = vpop.f32.mrf.mxu0
    %v353 = vadd.f32 %v98, %v352
    %v354 = vpop.f32.mrf.mxu0
    %355 = vmatprep.mubr.f32.mxu0 0.0
    %356 = vmatmul.mubr.f32.gmra.mxu0 %v158
    %v357 = vpop.f32.mrf.mxu0
    %v358 = vadd.f32 %v98, %v357
    %v359 = vpop.f32.mrf.mxu0
    %360 = vmatprep.mubr.f32.mxu0 0.0
    %361 = vmatmul.mubr.f32.gmra.mxu0 %v161
    %v362 = vpop.f32.mrf.mxu0
    %v363 = vadd.f32 %v98, %v362
    %v364 = vpop.f32.mrf.mxu0
    %365 = vmatprep.mubr.f32.mxu0 0.0
    %366 = vmatmul.mubr.f32.gmra.mxu0 %v164
    %v367 = vpop.f32.mrf.mxu0
    %v368 = vadd.f32 %v98, %v367
    %v369 = vpop.f32.mrf.mxu0
    %370 = vmatprep.mubr.f32.mxu0 0.0
    %371 = vmatmul.mubr.f32.gmra.mxu0 %v167
    %v372 = vpop.f32.mrf.mxu0
    %v373 = vadd.f32 %v98, %v372
    %v374 = vpop.f32.mrf.mxu0
    %375 = vmatprep.mubr.f32.mxu0 0.0
    %376 = vmatmul.mubr.f32.gmra.mxu0 %v170
    %v377 = vpop.f32.mrf.mxu0
    %v378 = vadd.f32 %v98, %v377
    %v379 = vpop.f32.mrf.mxu0
    %380 = vmatprep.mubr.f32.mxu0 0.0
    %381 = vmatmul.mubr.f32.gmra.mxu0 %v173
    %v382 = vpop.f32.mrf.mxu0
    %v383 = vadd.f32 %v98, %v382
    %v384 = vpop.f32.mrf.mxu0
    %385 = vmatprep.mubr.f32.mxu0 0.0
    %386 = vmatmul.mubr.f32.gmra.mxu0 %v176
    %v387 = vpop.f32.mrf.mxu0
    %v388 = vadd.f32 %v98, %v387
    %v389 = vpop.f32.mrf.mxu0
    %390 = vmatprep.mubr.f32.mxu0 0.0
    %391 = vmatmul.mubr.f32.gmra.mxu0 %v179
    %v392 = vpop.f32.mrf.mxu0
    %v393 = vadd.f32 %v98, %v392
    %v394 = vpop.f32.mrf.mxu0
    %395 = vmatprep.mubr.f32.mxu0 0.0
    %396 = vmatmul.mubr.f32.gmra.mxu0 %v182
    %v397 = vpop.f32.mrf.mxu0
    %v398 = vadd.f32 %v98, %v397
    %v399 = vpop.f32.mrf.mxu0
    %400 = vmatprep.mubr.f32.mxu0 0.0
    %401 = vmatmul.mubr.f32.gmra.mxu0 %v185
    %v402 = vpop.f32.mrf.mxu0
    %v403 = vadd.f32 %v98, %v402
    %v404 = vpop.f32.mrf.mxu0
    %405 = vmatprep.mubr.f32.mxu0 0.0
    %406 = vmatmul.mubr.f32.gmra.mxu0 %v188
    %v407 = vpop.f32.mrf.mxu0
    %v408 = vadd.f32 %v98, %v407
    %v409 = vpop.f32.mrf.mxu0
    %410 = vmatprep.mubr.f32.mxu0 0.0
    %411 = vmatmul.mubr.f32.gmra.mxu0 %v191
    %v412 = vpop.f32.mrf.mxu0
    %v413 = vadd.f32 %v98, %v412
    %v414 = vpop.f32.mrf.mxu0
    %415 = vmatprep.mubr.f32.mxu0 0.0
    %416 = vmatmul.mubr.f32.gmra.mxu0 %v194
    %v417 = vpop.f32.mrf.mxu0
    %v418 = vadd.f32 %v98, %v417
    %v419 = vpop.f32.mrf.mxu0
    %420 = vdwg.mxu0
    %v421 = vmax.f32 %v263, 0.0
    %v422 = vmax.f32 %v268, 0.0
    %v423 = vmax.f32 %v273, 0.0
    %v424 = vmax.f32 %v278, 0.0
    %v425 = vmax.f32 %v283, 0.0
    %v426 = vmax.f32 %v288, 0.0
    %v427 = vmax.f32 %v293, 0.0
    %v428 = vmax.f32 %v298, 0.0
    %v429 = vmax.f32 %v303, 0.0
    %v430 = vmax.f32 %v308, 0.0
    %v431 = vmax.f32 %v313, 0.0
    %v432 = vmax.f32 %v318, 0.0
    %v433 = vmax.f32 %v323, 0.0
    %v434 = vmax.f32 %v328, 0.0
    %v435 = vmax.f32 %v333, 0.0
    %v436 = vmax.f32 %v338, 0.0
    %v437 = vmax.f32 %v343, 0.0
    %v438 = vmax.f32 %v348, 0.0
    %v439 = vmax.f32 %v353, 0.0
    %v440 = vmax.f32 %v358, 0.0
    %v441 = vmax.f32 %v363, 0.0
    %v442 = vmax.f32 %v368, 0.0
    %v443 = vmax.f32 %v373, 0.0
    %v444 = vmax.f32 %v378, 0.0
    %v445 = vmax.f32 %v383, 0.0
    %v446 = vmax.f32 %v388, 0.0
    %v447 = vmax.f32 %v393, 0.0
    %v448 = vmax.f32 %v398, 0.0
    %v449 = vmax.f32 %v403, 0.0
    %v450 = vmax.f32 %v408, 0.0
    %v451 = vmax.f32 %v413, 0.0
    %v452 = vmax.f32 %v418, 0.0
    %v453 = vld [vmem:[#allocation2 + $0x8] sm:$0xff]
    %v454 = vld [vmem:[#allocation2 + $0x10] sm:$0xff]
    %v455 = vld [vmem:[#allocation2 + $0x18] sm:$0xff]
    %v456 = vld [vmem:[#allocation2 + $0x20] sm:$0xff]
    %v457 = vld [vmem:[#allocation2 + $0x28] sm:$0xff]
    %v458 = vld [vmem:[#allocation2 + $0x30] sm:$0xff]
    %v459 = vld [vmem:[#allocation2 + $0x38] sm:$0xff]
    %v460 = vld [vmem:[#allocation2 + $0x40] sm:$0xff]
    %v461 = vld [vmem:[%s2 + $0x1] sm:$0x1]
    %v462 = vlaneseq
    %v463 = vshrl.u32 %v462, 7
    %v464 = vsub.s32 0, %v463
    %v465 = vrot.slane %v461, %v464
    %vm466 = vcmask 523264
    %v468 = vsel %vm466, %v421, 0
    %v471 = vsel %vm466, %v422, 0
    %v474 = vsel %vm466, %v423, 0
    %v477 = vsel %vm466, %v424, 0
    %v480 = vsel %vm466, %v425, 0
    %v483 = vsel %vm466, %v426, 0
    %v486 = vsel %vm466, %v427, 0
    %v489 = vsel %vm466, %v428, 0
    %v492 = vsel %vm466, %v429, 0
    %v495 = vsel %vm466, %v430, 0
    %v498 = vsel %vm466, %v431, 0
    %v501 = vsel %vm466, %v432, 0
    %v504 = vsel %vm466, %v433, 0
    %v507 = vsel %vm466, %v434, 0
    %v510 = vsel %vm466, %v435, 0
    %v513 = vsel %vm466, %v436, 0
    %v516 = vsel %vm466, %v437, 0
    %v519 = vsel %vm466, %v438, 0
    %v522 = vsel %vm466, %v439, 0
    %v525 = vsel %vm466, %v440, 0
    %v528 = vsel %vm466, %v441, 0
    %v531 = vsel %vm466, %v442, 0
    %v534 = vsel %vm466, %v443, 0
    %v537 = vsel %vm466, %v444, 0
    %v540 = vsel %vm466, %v445, 0
    %v543 = vsel %vm466, %v446, 0
    %v546 = vsel %vm466, %v447, 0
    %v549 = vsel %vm466, %v448, 0
    %v552 = vsel %vm466, %v449, 0
    %v555 = vsel %vm466, %v450, 0
    %v558 = vsel %vm466, %v451, 0
    %v561 = vsel %vm466, %v452, 0
    %563 = vmatprep.subr.mxu0 0.0
    %564 = vmatpush1.msra.mxu0 0.0
    %565 = vmatprep.subr.mxu0 0.0
    %566 = vmatpush1.msra.mxu0 0.0
    %567 = vmatprep.subr.mxu0 0.0
    %568 = vmatpush1.msra.mxu0 0.0
    %569 = vmatprep.subr.mxu0 0.0
    %570 = vmatpush1.msra.mxu0 0.0
    %571 = vmatprep.subr.mxu0 0.0
    %572 = vmatpush1.msra.mxu0 0.0
    %573 = vmatprep.subr.mxu0 0.0
    %574 = vmatpush1.msra.mxu0 0.0
    %575 = vmatprep.subr.mxu0 0.0
    %576 = vmatpush1.msra.mxu0 0.0
    %577 = vmatprep.subr.mxu0 0.0
    %578 = vmatpush1.msra.mxu0 0.0
    %579 = vmatprep.subr.mxu0 0.0
    %580 = vmatpush1.msra.mxu0 %v460
    %581 = vmatprep.subr.mxu0 0.0
    %582 = vmatpush1.msra.mxu0 %v459
    %583 = vmatprep.subr.mxu0 0.0
    %584 = vmatpush1.msra.mxu0 %v458
    %585 = vmatprep.subr.mxu0 0.0
    %586 = vmatpush1.msra.mxu0 %v457
    %587 = vmatprep.subr.mxu0 0.0
    %588 = vmatpush1.msra.mxu0 %v456
    %589 = vmatprep.subr.mxu0 0.0
    %590 = vmatpush1.msra.mxu0 %v455
    %591 = vmatprep.subr.mxu0 0.0
    %592 = vmatpush1.msra.mxu0 %v454
    %593 = vmatprep.subr.mxu0 0.0
    %594 = vmatpush1.msra.mxu0 %v453
    %595 = vmatprep.subr.mxu0 0.0
    %596 = vmatpush2.msra.mxu0 0.0
    %597 = vmatprep.subr.mxu0 0.0
    %598 = vmatpush2.msra.mxu0 0.0
    %599 = vmatprep.subr.mxu0 0.0
    %600 = vmatpush2.msra.mxu0 0.0
    %601 = vmatprep.subr.mxu0 0.0
    %602 = vmatpush2.msra.mxu0 0.0
    %603 = vmatprep.subr.mxu0 0.0
    %604 = vmatpush2.msra.mxu0 0.0
    %605 = vmatprep.subr.mxu0 0.0
    %606 = vmatpush2.msra.mxu0 0.0
    %607 = vmatprep.subr.mxu0 0.0
    %608 = vmatpush2.msra.mxu0 0.0
    %609 = vmatprep.subr.mxu0 0.0
    %610 = vmatpush2.msra.mxu0 0.0
    %611 = vmatprep.subr.mxu0 0.0
    %612 = vmatpush2.msra.mxu0 0.0
    %613 = vmatprep.subr.mxu0 0.0
    %614 = vmatpush2.msra.mxu0 0.0
    %615 = vmatprep.subr.mxu0 0.0
    %616 = vmatpush2.msra.mxu0 0.0
    %617 = vmatprep.subr.mxu0 0.0
    %618 = vmatpush2.msra.mxu0 0.0
    %619 = vmatprep.subr.mxu0 0.0
    %620 = vmatpush2.msra.mxu0 0.0
    %621 = vmatprep.subr.mxu0 0.0
    %622 = vmatpush2.msra.mxu0 0.0
    %623 = vmatprep.subr.mxu0 0.0
    %624 = vmatpush2.msra.mxu0 0.0
    %625 = vmatprep.subr.mxu0 0.0
    %626 = vmatpush2.msra.mxu0 0.0
    %627 = vmatprep.mubr.f32.mxu0 0.0
    %628 = vmatmul.mubr.f32.gmra.mxu0 %v468
    %v629 = vpop.f32.mrf.mxu0
    %v630 = vadd.f32 %v465, %v629
    %v631 = vpop.f32.mrf.mxu0
    %632 = vmatprep.mubr.f32.mxu0 0.0
    %633 = vmatmul.mubr.f32.gmra.mxu0 %v471
    %v634 = vpop.f32.mrf.mxu0
    %v635 = vadd.f32 %v465, %v634
    %v636 = vpop.f32.mrf.mxu0
    %637 = vmatprep.mubr.f32.mxu0 0.0
    %638 = vmatmul.mubr.f32.gmra.mxu0 %v474
    %v639 = vpop.f32.mrf.mxu0
    %v640 = vadd.f32 %v465, %v639
    %v641 = vpop.f32.mrf.mxu0
    %642 = vmatprep.mubr.f32.mxu0 0.0
    %643 = vmatmul.mubr.f32.gmra.mxu0 %v477
    %v644 = vpop.f32.mrf.mxu0
    %v645 = vadd.f32 %v465, %v644
    %v646 = vpop.f32.mrf.mxu0
    %647 = vmatprep.mubr.f32.mxu0 0.0
    %648 = vmatmul.mubr.f32.gmra.mxu0 %v480
    %v649 = vpop.f32.mrf.mxu0
    %v650 = vadd.f32 %v465, %v649
    %v651 = vpop.f32.mrf.mxu0
    %652 = vmatprep.mubr.f32.mxu0 0.0
    %653 = vmatmul.mubr.f32.gmra.mxu0 %v483
    %v654 = vpop.f32.mrf.mxu0
    %v655 = vadd.f32 %v465, %v654
    %v656 = vpop.f32.mrf.mxu0
    %657 = vmatprep.mubr.f32.mxu0 0.0
    %658 = vmatmul.mubr.f32.gmra.mxu0 %v486
    %v659 = vpop.f32.mrf.mxu0
    %v660 = vadd.f32 %v465, %v659
    %v661 = vpop.f32.mrf.mxu0
    %662 = vmatprep.mubr.f32.mxu0 0.0
    %663 = vmatmul.mubr.f32.gmra.mxu0 %v489
    %v664 = vpop.f32.mrf.mxu0
    %v665 = vadd.f32 %v465, %v664
    %v666 = vpop.f32.mrf.mxu0
    %667 = vmatprep.mubr.f32.mxu0 0.0
    %668 = vmatmul.mubr.f32.gmra.mxu0 %v492
    %v669 = vpop.f32.mrf.mxu0
    %v670 = vadd.f32 %v465, %v669
    %v671 = vpop.f32.mrf.mxu0
    %672 = vmatprep.mubr.f32.mxu0 0.0
    %673 = vmatmul.mubr.f32.gmra.mxu0 %v495
    %v674 = vpop.f32.mrf.mxu0
    %v675 = vadd.f32 %v465, %v674
    %v676 = vpop.f32.mrf.mxu0
    %677 = vmatprep.mubr.f32.mxu0 0.0
    %678 = vmatmul.mubr.f32.gmra.mxu0 %v498
    %v679 = vpop.f32.mrf.mxu0
    %v680 = vadd.f32 %v465, %v679
    %v681 = vpop.f32.mrf.mxu0
    %682 = vmatprep.mubr.f32.mxu0 0.0
    %683 = vmatmul.mubr.f32.gmra.mxu0 %v501
    %v684 = vpop.f32.mrf.mxu0
    %v685 = vadd.f32 %v465, %v684
    %v686 = vpop.f32.mrf.mxu0
    %687 = vmatprep.mubr.f32.mxu0 0.0
    %688 = vmatmul.mubr.f32.gmra.mxu0 %v504
    %v689 = vpop.f32.mrf.mxu0
    %v690 = vadd.f32 %v465, %v689
    %v691 = vpop.f32.mrf.mxu0
    %692 = vmatprep.mubr.f32.mxu0 0.0
    %693 = vmatmul.mubr.f32.gmra.mxu0 %v507
    %v694 = vpop.f32.mrf.mxu0
    %v695 = vadd.f32 %v465, %v694
    %v696 = vpop.f32.mrf.mxu0
    %697 = vmatprep.mubr.f32.mxu0 0.0
    %698 = vmatmul.mubr.f32.gmra.mxu0 %v510
    %v699 = vpop.f32.mrf.mxu0
    %v700 = vadd.f32 %v465, %v699
    %v701 = vpop.f32.mrf.mxu0
    %702 = vmatprep.mubr.f32.mxu0 0.0
    %703 = vmatmul.mubr.f32.gmra.mxu0 %v513
    %v704 = vpop.f32.mrf.mxu0
    %v705 = vadd.f32 %v465, %v704
    %v706 = vpop.f32.mrf.mxu0
    %707 = vmatprep.mubr.f32.mxu0 0.0
    %708 = vmatmul.mubr.f32.gmra.mxu0 %v516
    %v709 = vpop.f32.mrf.mxu0
    %v710 = vadd.f32 %v465, %v709
    %v711 = vpop.f32.mrf.mxu0
    %712 = vmatprep.mubr.f32.mxu0 0.0
    %713 = vmatmul.mubr.f32.gmra.mxu0 %v519
    %v714 = vpop.f32.mrf.mxu0
    %v715 = vadd.f32 %v465, %v714
    %v716 = vpop.f32.mrf.mxu0
    %717 = vmatprep.mubr.f32.mxu0 0.0
    %718 = vmatmul.mubr.f32.gmra.mxu0 %v522
    %v719 = vpop.f32.mrf.mxu0
    %v720 = vadd.f32 %v465, %v719
    %v721 = vpop.f32.mrf.mxu0
    %722 = vmatprep.mubr.f32.mxu0 0.0
    %723 = vmatmul.mubr.f32.gmra.mxu0 %v525
    %v724 = vpop.f32.mrf.mxu0
    %v725 = vadd.f32 %v465, %v724
    %v726 = vpop.f32.mrf.mxu0
    %727 = vmatprep.mubr.f32.mxu0 0.0
    %728 = vmatmul.mubr.f32.gmra.mxu0 %v528
    %v729 = vpop.f32.mrf.mxu0
    %v730 = vadd.f32 %v465, %v729
    %v731 = vpop.f32.mrf.mxu0
    %732 = vmatprep.mubr.f32.mxu0 0.0
    %733 = vmatmul.mubr.f32.gmra.mxu0 %v531
    %v734 = vpop.f32.mrf.mxu0
    %v735 = vadd.f32 %v465, %v734
    %v736 = vpop.f32.mrf.mxu0
    %737 = vmatprep.mubr.f32.mxu0 0.0
    %738 = vmatmul.mubr.f32.gmra.mxu0 %v534
    %v739 = vpop.f32.mrf.mxu0
    %v740 = vadd.f32 %v465, %v739
    %v741 = vpop.f32.mrf.mxu0
    %742 = vmatprep.mubr.f32.mxu0 0.0
    %743 = vmatmul.mubr.f32.gmra.mxu0 %v537
    %v744 = vpop.f32.mrf.mxu0
    %v745 = vadd.f32 %v465, %v744
    %v746 = vpop.f32.mrf.mxu0
    %747 = vmatprep.mubr.f32.mxu0 0.0
    %748 = vmatmul.mubr.f32.gmra.mxu0 %v540
    %v749 = vpop.f32.mrf.mxu0
    %v750 = vadd.f32 %v465, %v749
    %v751 = vpop.f32.mrf.mxu0
    %752 = vmatprep.mubr.f32.mxu0 0.0
    %753 = vmatmul.mubr.f32.gmra.mxu0 %v543
    %v754 = vpop.f32.mrf.mxu0
    %v755 = vadd.f32 %v465, %v754
    %v756 = vpop.f32.mrf.mxu0
    %757 = vmatprep.mubr.f32.mxu0 0.0
    %758 = vmatmul.mubr.f32.gmra.mxu0 %v546
    %v759 = vpop.f32.mrf.mxu0
    %v760 = vadd.f32 %v465, %v759
    %v761 = vpop.f32.mrf.mxu0
    %762 = vmatprep.mubr.f32.mxu0 0.0
    %763 = vmatmul.mubr.f32.gmra.mxu0 %v549
    %v764 = vpop.f32.mrf.mxu0
    %v765 = vadd.f32 %v465, %v764
    %v766 = vpop.f32.mrf.mxu0
    %767 = vmatprep.mubr.f32.mxu0 0.0
    %768 = vmatmul.mubr.f32.gmra.mxu0 %v552
    %v769 = vpop.f32.mrf.mxu0
    %v770 = vadd.f32 %v465, %v769
    %v771 = vpop.f32.mrf.mxu0
    %772 = vmatprep.mubr.f32.mxu0 0.0
    %773 = vmatmul.mubr.f32.gmra.mxu0 %v555
    %v774 = vpop.f32.mrf.mxu0
    %v775 = vadd.f32 %v465, %v774
    %v776 = vpop.f32.mrf.mxu0
    %777 = vmatprep.mubr.f32.mxu0 0.0
    %778 = vmatmul.mubr.f32.gmra.mxu0 %v558
    %v779 = vpop.f32.mrf.mxu0
    %v780 = vadd.f32 %v465, %v779
    %v781 = vpop.f32.mrf.mxu0
    %782 = vmatprep.mubr.f32.mxu0 0.0
    %783 = vmatmul.mubr.f32.gmra.mxu0 %v561
    %v784 = vpop.f32.mrf.mxu0
    %v785 = vadd.f32 %v465, %v784
    %v786 = vpop.f32.mrf.mxu0
    %787 = vdwg.mxu0
    %vm788 = vcmask 261120
    %v789 = vsel %vm788, %v630, -inf
    %v790 = vsel %vm788, %v635, -inf
    %v791 = vsel %vm788, %v640, -inf
    %v792 = vsel %vm788, %v645, -inf
    %v793 = vsel %vm788, %v650, -inf
    %v794 = vmax.f32 %v789, %v793
    %v795 = vsel %vm788, %v655, -inf
    %v796 = vmax.f32 %v790, %v795
    %v797 = vsel %vm788, %v660, -inf
    %v798 = vmax.f32 %v791, %v797
    %v799 = vsel %vm788, %v665, -inf
    %v800 = vmax.f32 %v792, %v799
    %v801 = vsel %vm788, %v670, -inf
    %v802 = vmax.f32 %v794, %v801
    %v803 = vsel %vm788, %v675, -inf
    %v804 = vmax.f32 %v796, %v803
    %v805 = vsel %vm788, %v680, -inf
    %v806 = vmax.f32 %v798, %v805
    %v807 = vsel %vm788, %v685, -inf
    %v808 = vmax.f32 %v800, %v807
    %v809 = vsel %vm788, %v690, -inf
    %v810 = vmax.f32 %v802, %v809
    %v811 = vsel %vm788, %v695, -inf
    %v812 = vmax.f32 %v804, %v811
    %v813 = vsel %vm788, %v700, -inf
    %v814 = vmax.f32 %v806, %v813
    %v815 = vsel %vm788, %v705, -inf
    %v816 = vmax.f32 %v808, %v815
    %v817 = vmax.f32 %v810, %v812
    %v818 = vmax.f32 %v814, %v816
    %v819 = vmax.f32 %v817, %v818
    %v820 = vrot.slane %v819, 4
    %v821 = vmax.f32 %v819, %v820
    %v822 = vrot.slane %v821, 2
    %v823 = vmax.f32 %v821, %v822
    %v824 = vrot.slane %v823, 1
    %v825 = vmax.f32 %v823, %v824
    %v826 = vsel %vm788, %v630, 0.0
    %v827 = vsel %vm788, %v635, 0.0
    %v828 = vadd.f32 %v826, %v827
    %v829 = vsel %vm788, %v640, 0.0
    %v830 = vadd.f32 %v828, %v829
    %v831 = vsel %vm788, %v645, 0.0
    %v832 = vadd.f32 %v830, %v831
    %v833 = vsel %vm788, %v650, 0.0
    %v834 = vadd.f32 %v832, %v833
    %v835 = vsel %vm788, %v655, 0.0
    %v836 = vadd.f32 %v834, %v835
    %v837 = vsel %vm788, %v660, 0.0
    %v838 = vadd.f32 %v836, %v837
    %v839 = vsel %vm788, %v665, 0.0
    %v840 = vadd.f32 %v838, %v839
    %v841 = vsel %vm788, %v670, 0.0
    %v842 = vadd.f32 %v840, %v841
    %v843 = vsel %vm788, %v675, 0.0
    %v844 = vadd.f32 %v842, %v843
    %v845 = vsel %vm788, %v680, 0.0
    %v846 = vadd.f32 %v844, %v845
    %v847 = vsel %vm788, %v685, 0.0
    %v848 = vadd.f32 %v846, %v847
    %v849 = vsel %vm788, %v690, 0.0
    %v850 = vadd.f32 %v848, %v849
    %v851 = vsel %vm788, %v695, 0.0
    %v852 = vadd.f32 %v850, %v851
    %v853 = vsel %vm788, %v700, 0.0
    %v854 = vadd.f32 %v852, %v853
    %v855 = vsel %vm788, %v705, 0.0
    %v856 = vadd.f32 %v854, %v855
    %v857 = vrot.slane %v856, 4
    %v858 = vadd.f32 %v856, %v857
    %v859 = vrot.slane %v858, 2
    %v860 = vadd.f32 %v858, %v859
    %v861 = vrot.slane %v860, 1
    %v862 = vadd.f32 %v860, %v861
    %v863 = vrcp.pop 128.0
    %v864 = vmul.f32 %v862, %v863
    %v865 = vsel %vm788, %v710, -inf
    %v866 = vsel %vm788, %v715, -inf
    %v867 = vsel %vm788, %v720, -inf
    %v868 = vsel %vm788, %v725, -inf
    %v869 = vsel %vm788, %v730, -inf
    %v870 = vmax.f32 %v865, %v869
    %v871 = vsel %vm788, %v735, -inf
    %v872 = vmax.f32 %v866, %v871
    %v873 = vsel %vm788, %v740, -inf
    %v874 = vmax.f32 %v867, %v873
    %v875 = vsel %vm788, %v745, -inf
    %v876 = vmax.f32 %v868, %v875
    %v877 = vsel %vm788, %v750, -inf
    %v878 = vmax.f32 %v870, %v877
    %v879 = vsel %vm788, %v755, -inf
    %v880 = vmax.f32 %v872, %v879
    %v881 = vsel %vm788, %v760, -inf
    %v882 = vmax.f32 %v874, %v881
    %v883 = vsel %vm788, %v765, -inf
    %v884 = vmax.f32 %v876, %v883
    %v885 = vsel %vm788, %v770, -inf
    %v886 = vmax.f32 %v878, %v885
    %v887 = vsel %vm788, %v775, -inf
    %v888 = vmax.f32 %v880, %v887
    %v889 = vsel %vm788, %v780, -inf
    %v890 = vmax.f32 %v882, %v889
    %v891 = vsel %vm788, %v785, -inf
    %v892 = vmax.f32 %v884, %v891
    %v893 = vmax.f32 %v886, %v888
    %v894 = vmax.f32 %v890, %v892
    %v895 = vmax.f32 %v893, %v894
    %v896 = vrot.slane %v895, 4
    %v897 = vmax.f32 %v895, %v896
    %v898 = vrot.slane %v897, 2
    %v899 = vmax.f32 %v897, %v898
    %v900 = vrot.slane %v899, 1
    %v901 = vmax.f32 %v899, %v900
    %v902 = vsel %vm788, %v710, 0.0
    %v903 = vsel %vm788, %v715, 0.0
    %v904 = vadd.f32 %v902, %v903
    %v905 = vsel %vm788, %v720, 0.0
    %v906 = vadd.f32 %v904, %v905
    %v907 = vsel %vm788, %v725, 0.0
    %v908 = vadd.f32 %v906, %v907
    %v909 = vsel %vm788, %v730, 0.0
    %v910 = vadd.f32 %v908, %v909
    %v911 = vsel %vm788, %v735, 0.0
    %v912 = vadd.f32 %v910, %v911
    %v913 = vsel %vm788, %v740, 0.0
    %v914 = vadd.f32 %v912, %v913
    %v915 = vsel %vm788, %v745, 0.0
    %v916 = vadd.f32 %v914, %v915
    %v917 = vsel %vm788, %v750, 0.0
    %v918 = vadd.f32 %v916, %v917
    %v919 = vsel %vm788, %v755, 0.0
    %v920 = vadd.f32 %v918, %v919
    %v921 = vsel %vm788, %v760, 0.0
    %v922 = vadd.f32 %v920, %v921
    %v923 = vsel %vm788, %v765, 0.0
    %v924 = vadd.f32 %v922, %v923
    %v925 = vsel %vm788, %v770, 0.0
    %v926 = vadd.f32 %v924, %v925
    %v927 = vsel %vm788, %v775, 0.0
    %v928 = vadd.f32 %v926, %v927
    %v929 = vsel %vm788, %v780, 0.0
    %v930 = vadd.f32 %v928, %v929
    %v931 = vsel %vm788, %v785, 0.0
    %v932 = vadd.f32 %v930, %v931
    %v933 = vrot.slane %v932, 4
    %v934 = vadd.f32 %v932, %v933
    %v935 = vrot.slane %v934, 2
    %v936 = vadd.f32 %v934, %v935
    %v937 = vrot.slane %v936, 1
    %v938 = vadd.f32 %v936, %v937
    %v939 = vmul.f32 %v938, %v863
    %vm940 = vcmask 1040384
    %v941 = vsel %vm940, %v825, %v901
    %v942 = vsel %vm940, %v864, %v939
    %v943 = vld [vmem:[#allocation2 + $0x48] sm:$0xff]
    %v944 = vld [vmem:[#allocation2 + $0x50] sm:$0xff]
    %v945 = vld [vmem:[#allocation2 + $0x58] sm:$0xff]
    %v946 = vld [vmem:[#allocation2 + $0x60] sm:$0xff]
    %v947 = vld [vmem:[#allocation2 + $0x68] sm:$0xff]
    %v948 = vld [vmem:[#allocation2 + $0x70] sm:$0xff]
    %v949 = vld [vmem:[#allocation2 + $0x78] sm:$0xff]
    %v950 = vld [vmem:[#allocation2 + $0x80] sm:$0xff]
    %v952 = vsel %vm788, %v942, 0
    %954 = vmatprep.subr.mxu0 0.0
    %955 = vmatpush1.msra.mxu0 0.0
    %956 = vmatprep.subr.mxu0 0.0
    %957 = vmatpush1.msra.mxu0 0.0
    %958 = vmatprep.subr.mxu0 0.0
    %959 = vmatpush1.msra.mxu0 0.0
    %960 = vmatprep.subr.mxu0 0.0
    %961 = vmatpush1.msra.mxu0 0.0
    %962 = vmatprep.subr.mxu0 0.0
    %963 = vmatpush1.msra.mxu0 0.0
    %964 = vmatprep.subr.mxu0 0.0
    %965 = vmatpush1.msra.mxu0 0.0
    %966 = vmatprep.subr.mxu0 0.0
    %967 = vmatpush1.msra.mxu0 0.0
    %968 = vmatprep.subr.mxu0 0.0
    %969 = vmatpush1.msra.mxu0 0.0
    %970 = vmatprep.subr.mxu0 0.0
    %971 = vmatpush1.msra.mxu0 0.0
    %972 = vmatprep.subr.mxu0 0.0
    %973 = vmatpush1.msra.mxu0 0.0
    %974 = vmatprep.subr.mxu0 0.0
    %975 = vmatpush1.msra.mxu0 0.0
    %976 = vmatprep.subr.mxu0 0.0
    %977 = vmatpush1.msra.mxu0 0.0
    %978 = vmatprep.subr.mxu0 0.0
    %979 = vmatpush1.msra.mxu0 %v950
    %980 = vmatprep.subr.mxu0 0.0
    %981 = vmatpush1.msra.mxu0 %v949
    %982 = vmatprep.subr.mxu0 0.0
    %983 = vmatpush1.msra.mxu0 %v948
    %984 = vmatprep.subr.mxu0 0.0
    %985 = vmatpush1.msra.mxu0 %v947
    %986 = vmatprep.subr.mxu0 0.0
    %987 = vmatpush2.msra.mxu0 0.0
    %988 = vmatprep.subr.mxu0 0.0
    %989 = vmatpush2.msra.mxu0 0.0
    %990 = vmatprep.subr.mxu0 0.0
    %991 = vmatpush2.msra.mxu0 0.0
    %992 = vmatprep.subr.mxu0 0.0
    %993 = vmatpush2.msra.mxu0 0.0
    %994 = vmatprep.subr.mxu0 0.0
    %995 = vmatpush2.msra.mxu0 0.0
    %996 = vmatprep.subr.mxu0 0.0
    %997 = vmatpush2.msra.mxu0 0.0
    %998 = vmatprep.subr.mxu0 0.0
    %999 = vmatpush2.msra.mxu0 0.0
    %1000 = vmatprep.subr.mxu0 0.0
    %1001 = vmatpush2.msra.mxu0 0.0
    %1002 = vmatprep.subr.mxu0 0.0
    %1003 = vmatpush2.msra.mxu0 0.0
    %1004 = vmatprep.subr.mxu0 0.0
    %1005 = vmatpush2.msra.mxu0 0.0
    %1006 = vmatprep.subr.mxu0 0.0
    %1007 = vmatpush2.msra.mxu0 0.0
    %1008 = vmatprep.subr.mxu0 0.0
    %1009 = vmatpush2.msra.mxu0 0.0
    %1010 = vmatprep.subr.mxu0 0.0
    %1011 = vmatpush2.msra.mxu0 0.0
    %1012 = vmatprep.subr.mxu0 0.0
    %1013 = vmatpush2.msra.mxu0 0.0
    %1014 = vmatprep.subr.mxu0 0.0
    %1015 = vmatpush2.msra.mxu0 0.0
    %1016 = vmatprep.subr.mxu0 0.0
    %1017 = vmatpush2.msra.mxu0 0.0
    %1018 = vmatprep.mubr.f32.mxu0 0.0
    %1019 = vmatmul.mubr.f32.gmra.mxu0 %v952
    %v1020 = vpop.f32.mrf.mxu0
    %v1021 = vadd.f32 0.0, %v1020
    %v1022 = vpop.f32.mrf.mxu0
    %1023 = vdwg.mxu0
    %v1025 = vsel %vm788, %v941, 0
    %1027 = vmatprep.subr.mxu0 0.0
    %1028 = vmatpush1.msra.mxu0 0.0
    %1029 = vmatprep.subr.mxu0 0.0
    %1030 = vmatpush1.msra.mxu0 0.0
    %1031 = vmatprep.subr.mxu0 0.0
    %1032 = vmatpush1.msra.mxu0 0.0
    %1033 = vmatprep.subr.mxu0 0.0
    %1034 = vmatpush1.msra.mxu0 0.0
    %1035 = vmatprep.subr.mxu0 0.0
    %1036 = vmatpush1.msra.mxu0 0.0
    %1037 = vmatprep.subr.mxu0 0.0
    %1038 = vmatpush1.msra.mxu0 0.0
    %1039 = vmatprep.subr.mxu0 0.0
    %1040 = vmatpush1.msra.mxu0 0.0
    %1041 = vmatprep.subr.mxu0 0.0
    %1042 = vmatpush1.msra.mxu0 0.0
    %1043 = vmatprep.subr.mxu0 0.0
    %1044 = vmatpush1.msra.mxu0 0.0
    %1045 = vmatprep.subr.mxu0 0.0
    %1046 = vmatpush1.msra.mxu0 0.0
    %1047 = vmatprep.subr.mxu0 0.0
    %1048 = vmatpush1.msra.mxu0 0.0
    %1049 = vmatprep.subr.mxu0 0.0
    %1050 = vmatpush1.msra.mxu0 0.0
    %1051 = vmatprep.subr.mxu0 0.0
    %1052 = vmatpush1.msra.mxu0 %v946
    %1053 = vmatprep.subr.mxu0 0.0
    %1054 = vmatpush1.msra.mxu0 %v945
    %1055 = vmatprep.subr.mxu0 0.0
    %1056 = vmatpush1.msra.mxu0 %v944
    %1057 = vmatprep.subr.mxu0 0.0
    %1058 = vmatpush1.msra.mxu0 %v943
    %1059 = vmatprep.subr.mxu0 0.0
    %1060 = vmatpush2.msra.mxu0 0.0
    %1061 = vmatprep.subr.mxu0 0.0
    %1062 = vmatpush2.msra.mxu0 0.0
    %1063 = vmatprep.subr.mxu0 0.0
    %1064 = vmatpush2.msra.mxu0 0.0
    %1065 = vmatprep.subr.mxu0 0.0
    %1066 = vmatpush2.msra.mxu0 0.0
    %1067 = vmatprep.subr.mxu0 0.0
    %1068 = vmatpush2.msra.mxu0 0.0
    %1069 = vmatprep.subr.mxu0 0.0
    %1070 = vmatpush2.msra.mxu0 0.0
    %1071 = vmatprep.subr.mxu0 0.0
    %1072 = vmatpush2.msra.mxu0 0.0
    %1073 = vmatprep.subr.mxu0 0.0
    %1074 = vmatpush2.msra.mxu0 0.0
    %1075 = vmatprep.subr.mxu0 0.0
    %1076 = vmatpush2.msra.mxu0 0.0
    %1077 = vmatprep.subr.mxu0 0.0
    %1078 = vmatpush2.msra.mxu0 0.0
    %1079 = vmatprep.subr.mxu0 0.0
    %1080 = vmatpush2.msra.mxu0 0.0
    %1081 = vmatprep.subr.mxu0 0.0
    %1082 = vmatpush2.msra.mxu0 0.0
    %1083 = vmatprep.subr.mxu0 0.0
    %1084 = vmatpush2.msra.mxu0 0.0
    %1085 = vmatprep.subr.mxu0 0.0
    %1086 = vmatpush2.msra.mxu0 0.0
    %1087 = vmatprep.subr.mxu0 0.0
    %1088 = vmatpush2.msra.mxu0 0.0
    %1089 = vmatprep.subr.mxu0 0.0
    %1090 = vmatpush2.msra.mxu0 0.0
    %1091 = vmatprep.mubr.f32.mxu0 0.0
    %1092 = vmatmul.mubr.f32.gmra.mxu0 %v1025
    %v1093 = vpop.f32.mrf.mxu0
    %v1094 = vadd.f32 %v1021, %v1093
    %v1095 = vpop.f32.mrf.mxu0
    %1096 = vdwg.mxu0
    %v1097 = vld [vmem:[%s2 + $0x2] sm:$0x1]
    %v1098 = vlaneseq
    %v1099 = vshrl.u32 %v1098, 7
    %v1100 = vsub.s32 0, %v1099
    %v1101 = vrot.slane %v1097, %v1100
    %v1102 = vadd.f32 %v1094, %v1101
    %v1103 = vmax.f32 %v1102, 0.0
    %v1104 = vld [vmem:[#allocation2 + $0x88] sm:$0xff]
    %v1105 = vld [vmem:[#allocation2 + $0x90] sm:$0xff]
    %v1106 = vld [vmem:[#allocation2 + $0x98] sm:$0xff]
    %v1107 = vld [vmem:[#allocation2 + $0xa0] sm:$0xff]
    %v1108 = vld [vmem:[#allocation2 + $0xa8] sm:$0xff]
    %v1109 = vld [vmem:[#allocation2 + $0xb0] sm:$0xff]
    %v1110 = vld [vmem:[#allocation2 + $0xb8] sm:$0xff]
    %v1111 = vld [vmem:[#allocation2 + $0xc0] sm:$0xff]
    %v1112 = vld [vmem:[#allocation2 + $0xc8] sm:$0xff]
    %v1113 = vld [vmem:[#allocation2 + $0xd0] sm:$0xff]
    %v1114 = vld [vmem:[#allocation2 + $0xd8] sm:$0xff]
    %v1115 = vld [vmem:[#allocation2 + $0xe0] sm:$0xff]
    %v1116 = vld [vmem:[#allocation2 + $0xe8] sm:$0xff]
    %v1117 = vld [vmem:[#allocation2 + $0xf0] sm:$0xff]
    %v1118 = vld [vmem:[#allocation2 + $0xf8] sm:$0xff]
    %v1119 = vld [vmem:[#allocation2 + $0x100] sm:$0xff]
    %v1120 = vld [vmem:[%s2 + $0x3] sm:$0x1]
    %v1121 = vlaneseq
    %v1122 = vshrl.u32 %v1121, 7
    %v1123 = vsub.s32 0, %v1122
    %v1124 = vrot.slane %v1120, %v1123
    %1125 = vmatprep.subr.mxu0 0.0
    %1126 = vmatpush1.msra.mxu0 %v1119
    %1127 = vmatprep.subr.mxu0 0.0
    %1128 = vmatpush1.msra.mxu0 %v1118
    %1129 = vmatprep.subr.mxu0 0.0
    %1130 = vmatpush1.msra.mxu0 %v1117
    %1131 = vmatprep.subr.mxu0 0.0
    %1132 = vmatpush1.msra.mxu0 %v1116
    %1133 = vmatprep.subr.mxu0 0.0
    %1134 = vmatpush1.msra.mxu0 %v1115
    %1135 = vmatprep.subr.mxu0 0.0
    %1136 = vmatpush1.msra.mxu0 %v1114
    %1137 = vmatprep.subr.mxu0 0.0
    %1138 = vmatpush1.msra.mxu0 %v1113
    %1139 = vmatprep.subr.mxu0 0.0
    %1140 = vmatpush1.msra.mxu0 %v1112
    %1141 = vmatprep.subr.mxu0 0.0
    %1142 = vmatpush1.msra.mxu0 %v1111
    %1143 = vmatprep.subr.mxu0 0.0
    %1144 = vmatpush1.msra.mxu0 %v1110
    %1145 = vmatprep.subr.mxu0 0.0
    %1146 = vmatpush1.msra.mxu0 %v1109
    %1147 = vmatprep.subr.mxu0 0.0
    %1148 = vmatpush1.msra.mxu0 %v1108
    %1149 = vmatprep.subr.mxu0 0.0
    %1150 = vmatpush1.msra.mxu0 %v1107
    %1151 = vmatprep.subr.mxu0 0.0
    %1152 = vmatpush1.msra.mxu0 %v1106
    %1153 = vmatprep.subr.mxu0 0.0
    %1154 = vmatpush1.msra.mxu0 %v1105
    %1155 = vmatprep.subr.mxu0 0.0
    %1156 = vmatpush1.msra.mxu0 %v1104
    %1157 = vmatprep.subr.mxu0 0.0
    %1158 = vmatpush2.msra.mxu0 0.0
    %1159 = vmatprep.subr.mxu0 0.0
    %1160 = vmatpush2.msra.mxu0 0.0
    %1161 = vmatprep.subr.mxu0 0.0
    %1162 = vmatpush2.msra.mxu0 0.0
    %1163 = vmatprep.subr.mxu0 0.0
    %1164 = vmatpush2.msra.mxu0 0.0
    %1165 = vmatprep.subr.mxu0 0.0
    %1166 = vmatpush2.msra.mxu0 0.0
    %1167 = vmatprep.subr.mxu0 0.0
    %1168 = vmatpush2.msra.mxu0 0.0
    %1169 = vmatprep.subr.mxu0 0.0
    %1170 = vmatpush2.msra.mxu0 0.0
    %1171 = vmatprep.subr.mxu0 0.0
    %1172 = vmatpush2.msra.mxu0 0.0
    %1173 = vmatprep.subr.mxu0 0.0
    %1174 = vmatpush2.msra.mxu0 0.0
    %1175 = vmatprep.subr.mxu0 0.0
    %1176 = vmatpush2.msra.mxu0 0.0
    %1177 = vmatprep.subr.mxu0 0.0
    %1178 = vmatpush2.msra.mxu0 0.0
    %1179 = vmatprep.subr.mxu0 0.0
    %1180 = vmatpush2.msra.mxu0 0.0
    %1181 = vmatprep.subr.mxu0 0.0
    %1182 = vmatpush2.msra.mxu0 0.0
    %1183 = vmatprep.subr.mxu0 0.0
    %1184 = vmatpush2.msra.mxu0 0.0
    %1185 = vmatprep.subr.mxu0 0.0
    %1186 = vmatpush2.msra.mxu0 0.0
    %1187 = vmatprep.subr.mxu0 0.0
    %1188 = vmatpush2.msra.mxu0 0.0
    %1189 = vmatprep.mubr.f32.mxu0 0.0
    %1190 = vmatmul.mubr.f32.gmra.mxu0 %v1103
    %v1191 = vpop.f32.mrf.mxu0
    %v1192 = vadd.f32 %v1124, %v1191
    %v1193 = vpop.f32.mrf.mxu0
    %1194 = vdwg.mxu0
    %v1195 = vmax.f32 %v1192, 0.0
    %v1196 = vld [vmem:[#allocation2 + $0x108] sm:$0xff]
    %v1197 = vld [vmem:[#allocation2 + $0x110] sm:$0xff]
    %v1198 = vld [vmem:[#allocation2 + $0x118] sm:$0xff]
    %v1199 = vld [vmem:[#allocation2 + $0x120] sm:$0xff]
    %v1200 = vld [vmem:[#allocation2 + $0x128] sm:$0xff]
    %v1201 = vld [vmem:[#allocation2 + $0x130] sm:$0xff]
    %v1202 = vld [vmem:[#allocation2 + $0x138] sm:$0xff]
    %v1203 = vld [vmem:[#allocation2 + $0x140] sm:$0xff]
    %v1204 = vld [vmem:[%s2 + $0x4] sm:$0x1]
    %v1205 = vlaneseq
    %v1206 = vshrl.u32 %v1205, 7
    %v1207 = vsub.s32 0, %v1206
    %v1208 = vrot.slane %v1204, %v1207
    %v1210 = vsel %vm466, %v1195, 0
    %1212 = vmatprep.subr.mxu0 0.0
    %1213 = vmatpush1.msra.mxu0 0.0
    %1214 = vmatprep.subr.mxu0 0.0
    %1215 = vmatpush1.msra.mxu0 0.0
    %1216 = vmatprep.subr.mxu0 0.0
    %1217 = vmatpush1.msra.mxu0 0.0
    %1218 = vmatprep.subr.mxu0 0.0
    %1219 = vmatpush1.msra.mxu0 0.0
    %1220 = vmatprep.subr.mxu0 0.0
    %1221 = vmatpush1.msra.mxu0 0.0
    %1222 = vmatprep.subr.mxu0 0.0
    %1223 = vmatpush1.msra.mxu0 0.0
    %1224 = vmatprep.subr.mxu0 0.0
    %1225 = vmatpush1.msra.mxu0 0.0
    %1226 = vmatprep.subr.mxu0 0.0
    %1227 = vmatpush1.msra.mxu0 0.0
    %1228 = vmatprep.subr.mxu0 0.0
    %1229 = vmatpush1.msra.mxu0 %v1203
    %1230 = vmatprep.subr.mxu0 0.0
    %1231 = vmatpush1.msra.mxu0 %v1202
    %1232 = vmatprep.subr.mxu0 0.0
    %1233 = vmatpush1.msra.mxu0 %v1201
    %1234 = vmatprep.subr.mxu0 0.0
    %1235 = vmatpush1.msra.mxu0 %v1200
    %1236 = vmatprep.subr.mxu0 0.0
    %1237 = vmatpush1.msra.mxu0 %v1199
    %1238 = vmatprep.subr.mxu0 0.0
    %1239 = vmatpush1.msra.mxu0 %v1198
    %1240 = vmatprep.subr.mxu0 0.0
    %1241 = vmatpush1.msra.mxu0 %v1197
    %1242 = vmatprep.subr.mxu0 0.0
    %1243 = vmatpush1.msra.mxu0 %v1196
    %1244 = vmatprep.subr.mxu0 0.0
    %1245 = vmatpush2.msra.mxu0 0.0
    %1246 = vmatprep.subr.mxu0 0.0
    %1247 = vmatpush2.msra.mxu0 0.0
    %1248 = vmatprep.subr.mxu0 0.0
    %1249 = vmatpush2.msra.mxu0 0.0
    %1250 = vmatprep.subr.mxu0 0.0
    %1251 = vmatpush2.msra.mxu0 0.0
    %1252 = vmatprep.subr.mxu0 0.0
    %1253 = vmatpush2.msra.mxu0 0.0
    %1254 = vmatprep.subr.mxu0 0.0
    %1255 = vmatpush2.msra.mxu0 0.0
    %1256 = vmatprep.subr.mxu0 0.0
    %1257 = vmatpush2.msra.mxu0 0.0
    %1258 = vmatprep.subr.mxu0 0.0
    %1259 = vmatpush2.msra.mxu0 0.0
    %1260 = vmatprep.subr.mxu0 0.0
    %1261 = vmatpush2.msra.mxu0 0.0
    %1262 = vmatprep.subr.mxu0 0.0
    %1263 = vmatpush2.msra.mxu0 0.0
    %1264 = vmatprep.subr.mxu0 0.0
    %1265 = vmatpush2.msra.mxu0 0.0
    %1266 = vmatprep.subr.mxu0 0.0
    %1267 = vmatpush2.msra.mxu0 0.0
    %1268 = vmatprep.subr.mxu0 0.0
    %1269 = vmatpush2.msra.mxu0 0.0
    %1270 = vmatprep.subr.mxu0 0.0
    %1271 = vmatpush2.msra.mxu0 0.0
    %1272 = vmatprep.subr.mxu0 0.0
    %1273 = vmatpush2.msra.mxu0 0.0
    %1274 = vmatprep.subr.mxu0 0.0
    %1275 = vmatpush2.msra.mxu0 0.0
    %1276 = vmatprep.mubr.f32.mxu0 0.0
    %1277 = vmatmul.mubr.f32.gmra.mxu0 %v1210
    %v1278 = vpop.f32.mrf.mxu0
    %v1279 = vadd.f32 %v1208, %v1278
    %v1280 = vpop.f32.mrf.mxu0
    %1281 = vdwg.mxu0
    %v1282 = vadd.f32 %v1279, %v1279
    %v1283 = vmul.f32 %v1282, 0.5
    %v1284 = vadd.f32 %v1283, 1e-06
    %1286 = vrot.lane.b32.xlu0 %v1279, 120
    %v1287 = vpop.permute.xlu0 %1286
    %v1289 = vadd.f32 %v1279, %v1287
    %v1290 = vmul.f32 %v1289, 0.5
    %1291 = vrot.lane.b32.xlu0 %v1279, 112
    %v1292 = vpop.permute.xlu0 %1291
    %v1294 = vadd.f32 %v1279, %v1292
    %v1295 = vmul.f32 %v1294, 0.5
    %v1296 = vmul.f32 %v1284, 0.0078125
    %v1297 = vmul.f32 %v1290, 0.0078125
    %v1298 = vmul.f32 %v1295, 0.0078125
    %v1299 = vadd.f32 %v1296, 0.0
    %v1300 = vmul.f32 %v1297, 0.0
    %1302 = vrot.lane.b32.xlu0 %v1300, 124
    %v1303 = vpop.permute.xlu0 %1302
    %v1305 = vadd.f32 %v1299, %v1303
    %v1306 = vmul.f32 %v1298, 0.0
    %1308 = vrot.lane.b32.xlu0 %v1306, 120
    %v1309 = vpop.permute.xlu0 %1308
    %v1311 = vadd.f32 %v1305, %v1309
    %v1312 = vmul.f32 %v1296, 0.0
    %v1313 = vadd.f32 %v1312, 0.0
    %1315 = vrot.lane.b32.xlu0 %v1297, 124
    %v1316 = vpop.permute.xlu0 %1315
    %v1318 = vadd.f32 %v1313, %v1316
    %v1319 = vadd.f32 %v1318, %v1309
    %v1320 = vadd.f32 %v1313, %v1303
    %1322 = vrot.lane.b32.xlu0 %v1298, 120
    %v1323 = vpop.permute.xlu0 %1322
    %v1325 = vadd.f32 %v1320, %v1323
    %v1326 = vadd.f32 %v1297, 0.0
    %1328 = vrot.lane.b32.xlu0 %v1312, 116
    %v1329 = vpop.permute.xlu0 %1328
    %v1331 = vadd.f32 %v1326, %v1329
    %1332 = vrot.lane.b32.xlu0 %v1300, 112
    %v1333 = vpop.permute.xlu0 %1332
    %v1335 = vadd.f32 %v1331, %v1333
    %v1336 = vadd.f32 %v1300, 0.0
    %1338 = vrot.lane.b32.xlu0 %v1296, 116
    %v1339 = vpop.permute.xlu0 %1338
    %v1341 = vadd.f32 %v1336, %v1339
    %v1342 = vadd.f32 %v1341, %v1333
    %v1343 = vadd.f32 %v1336, %v1329
    %1344 = vrot.lane.b32.xlu0 %v1297, 112
    %v1345 = vpop.permute.xlu0 %1344
    %v1347 = vadd.f32 %v1343, %v1345
    %v1348 = vadd.f32 %v1298, 0.0
    %1349 = vrot.lane.b32.xlu0 %v1300, 116
    %v1350 = vpop.permute.xlu0 %1349
    %v1352 = vadd.f32 %v1348, %v1350
    %1353 = vrot.lane.b32.xlu0 %v1312, 104
    %v1354 = vpop.permute.xlu0 %1353
    %v1356 = vadd.f32 %v1352, %v1354
    %v1357 = vadd.f32 %v1306, 0.0
    %1358 = vrot.lane.b32.xlu0 %v1297, 116
    %v1359 = vpop.permute.xlu0 %1358
    %v1361 = vadd.f32 %v1357, %v1359
    %v1362 = vadd.f32 %v1361, %v1354
    %v1363 = vadd.f32 %v1357, %v1350
    %1364 = vrot.lane.b32.xlu0 %v1296, 104
    %v1365 = vpop.permute.xlu0 %1364
    %v1367 = vadd.f32 %v1363, %v1365
    %v1368 = vmul.f32 %v1311, 0.125
    %v1369 = vadd.f32 %v1368, 1.0
    %v1370 = vmul.f32 %v1319, 0.125
    %v1371 = vadd.f32 %v1370, 0.0
    %v1372 = vmul.f32 %v1325, 0.125
    %v1373 = vadd.f32 %v1372, 0.0
    %v1374 = vmul.f32 %v1335, 0.125
    %v1375 = vadd.f32 %v1374, 0.0
    %v1376 = vmul.f32 %v1342, 0.125
    %v1377 = vadd.f32 %v1376, 1.0
    %v1378 = vmul.f32 %v1347, 0.125
    %v1379 = vadd.f32 %v1378, 0.0
    %v1380 = vmul.f32 %v1356, 0.125
    %v1381 = vadd.f32 %v1380, 0.0
    %v1382 = vmul.f32 %v1362, 0.125
    %v1383 = vadd.f32 %v1382, 0.0
    %v1384 = vmul.f32 %v1367, 0.125
    %v1385 = vadd.f32 %v1384, 1.0
    %v1386 = vmul.f32 %v1296, %v1369
    %v1387 = vadd.f32 %v1386, 0.0
    %v1388 = vmul.f32 %v1297, %v1375
    %1390 = vrot.lane.b32.xlu0 %v1388, 124
    %v1391 = vpop.permute.xlu0 %1390
    %v1393 = vadd.f32 %v1387, %v1391
    %v1394 = vmul.f32 %v1298, %v1381
    %1396 = vrot.lane.b32.xlu0 %v1394, 120
    %v1397 = vpop.permute.xlu0 %1396
    %v1399 = vadd.f32 %v1393, %v1397
    %v1400 = vmul.f32 %v1296, %v1371
    %v1401 = vadd.f32 %v1400, 0.0
    %v1402 = vmul.f32 %v1297, %v1377
    %1404 = vrot.lane.b32.xlu0 %v1402, 124
    %v1405 = vpop.permute.xlu0 %1404
    %v1407 = vadd.f32 %v1401, %v1405
    %v1408 = vmul.f32 %v1298, %v1383
    %1410 = vrot.lane.b32.xlu0 %v1408, 120
    %v1411 = vpop.permute.xlu0 %1410
    %v1413 = vadd.f32 %v1407, %v1411
    %v1414 = vmul.f32 %v1296, %v1373
    %v1415 = vadd.f32 %v1414, 0.0
    %v1416 = vmul.f32 %v1297, %v1379
    %1418 = vrot.lane.b32.xlu0 %v1416, 124
    %v1419 = vpop.permute.xlu0 %1418
    %v1421 = vadd.f32 %v1415, %v1419
    %v1422 = vmul.f32 %v1298, %v1385
    %1424 = vrot.lane.b32.xlu0 %v1422, 120
    %v1425 = vpop.permute.xlu0 %1424
    %v1427 = vadd.f32 %v1421, %v1425
    %1429 = vrot.lane.b32.xlu0 %v1369, 4
    %v1430 = vpop.permute.xlu0 %1429
    %v1432 = vmul.f32 %v1297, %v1430
    %v1433 = vadd.f32 %v1432, 0.0
    %1435 = vrot.lane.b32.xlu0 %v1375, 12
    %v1436 = vpop.permute.xlu0 %1435
    %v1438 = vmul.f32 %v1296, %v1436
    %1440 = vrot.lane.b32.xlu0 %v1438, 116
    %v1441 = vpop.permute.xlu0 %1440
    %v1443 = vadd.f32 %v1433, %v1441
    %1445 = vrot.lane.b32.xlu0 %v1381, 12
    %v1446 = vpop.permute.xlu0 %1445
    %v1448 = vmul.f32 %v1297, %v1446
    %1450 = vrot.lane.b32.xlu0 %v1448, 112
    %v1451 = vpop.permute.xlu0 %1450
    %v1453 = vadd.f32 %v1443, %v1451
    %1455 = vrot.lane.b32.xlu0 %v1371, 4
    %v1456 = vpop.permute.xlu0 %1455
    %v1458 = vmul.f32 %v1297, %v1456
    %v1459 = vadd.f32 %v1458, 0.0
    %1461 = vrot.lane.b32.xlu0 %v1377, 12
    %v1462 = vpop.permute.xlu0 %1461
    %v1464 = vmul.f32 %v1296, %v1462
    %1466 = vrot.lane.b32.xlu0 %v1464, 116
    %v1467 = vpop.permute.xlu0 %1466
    %v1469 = vadd.f32 %v1459, %v1467
    %1471 = vrot.lane.b32.xlu0 %v1383, 12
    %v1472 = vpop.permute.xlu0 %1471
    %v1474 = vmul.f32 %v1297, %v1472
    %1476 = vrot.lane.b32.xlu0 %v1474, 112
    %v1477 = vpop.permute.xlu0 %1476
    %v1479 = vadd.f32 %v1469, %v1477
    %1481 = vrot.lane.b32.xlu0 %v1373, 4
    %v1482 = vpop.permute.xlu0 %1481
    %v1484 = vmul.f32 %v1297, %v1482
    %v1485 = vadd.f32 %v1484, 0.0
    %1487 = vrot.lane.b32.xlu0 %v1379, 12
    %v1488 = vpop.permute.xlu0 %1487
    %v1490 = vmul.f32 %v1296, %v1488
    %1492 = vrot.lane.b32.xlu0 %v1490, 116
    %v1493 = vpop.permute.xlu0 %1492
    %v1495 = vadd.f32 %v1485, %v1493
    %1497 = vrot.lane.b32.xlu0 %v1385, 12
    %v1498 = vpop.permute.xlu0 %1497
    %v1500 = vmul.f32 %v1297, %v1498
    %1502 = vrot.lane.b32.xlu0 %v1500, 112
    %v1503 = vpop.permute.xlu0 %1502
    %v1505 = vadd.f32 %v1495, %v1503
    %1506 = vrot.lane.b32.xlu0 %v1369, 8
    %v1507 = vpop.permute.xlu0 %1506
    %v1509 = vmul.f32 %v1298, %v1507
    %v1510 = vadd.f32 %v1509, 0.0
    %1511 = vrot.lane.b32.xlu0 %v1375, 16
    %v1512 = vpop.permute.xlu0 %1511
    %v1514 = vmul.f32 %v1297, %v1512
    %1516 = vrot.lane.b32.xlu0 %v1514, 116
    %v1517 = vpop.permute.xlu0 %1516
    %v1519 = vadd.f32 %v1510, %v1517
    %1520 = vrot.lane.b32.xlu0 %v1381, 24
    %v1521 = vpop.permute.xlu0 %1520
    %v1523 = vmul.f32 %v1296, %v1521
    %1525 = vrot.lane.b32.xlu0 %v1523, 104
    %v1526 = vpop.permute.xlu0 %1525
    %v1528 = vadd.f32 %v1519, %v1526
    %1529 = vrot.lane.b32.xlu0 %v1371, 8
    %v1530 = vpop.permute.xlu0 %1529
    %v1532 = vmul.f32 %v1298, %v1530
    %v1533 = vadd.f32 %v1532, 0.0
    %1534 = vrot.lane.b32.xlu0 %v1377, 16
    %v1535 = vpop.permute.xlu0 %1534
    %v1537 = vmul.f32 %v1297, %v1535
    %1539 = vrot.lane.b32.xlu0 %v1537, 116
    %v1540 = vpop.permute.xlu0 %1539
    %v1542 = vadd.f32 %v1533, %v1540
    %1543 = vrot.lane.b32.xlu0 %v1383, 24
    %v1544 = vpop.permute.xlu0 %1543
    %v1546 = vmul.f32 %v1296, %v1544
    %1548 = vrot.lane.b32.xlu0 %v1546, 104
    %v1549 = vpop.permute.xlu0 %1548
    %v1551 = vadd.f32 %v1542, %v1549
    %1552 = vrot.lane.b32.xlu0 %v1373, 8
    %v1553 = vpop.permute.xlu0 %1552
    %v1555 = vmul.f32 %v1298, %v1553
    %v1556 = vadd.f32 %v1555, 0.0
    %1557 = vrot.lane.b32.xlu0 %v1379, 16
    %v1558 = vpop.permute.xlu0 %1557
    %v1560 = vmul.f32 %v1297, %v1558
    %1562 = vrot.lane.b32.xlu0 %v1560, 116
    %v1563 = vpop.permute.xlu0 %1562
    %v1565 = vadd.f32 %v1556, %v1563
    %1566 = vrot.lane.b32.xlu0 %v1385, 24
    %v1567 = vpop.permute.xlu0 %1566
    %v1569 = vmul.f32 %v1296, %v1567
    %1571 = vrot.lane.b32.xlu0 %v1569, 104
    %v1572 = vpop.permute.xlu0 %1571
    %v1574 = vadd.f32 %v1565, %v1572
    %v1575 = vmul.f32 %v1399, 0.14285715
    %v1576 = vadd.f32 %v1575, 1.0
    %v1577 = vmul.f32 %v1413, 0.14285715
    %v1578 = vadd.f32 %v1577, 0.0
    %v1579 = vmul.f32 %v1427, 0.14285715
    %v1580 = vadd.f32 %v1579, 0.0
    %v1581 = vmul.f32 %v1453, 0.14285715
    %v1582 = vadd.f32 %v1581, 0.0
    %v1583 = vmul.f32 %v1479, 0.14285715
    %v1584 = vadd.f32 %v1583, 1.0
    %v1585 = vmul.f32 %v1505, 0.14285715
    %v1586 = vadd.f32 %v1585, 0.0
    %v1587 = vmul.f32 %v1528, 0.14285715
    %v1588 = vadd.f32 %v1587, 0.0
    %v1589 = vmul.f32 %v1551, 0.14285715
    %v1590 = vadd.f32 %v1589, 0.0
    %v1591 = vmul.f32 %v1574, 0.14285715
    %v1592 = vadd.f32 %v1591, 1.0
    %v1593 = vmul.f32 %v1296, %v1576
    %v1594 = vadd.f32 %v1593, 0.0
    %v1595 = vmul.f32 %v1297, %v1582
    %1597 = vrot.lane.b32.xlu0 %v1595, 124
    %v1598 = vpop.permute.xlu0 %1597
    %v1600 = vadd.f32 %v1594, %v1598
    %v1601 = vmul.f32 %v1298, %v1588
    %1603 = vrot.lane.b32.xlu0 %v1601, 120
    %v1604 = vpop.permute.xlu0 %1603
    %v1606 = vadd.f32 %v1600, %v1604
    %v1607 = vmul.f32 %v1296, %v1578
    %v1608 = vadd.f32 %v1607, 0.0
    %v1609 = vmul.f32 %v1297, %v1584
    %1611 = vrot.lane.b32.xlu0 %v1609, 124
    %v1612 = vpop.permute.xlu0 %1611
    %v1614 = vadd.f32 %v1608, %v1612
    %v1615 = vmul.f32 %v1298, %v1590
    %1617 = vrot.lane.b32.xlu0 %v1615, 120
    %v1618 = vpop.permute.xlu0 %1617
    %v1620 = vadd.f32 %v1614, %v1618
    %v1621 = vmul.f32 %v1296, %v1580
    %v1622 = vadd.f32 %v1621, 0.0
    %v1623 = vmul.f32 %v1297, %v1586
    %1625 = vrot.lane.b32.xlu0 %v1623, 124
    %v1626 = vpop.permute.xlu0 %1625
    %v1628 = vadd.f32 %v1622, %v1626
    %v1629 = vmul.f32 %v1298, %v1592
    %1631 = vrot.lane.b32.xlu0 %v1629, 120
    %v1632 = vpop.permute.xlu0 %1631
    %v1634 = vadd.f32 %v1628, %v1632
    %1636 = vrot.lane.b32.xlu0 %v1576, 4
    %v1637 = vpop.permute.xlu0 %1636
    %v1639 = vmul.f32 %v1297, %v1637
    %v1640 = vadd.f32 %v1639, 0.0
    %1642 = vrot.lane.b32.xlu0 %v1582, 12
    %v1643 = vpop.permute.xlu0 %1642
    %v1645 = vmul.f32 %v1296, %v1643
    %1647 = vrot.lane.b32.xlu0 %v1645, 116
    %v1648 = vpop.permute.xlu0 %1647
    %v1650 = vadd.f32 %v1640, %v1648
    %1652 = vrot.lane.b32.xlu0 %v1588, 12
    %v1653 = vpop.permute.xlu0 %1652
    %v1655 = vmul.f32 %v1297, %v1653
    %1657 = vrot.lane.b32.xlu0 %v1655, 112
    %v1658 = vpop.permute.xlu0 %1657
    %v1660 = vadd.f32 %v1650, %v1658
    %1662 = vrot.lane.b32.xlu0 %v1578, 4
    %v1663 = vpop.permute.xlu0 %1662
    %v1665 = vmul.f32 %v1297, %v1663
    %v1666 = vadd.f32 %v1665, 0.0
    %1668 = vrot.lane.b32.xlu0 %v1584, 12
    %v1669 = vpop.permute.xlu0 %1668
    %v1671 = vmul.f32 %v1296, %v1669
    %1673 = vrot.lane.b32.xlu0 %v1671, 116
    %v1674 = vpop.permute.xlu0 %1673
    %v1676 = vadd.f32 %v1666, %v1674
    %1678 = vrot.lane.b32.xlu0 %v1590, 12
    %v1679 = vpop.permute.xlu0 %1678
    %v1681 = vmul.f32 %v1297, %v1679
    %1683 = vrot.lane.b32.xlu0 %v1681, 112
    %v1684 = vpop.permute.xlu0 %1683
    %v1686 = vadd.f32 %v1676, %v1684
    %1688 = vrot.lane.b32.xlu0 %v1580, 4
    %v1689 = vpop.permute.xlu0 %1688
    %v1691 = vmul.f32 %v1297, %v1689
    %v1692 = vadd.f32 %v1691, 0.0
    %1694 = vrot.lane.b32.xlu0 %v1586, 12
    %v1695 = vpop.permute.xlu0 %1694
    %v1697 = vmul.f32 %v1296, %v1695
    %1699 = vrot.lane.b32.xlu0 %v1697, 116
    %v1700 = vpop.permute.xlu0 %1699
    %v1702 = vadd.f32 %v1692, %v1700
    %1704 = vrot.lane.b32.xlu0 %v1592, 12
    %v1705 = vpop.permute.xlu0 %1704
    %v1707 = vmul.f32 %v1297, %v1705
    %1709 = vrot.lane.b32.xlu0 %v1707, 112
    %v1710 = vpop.permute.xlu0 %1709
    %v1712 = vadd.f32 %v1702, %v1710
    %1713 = vrot.lane.b32.xlu0 %v1576, 8
    %v1714 = vpop.permute.xlu0 %1713
    %v1716 = vmul.f32 %v1298, %v1714
    %v1717 = vadd.f32 %v1716, 0.0
    %1718 = vrot.lane.b32.xlu0 %v1582, 16
    %v1719 = vpop.permute.xlu0 %1718
    %v1721 = vmul.f32 %v1297, %v1719
    %1723 = vrot.lane.b32.xlu0 %v1721, 116
    %v1724 = vpop.permute.xlu0 %1723
    %v1726 = vadd.f32 %v1717, %v1724
    %1727 = vrot.lane.b32.xlu0 %v1588, 24
    %v1728 = vpop.permute.xlu0 %1727
    %v1730 = vmul.f32 %v1296, %v1728
    %1732 = vrot.lane.b32.xlu0 %v1730, 104
    %v1733 = vpop.permute.xlu0 %1732
    %v1735 = vadd.f32 %v1726, %v1733
    %1736 = vrot.lane.b32.xlu0 %v1578, 8
    %v1737 = vpop.permute.xlu0 %1736
    %v1739 = vmul.f32 %v1298, %v1737
    %v1740 = vadd.f32 %v1739, 0.0
    %1741 = vrot.lane.b32.xlu0 %v1584, 16
    %v1742 = vpop.permute.xlu0 %1741
    %v1744 = vmul.f32 %v1297, %v1742
    %1746 = vrot.lane.b32.xlu0 %v1744, 116
    %v1747 = vpop.permute.xlu0 %1746
    %v1749 = vadd.f32 %v1740, %v1747
    %1750 = vrot.lane.b32.xlu0 %v1590, 24
    %v1751 = vpop.permute.xlu0 %1750
    %v1753 = vmul.f32 %v1296, %v1751
    %1755 = vrot.lane.b32.xlu0 %v1753, 104
    %v1756 = vpop.permute.xlu0 %1755
    %v1758 = vadd.f32 %v1749, %v1756
    %1759 = vrot.lane.b32.xlu0 %v1580, 8
    %v1760 = vpop.permute.xlu0 %1759
    %v1762 = vmul.f32 %v1298, %v1760
    %v1763 = vadd.f32 %v1762, 0.0
    %1764 = vrot.lane.b32.xlu0 %v1586, 16
    %v1765 = vpop.permute.xlu0 %1764
    %v1767 = vmul.f32 %v1297, %v1765
    %1769 = vrot.lane.b32.xlu0 %v1767, 116
    %v1770 = vpop.permute.xlu0 %1769
    %v1772 = vadd.f32 %v1763, %v1770
    %1773 = vrot.lane.b32.xlu0 %v1592, 24
    %v1774 = vpop.permute.xlu0 %1773
    %v1776 = vmul.f32 %v1296, %v1774
    %1778 = vrot.lane.b32.xlu0 %v1776, 104
    %v1779 = vpop.permute.xlu0 %1778
    %v1781 = vadd.f32 %v1772, %v1779
    %v1782 = vmul.f32 %v1606, 0.16666667
    %v1783 = vadd.f32 %v1782, 1.0
    %v1784 = vmul.f32 %v1620, 0.16666667
    %v1785 = vadd.f32 %v1784, 0.0
    %v1786 = vmul.f32 %v1634, 0.16666667
    %v1787 = vadd.f32 %v1786, 0.0
    %v1788 = vmul.f32 %v1660, 0.16666667
    %v1789 = vadd.f32 %v1788, 0.0
    %v1790 = vmul.f32 %v1686, 0.16666667
    %v1791 = vadd.f32 %v1790, 1.0
    %v1792 = vmul.f32 %v1712, 0.16666667
    %v1793 = vadd.f32 %v1792, 0.0
    %v1794 = vmul.f32 %v1735, 0.16666667
    %v1795 = vadd.f32 %v1794, 0.0
    %v1796 = vmul.f32 %v1758, 0.16666667
    %v1797 = vadd.f32 %v1796, 0.0
    %v1798 = vmul.f32 %v1781, 0.16666667
    %v1799 = vadd.f32 %v1798, 1.0
    %v1800 = vmul.f32 %v1296, %v1783
    %v1801 = vadd.f32 %v1800, 0.0
    %v1802 = vmul.f32 %v1297, %v1789
    %1804 = vrot.lane.b32.xlu0 %v1802, 124
    %v1805 = vpop.permute.xlu0 %1804
    %v1807 = vadd.f32 %v1801, %v1805
    %v1808 = vmul.f32 %v1298, %v1795
    %1810 = vrot.lane.b32.xlu0 %v1808, 120
    %v1811 = vpop.permute.xlu0 %1810
    %v1813 = vadd.f32 %v1807, %v1811
    %v1814 = vmul.f32 %v1296, %v1785
    %v1815 = vadd.f32 %v1814, 0.0
    %v1816 = vmul.f32 %v1297, %v1791
    %1818 = vrot.lane.b32.xlu0 %v1816, 124
    %v1819 = vpop.permute.xlu0 %1818
    %v1821 = vadd.f32 %v1815, %v1819
    %v1822 = vmul.f32 %v1298, %v1797
    %1824 = vrot.lane.b32.xlu0 %v1822, 120
    %v1825 = vpop.permute.xlu0 %1824
    %v1827 = vadd.f32 %v1821, %v1825
    %v1828 = vmul.f32 %v1296, %v1787
    %v1829 = vadd.f32 %v1828, 0.0
    %v1830 = vmul.f32 %v1297, %v1793
    %1832 = vrot.lane.b32.xlu0 %v1830, 124
    %v1833 = vpop.permute.xlu0 %1832
    %v1835 = vadd.f32 %v1829, %v1833
    %v1836 = vmul.f32 %v1298, %v1799
    %1838 = vrot.lane.b32.xlu0 %v1836, 120
    %v1839 = vpop.permute.xlu0 %1838
    %v1841 = vadd.f32 %v1835, %v1839
    %1843 = vrot.lane.b32.xlu0 %v1783, 4
    %v1844 = vpop.permute.xlu0 %1843
    %v1846 = vmul.f32 %v1297, %v1844
    %v1847 = vadd.f32 %v1846, 0.0
    %1849 = vrot.lane.b32.xlu0 %v1789, 12
    %v1850 = vpop.permute.xlu0 %1849
    %v1852 = vmul.f32 %v1296, %v1850
    %1854 = vrot.lane.b32.xlu0 %v1852, 116
    %v1855 = vpop.permute.xlu0 %1854
    %v1857 = vadd.f32 %v1847, %v1855
    %1859 = vrot.lane.b32.xlu0 %v1795, 12
    %v1860 = vpop.permute.xlu0 %1859
    %v1862 = vmul.f32 %v1297, %v1860
    %1864 = vrot.lane.b32.xlu0 %v1862, 112
    %v1865 = vpop.permute.xlu0 %1864
    %v1867 = vadd.f32 %v1857, %v1865
    %1869 = vrot.lane.b32.xlu0 %v1785, 4
    %v1870 = vpop.permute.xlu0 %1869
    %v1872 = vmul.f32 %v1297, %v1870
    %v1873 = vadd.f32 %v1872, 0.0
    %1875 = vrot.lane.b32.xlu0 %v1791, 12
    %v1876 = vpop.permute.xlu0 %1875
    %v1878 = vmul.f32 %v1296, %v1876
    %1880 = vrot.lane.b32.xlu0 %v1878, 116
    %v1881 = vpop.permute.xlu0 %1880
    %v1883 = vadd.f32 %v1873, %v1881
    %1885 = vrot.lane.b32.xlu0 %v1797, 12
    %v1886 = vpop.permute.xlu0 %1885
    %v1888 = vmul.f32 %v1297, %v1886
    %1890 = vrot.lane.b32.xlu0 %v1888, 112
    %v1891 = vpop.permute.xlu0 %1890
    %v1893 = vadd.f32 %v1883, %v1891
    %1895 = vrot.lane.b32.xlu0 %v1787, 4
    %v1896 = vpop.permute.xlu0 %1895
    %v1898 = vmul.f32 %v1297, %v1896
    %v1899 = vadd.f32 %v1898, 0.0
    %1901 = vrot.lane.b32.xlu0 %v1793, 12
    %v1902 = vpop.permute.xlu0 %1901
    %v1904 = vmul.f32 %v1296, %v1902
    %1906 = vrot.lane.b32.xlu0 %v1904, 116
    %v1907 = vpop.permute.xlu0 %1906
    %v1909 = vadd.f32 %v1899, %v1907
    %1911 = vrot.lane.b32.xlu0 %v1799, 12
    %v1912 = vpop.permute.xlu0 %1911
    %v1914 = vmul.f32 %v1297, %v1912
    %1916 = vrot.lane.b32.xlu0 %v1914, 112
    %v1917 = vpop.permute.xlu0 %1916
    %v1919 = vadd.f32 %v1909, %v1917
    %1920 = vrot.lane.b32.xlu0 %v1783, 8
    %v1921 = vpop.permute.xlu0 %1920
    %v1923 = vmul.f32 %v1298, %v1921
    %v1924 = vadd.f32 %v1923, 0.0
    %1925 = vrot.lane.b32.xlu0 %v1789, 16
    %v1926 = vpop.permute.xlu0 %1925
    %v1928 = vmul.f32 %v1297, %v1926
    %1930 = vrot.lane.b32.xlu0 %v1928, 116
    %v1931 = vpop.permute.xlu0 %1930
    %v1933 = vadd.f32 %v1924, %v1931
    %1934 = vrot.lane.b32.xlu0 %v1795, 24
    %v1935 = vpop.permute.xlu0 %1934
    %v1937 = vmul.f32 %v1296, %v1935
    %1939 = vrot.lane.b32.xlu0 %v1937, 104
    %v1940 = vpop.permute.xlu0 %1939
    %v1942 = vadd.f32 %v1933, %v1940
    %1943 = vrot.lane.b32.xlu0 %v1785, 8
    %v1944 = vpop.permute.xlu0 %1943
    %v1946 = vmul.f32 %v1298, %v1944
    %v1947 = vadd.f32 %v1946, 0.0
    %1948 = vrot.lane.b32.xlu0 %v1791, 16
    %v1949 = vpop.permute.xlu0 %1948
    %v1951 = vmul.f32 %v1297, %v1949
    %1953 = vrot.lane.b32.xlu0 %v1951, 116
    %v1954 = vpop.permute.xlu0 %1953
    %v1956 = vadd.f32 %v1947, %v1954
    %1957 = vrot.lane.b32.xlu0 %v1797, 24
    %v1958 = vpop.permute.xlu0 %1957
    %v1960 = vmul.f32 %v1296, %v1958
    %1962 = vrot.lane.b32.xlu0 %v1960, 104
    %v1963 = vpop.permute.xlu0 %1962
    %v1965 = vadd.f32 %v1956, %v1963
    %1966 = vrot.lane.b32.xlu0 %v1787, 8
    %v1967 = vpop.permute.xlu0 %1966
    %v1969 = vmul.f32 %v1298, %v1967
    %v1970 = vadd.f32 %v1969, 0.0
    %1971 = vrot.lane.b32.xlu0 %v1793, 16
    %v1972 = vpop.permute.xlu0 %1971
    %v1974 = vmul.f32 %v1297, %v1972
    %1976 = vrot.lane.b32.xlu0 %v1974, 116
    %v1977 = vpop.permute.xlu0 %1976
    %v1979 = vadd.f32 %v1970, %v1977
    %1980 = vrot.lane.b32.xlu0 %v1799, 24
    %v1981 = vpop.permute.xlu0 %1980
    %v1983 = vmul.f32 %v1296, %v1981
    %1985 = vrot.lane.b32.xlu0 %v1983, 104
    %v1986 = vpop.permute.xlu0 %1985
    %v1988 = vadd.f32 %v1979, %v1986
    %v1989 = vmul.f32 %v1813, 0.2
    %v1990 = vadd.f32 %v1989, 1.0
    %v1991 = vmul.f32 %v1827, 0.2
    %v1992 = vadd.f32 %v1991, 0.0
    %v1993 = vmul.f32 %v1841, 0.2
    %v1994 = vadd.f32 %v1993, 0.0
    %v1995 = vmul.f32 %v1867, 0.2
    %v1996 = vadd.f32 %v1995, 0.0
    %v1997 = vmul.f32 %v1893, 0.2
    %v1998 = vadd.f32 %v1997, 1.0
    %v1999 = vmul.f32 %v1919, 0.2
    %v2000 = vadd.f32 %v1999, 0.0
    %v2001 = vmul.f32 %v1942, 0.2
    %v2002 = vadd.f32 %v2001, 0.0
    %v2003 = vmul.f32 %v1965, 0.2
    %v2004 = vadd.f32 %v2003, 0.0
    %v2005 = vmul.f32 %v1988, 0.2
    %v2006 = vadd.f32 %v2005, 1.0
    %v2007 = vmul.f32 %v1296, %v1990
    %v2008 = vadd.f32 %v2007, 0.0
    %v2009 = vmul.f32 %v1297, %v1996
    %2011 = vrot.lane.b32.xlu0 %v2009, 124
    %v2012 = vpop.permute.xlu0 %2011
    %v2014 = vadd.f32 %v2008, %v2012
    %v2015 = vmul.f32 %v1298, %v2002
    %2017 = vrot.lane.b32.xlu0 %v2015, 120
    %v2018 = vpop.permute.xlu0 %2017
    %v2020 = vadd.f32 %v2014, %v2018
    %v2021 = vmul.f32 %v1296, %v1992
    %v2022 = vadd.f32 %v2021, 0.0
    %v2023 = vmul.f32 %v1297, %v1998
    %2025 = vrot.lane.b32.xlu0 %v2023, 124
    %v2026 = vpop.permute.xlu0 %2025
    %v2028 = vadd.f32 %v2022, %v2026
    %v2029 = vmul.f32 %v1298, %v2004
    %2031 = vrot.lane.b32.xlu0 %v2029, 120
    %v2032 = vpop.permute.xlu0 %2031
    %v2034 = vadd.f32 %v2028, %v2032
    %v2035 = vmul.f32 %v1296, %v1994
    %v2036 = vadd.f32 %v2035, 0.0
    %v2037 = vmul.f32 %v1297, %v2000
    %2039 = vrot.lane.b32.xlu0 %v2037, 124
    %v2040 = vpop.permute.xlu0 %2039
    %v2042 = vadd.f32 %v2036, %v2040
    %v2043 = vmul.f32 %v1298, %v2006
    %2045 = vrot.lane.b32.xlu0 %v2043, 120
    %v2046 = vpop.permute.xlu0 %2045
    %v2048 = vadd.f32 %v2042, %v2046
    %2050 = vrot.lane.b32.xlu0 %v1990, 4
    %v2051 = vpop.permute.xlu0 %2050
    %v2053 = vmul.f32 %v1297, %v2051
    %v2054 = vadd.f32 %v2053, 0.0
    %2056 = vrot.lane.b32.xlu0 %v1996, 12
    %v2057 = vpop.permute.xlu0 %2056
    %v2059 = vmul.f32 %v1296, %v2057
    %2061 = vrot.lane.b32.xlu0 %v2059, 116
    %v2062 = vpop.permute.xlu0 %2061
    %v2064 = vadd.f32 %v2054, %v2062
    %2066 = vrot.lane.b32.xlu0 %v2002, 12
    %v2067 = vpop.permute.xlu0 %2066
    %v2069 = vmul.f32 %v1297, %v2067
    %2071 = vrot.lane.b32.xlu0 %v2069, 112
    %v2072 = vpop.permute.xlu0 %2071
    %v2074 = vadd.f32 %v2064, %v2072
    %2076 = vrot.lane.b32.xlu0 %v1992, 4
    %v2077 = vpop.permute.xlu0 %2076
    %v2079 = vmul.f32 %v1297, %v2077
    %v2080 = vadd.f32 %v2079, 0.0
    %2082 = vrot.lane.b32.xlu0 %v1998, 12
    %v2083 = vpop.permute.xlu0 %2082
    %v2085 = vmul.f32 %v1296, %v2083
    %2087 = vrot.lane.b32.xlu0 %v2085, 116
    %v2088 = vpop.permute.xlu0 %2087
    %v2090 = vadd.f32 %v2080, %v2088
    %2092 = vrot.lane.b32.xlu0 %v2004, 12
    %v2093 = vpop.permute.xlu0 %2092
    %v2095 = vmul.f32 %v1297, %v2093
    %2097 = vrot.lane.b32.xlu0 %v2095, 112
    %v2098 = vpop.permute.xlu0 %2097
    %v2100 = vadd.f32 %v2090, %v2098
    %2102 = vrot.lane.b32.xlu0 %v1994, 4
    %v2103 = vpop.permute.xlu0 %2102
    %v2105 = vmul.f32 %v1297, %v2103
    %v2106 = vadd.f32 %v2105, 0.0
    %2108 = vrot.lane.b32.xlu0 %v2000, 12
    %v2109 = vpop.permute.xlu0 %2108
    %v2111 = vmul.f32 %v1296, %v2109
    %2113 = vrot.lane.b32.xlu0 %v2111, 116
    %v2114 = vpop.permute.xlu0 %2113
    %v2116 = vadd.f32 %v2106, %v2114
    %2118 = vrot.lane.b32.xlu0 %v2006, 12
    %v2119 = vpop.permute.xlu0 %2118
    %v2121 = vmul.f32 %v1297, %v2119
    %2123 = vrot.lane.b32.xlu0 %v2121, 112
    %v2124 = vpop.permute.xlu0 %2123
    %v2126 = vadd.f32 %v2116, %v2124
    %2127 = vrot.lane.b32.xlu0 %v1990, 8
    %v2128 = vpop.permute.xlu0 %2127
    %v2130 = vmul.f32 %v1298, %v2128
    %v2131 = vadd.f32 %v2130, 0.0
    %2132 = vrot.lane.b32.xlu0 %v1996, 16
    %v2133 = vpop.permute.xlu0 %2132
    %v2135 = vmul.f32 %v1297, %v2133
    %2137 = vrot.lane.b32.xlu0 %v2135, 116
    %v2138 = vpop.permute.xlu0 %2137
    %v2140 = vadd.f32 %v2131, %v2138
    %2141 = vrot.lane.b32.xlu0 %v2002, 24
    %v2142 = vpop.permute.xlu0 %2141
    %v2144 = vmul.f32 %v1296, %v2142
    %2146 = vrot.lane.b32.xlu0 %v2144, 104
    %v2147 = vpop.permute.xlu0 %2146
    %v2149 = vadd.f32 %v2140, %v2147
    %2150 = vrot.lane.b32.xlu0 %v1992, 8
    %v2151 = vpop.permute.xlu0 %2150
    %v2153 = vmul.f32 %v1298, %v2151
    %v2154 = vadd.f32 %v2153, 0.0
    %2155 = vrot.lane.b32.xlu0 %v1998, 16
    %v2156 = vpop.permute.xlu0 %2155
    %v2158 = vmul.f32 %v1297, %v2156
    %2160 = vrot.lane.b32.xlu0 %v2158, 116
    %v2161 = vpop.permute.xlu0 %2160
    %v2163 = vadd.f32 %v2154, %v2161
    %2164 = vrot.lane.b32.xlu0 %v2004, 24
    %v2165 = vpop.permute.xlu0 %2164
    %v2167 = vmul.f32 %v1296, %v2165
    %2169 = vrot.lane.b32.xlu0 %v2167, 104
    %v2170 = vpop.permute.xlu0 %2169
    %v2172 = vadd.f32 %v2163, %v2170
    %2173 = vrot.lane.b32.xlu0 %v1994, 8
    %v2174 = vpop.permute.xlu0 %2173
    %v2176 = vmul.f32 %v1298, %v2174
    %v2177 = vadd.f32 %v2176, 0.0
    %2178 = vrot.lane.b32.xlu0 %v2000, 16
    %v2179 = vpop.permute.xlu0 %2178
    %v2181 = vmul.f32 %v1297, %v2179
    %2183 = vrot.lane.b32.xlu0 %v2181, 116
    %v2184 = vpop.permute.xlu0 %2183
    %v2186 = vadd.f32 %v2177, %v2184
    %2187 = vrot.lane.b32.xlu0 %v2006, 24
    %v2188 = vpop.permute.xlu0 %2187
    %v2190 = vmul.f32 %v1296, %v2188
    %2192 = vrot.lane.b32.xlu0 %v2190, 104
    %v2193 = vpop.permute.xlu0 %2192
    %v2195 = vadd.f32 %v2186, %v2193
    %v2196 = vmul.f32 %v2020, 0.25
    %v2197 = vadd.f32 %v2196, 1.0
    %v2198 = vmul.f32 %v2034, 0.25
    %v2199 = vadd.f32 %v2198, 0.0
    %v2200 = vmul.f32 %v2048, 0.25
    %v2201 = vadd.f32 %v2200, 0.0
    %v2202 = vmul.f32 %v2074, 0.25
    %v2203 = vadd.f32 %v2202, 0.0
    %v2204 = vmul.f32 %v2100, 0.25
    %v2205 = vadd.f32 %v2204, 1.0
    %v2206 = vmul.f32 %v2126, 0.25
    %v2207 = vadd.f32 %v2206, 0.0
    %v2208 = vmul.f32 %v2149, 0.25
    %v2209 = vadd.f32 %v2208, 0.0
    %v2210 = vmul.f32 %v2172, 0.25
    %v2211 = vadd.f32 %v2210, 0.0
    %v2212 = vmul.f32 %v2195, 0.25
    %v2213 = vadd.f32 %v2212, 1.0
    %v2214 = vmul.f32 %v1296, %v2197
    %v2215 = vadd.f32 %v2214, 0.0
    %v2216 = vmul.f32 %v1297, %v2203
    %2218 = vrot.lane.b32.xlu0 %v2216, 124
    %v2219 = vpop.permute.xlu0 %2218
    %v2221 = vadd.f32 %v2215, %v2219
    %v2222 = vmul.f32 %v1298, %v2209
    %2224 = vrot.lane.b32.xlu0 %v2222, 120
    %v2225 = vpop.permute.xlu0 %2224
    %v2227 = vadd.f32 %v2221, %v2225
    %v2228 = vmul.f32 %v1296, %v2199
    %v2229 = vadd.f32 %v2228, 0.0
    %v2230 = vmul.f32 %v1297, %v2205
    %2232 = vrot.lane.b32.xlu0 %v2230, 124
    %v2233 = vpop.permute.xlu0 %2232
    %v2235 = vadd.f32 %v2229, %v2233
    %v2236 = vmul.f32 %v1298, %v2211
    %2238 = vrot.lane.b32.xlu0 %v2236, 120
    %v2239 = vpop.permute.xlu0 %2238
    %v2241 = vadd.f32 %v2235, %v2239
    %v2242 = vmul.f32 %v1296, %v2201
    %v2243 = vadd.f32 %v2242, 0.0
    %v2244 = vmul.f32 %v1297, %v2207
    %2246 = vrot.lane.b32.xlu0 %v2244, 124
    %v2247 = vpop.permute.xlu0 %2246
    %v2249 = vadd.f32 %v2243, %v2247
    %v2250 = vmul.f32 %v1298, %v2213
    %2252 = vrot.lane.b32.xlu0 %v2250, 120
    %v2253 = vpop.permute.xlu0 %2252
    %v2255 = vadd.f32 %v2249, %v2253
    %2257 = vrot.lane.b32.xlu0 %v2197, 4
    %v2258 = vpop.permute.xlu0 %2257
    %v2260 = vmul.f32 %v1297, %v2258
    %v2261 = vadd.f32 %v2260, 0.0
    %2263 = vrot.lane.b32.xlu0 %v2203, 12
    %v2264 = vpop.permute.xlu0 %2263
    %v2266 = vmul.f32 %v1296, %v2264
    %2268 = vrot.lane.b32.xlu0 %v2266, 116
    %v2269 = vpop.permute.xlu0 %2268
    %v2271 = vadd.f32 %v2261, %v2269
    %2273 = vrot.lane.b32.xlu0 %v2209, 12
    %v2274 = vpop.permute.xlu0 %2273
    %v2276 = vmul.f32 %v1297, %v2274
    %2278 = vrot.lane.b32.xlu0 %v2276, 112
    %v2279 = vpop.permute.xlu0 %2278
    %v2281 = vadd.f32 %v2271, %v2279
    %2283 = vrot.lane.b32.xlu0 %v2199, 4
    %v2284 = vpop.permute.xlu0 %2283
    %v2286 = vmul.f32 %v1297, %v2284
    %v2287 = vadd.f32 %v2286, 0.0
    %2289 = vrot.lane.b32.xlu0 %v2205, 12
    %v2290 = vpop.permute.xlu0 %2289
    %v2292 = vmul.f32 %v1296, %v2290
    %2294 = vrot.lane.b32.xlu0 %v2292, 116
    %v2295 = vpop.permute.xlu0 %2294
    %v2297 = vadd.f32 %v2287, %v2295
    %2299 = vrot.lane.b32.xlu0 %v2211, 12
    %v2300 = vpop.permute.xlu0 %2299
    %v2302 = vmul.f32 %v1297, %v2300
    %2304 = vrot.lane.b32.xlu0 %v2302, 112
    %v2305 = vpop.permute.xlu0 %2304
    %v2307 = vadd.f32 %v2297, %v2305
    %2309 = vrot.lane.b32.xlu0 %v2201, 4
    %v2310 = vpop.permute.xlu0 %2309
    %v2312 = vmul.f32 %v1297, %v2310
    %v2313 = vadd.f32 %v2312, 0.0
    %2315 = vrot.lane.b32.xlu0 %v2207, 12
    %v2316 = vpop.permute.xlu0 %2315
    %v2318 = vmul.f32 %v1296, %v2316
    %2320 = vrot.lane.b32.xlu0 %v2318, 116
    %v2321 = vpop.permute.xlu0 %2320
    %v2323 = vadd.f32 %v2313, %v2321
    %2325 = vrot.lane.b32.xlu0 %v2213, 12
    %v2326 = vpop.permute.xlu0 %2325
    %v2328 = vmul.f32 %v1297, %v2326
    %2330 = vrot.lane.b32.xlu0 %v2328, 112
    %v2331 = vpop.permute.xlu0 %2330
    %v2333 = vadd.f32 %v2323, %v2331
    %2334 = vrot.lane.b32.xlu0 %v2197, 8
    %v2335 = vpop.permute.xlu0 %2334
    %v2337 = vmul.f32 %v1298, %v2335
    %v2338 = vadd.f32 %v2337, 0.0
    %2339 = vrot.lane.b32.xlu0 %v2203, 16
    %v2340 = vpop.permute.xlu0 %2339
    %v2342 = vmul.f32 %v1297, %v2340
    %2344 = vrot.lane.b32.xlu0 %v2342, 116
    %v2345 = vpop.permute.xlu0 %2344
    %v2347 = vadd.f32 %v2338, %v2345
    %2348 = vrot.lane.b32.xlu0 %v2209, 24
    %v2349 = vpop.permute.xlu0 %2348
    %v2351 = vmul.f32 %v1296, %v2349
    %2353 = vrot.lane.b32.xlu0 %v2351, 104
    %v2354 = vpop.permute.xlu0 %2353
    %v2356 = vadd.f32 %v2347, %v2354
    %2357 = vrot.lane.b32.xlu0 %v2199, 8
    %v2358 = vpop.permute.xlu0 %2357
    %v2360 = vmul.f32 %v1298, %v2358
    %v2361 = vadd.f32 %v2360, 0.0
    %2362 = vrot.lane.b32.xlu0 %v2205, 16
    %v2363 = vpop.permute.xlu0 %2362
    %v2365 = vmul.f32 %v1297, %v2363
    %2367 = vrot.lane.b32.xlu0 %v2365, 116
    %v2368 = vpop.permute.xlu0 %2367
    %v2370 = vadd.f32 %v2361, %v2368
    %2371 = vrot.lane.b32.xlu0 %v2211, 24
    %v2372 = vpop.permute.xlu0 %2371
    %v2374 = vmul.f32 %v1296, %v2372
    %2376 = vrot.lane.b32.xlu0 %v2374, 104
    %v2377 = vpop.permute.xlu0 %2376
    %v2379 = vadd.f32 %v2370, %v2377
    %2380 = vrot.lane.b32.xlu0 %v2201, 8
    %v2381 = vpop.permute.xlu0 %2380
    %v2383 = vmul.f32 %v1298, %v2381
    %v2384 = vadd.f32 %v2383, 0.0
    %2385 = vrot.lane.b32.xlu0 %v2207, 16
    %v2386 = vpop.permute.xlu0 %2385
    %v2388 = vmul.f32 %v1297, %v2386
    %2390 = vrot.lane.b32.xlu0 %v2388, 116
    %v2391 = vpop.permute.xlu0 %2390
    %v2393 = vadd.f32 %v2384, %v2391
    %2394 = vrot.lane.b32.xlu0 %v2213, 24
    %v2395 = vpop.permute.xlu0 %2394
    %v2397 = vmul.f32 %v1296, %v2395
    %2399 = vrot.lane.b32.xlu0 %v2397, 104
    %v2400 = vpop.permute.xlu0 %2399
    %v2402 = vadd.f32 %v2393, %v2400
    %v2403 = vmul.f32 %v2227, 0.33333334
    %v2404 = vadd.f32 %v2403, 1.0
    %v2405 = vmul.f32 %v2241, 0.33333334
    %v2406 = vadd.f32 %v2405, 0.0
    %v2407 = vmul.f32 %v2255, 0.33333334
    %v2408 = vadd.f32 %v2407, 0.0
    %v2409 = vmul.f32 %v2281, 0.33333334
    %v2410 = vadd.f32 %v2409, 0.0
    %v2411 = vmul.f32 %v2307, 0.33333334
    %v2412 = vadd.f32 %v2411, 1.0
    %v2413 = vmul.f32 %v2333, 0.33333334
    %v2414 = vadd.f32 %v2413, 0.0
    %v2415 = vmul.f32 %v2356, 0.33333334
    %v2416 = vadd.f32 %v2415, 0.0
    %v2417 = vmul.f32 %v2379, 0.33333334
    %v2418 = vadd.f32 %v2417, 0.0
    %v2419 = vmul.f32 %v2402, 0.33333334
    %v2420 = vadd.f32 %v2419, 1.0
    %v2421 = vmul.f32 %v1296, %v2404
    %v2422 = vadd.f32 %v2421, 0.0
    %v2423 = vmul.f32 %v1297, %v2410
    %2425 = vrot.lane.b32.xlu0 %v2423, 124
    %v2426 = vpop.permute.xlu0 %2425
    %v2428 = vadd.f32 %v2422, %v2426
    %v2429 = vmul.f32 %v1298, %v2416
    %2431 = vrot.lane.b32.xlu0 %v2429, 120
    %v2432 = vpop.permute.xlu0 %2431
    %v2434 = vadd.f32 %v2428, %v2432
    %v2435 = vmul.f32 %v1296, %v2406
    %v2436 = vadd.f32 %v2435, 0.0
    %v2437 = vmul.f32 %v1297, %v2412
    %2439 = vrot.lane.b32.xlu0 %v2437, 124
    %v2440 = vpop.permute.xlu0 %2439
    %v2442 = vadd.f32 %v2436, %v2440
    %v2443 = vmul.f32 %v1298, %v2418
    %2445 = vrot.lane.b32.xlu0 %v2443, 120
    %v2446 = vpop.permute.xlu0 %2445
    %v2448 = vadd.f32 %v2442, %v2446
    %v2449 = vmul.f32 %v1296, %v2408
    %v2450 = vadd.f32 %v2449, 0.0
    %v2451 = vmul.f32 %v1297, %v2414
    %2453 = vrot.lane.b32.xlu0 %v2451, 124
    %v2454 = vpop.permute.xlu0 %2453
    %v2456 = vadd.f32 %v2450, %v2454
    %v2457 = vmul.f32 %v1298, %v2420
    %2459 = vrot.lane.b32.xlu0 %v2457, 120
    %v2460 = vpop.permute.xlu0 %2459
    %v2462 = vadd.f32 %v2456, %v2460
    %2464 = vrot.lane.b32.xlu0 %v2404, 4
    %v2465 = vpop.permute.xlu0 %2464
    %v2467 = vmul.f32 %v1297, %v2465
    %v2468 = vadd.f32 %v2467, 0.0
    %2470 = vrot.lane.b32.xlu0 %v2410, 12
    %v2471 = vpop.permute.xlu0 %2470
    %v2473 = vmul.f32 %v1296, %v2471
    %2475 = vrot.lane.b32.xlu0 %v2473, 116
    %v2476 = vpop.permute.xlu0 %2475
    %v2478 = vadd.f32 %v2468, %v2476
    %2480 = vrot.lane.b32.xlu0 %v2416, 12
    %v2481 = vpop.permute.xlu0 %2480
    %v2483 = vmul.f32 %v1297, %v2481
    %2485 = vrot.lane.b32.xlu0 %v2483, 112
    %v2486 = vpop.permute.xlu0 %2485
    %v2488 = vadd.f32 %v2478, %v2486
    %2490 = vrot.lane.b32.xlu0 %v2406, 4
    %v2491 = vpop.permute.xlu0 %2490
    %v2493 = vmul.f32 %v1297, %v2491
    %v2494 = vadd.f32 %v2493, 0.0
    %2496 = vrot.lane.b32.xlu0 %v2412, 12
    %v2497 = vpop.permute.xlu0 %2496
    %v2499 = vmul.f32 %v1296, %v2497
    %2501 = vrot.lane.b32.xlu0 %v2499, 116
    %v2502 = vpop.permute.xlu0 %2501
    %v2504 = vadd.f32 %v2494, %v2502
    %2506 = vrot.lane.b32.xlu0 %v2418, 12
    %v2507 = vpop.permute.xlu0 %2506
    %v2509 = vmul.f32 %v1297, %v2507
    %2511 = vrot.lane.b32.xlu0 %v2509, 112
    %v2512 = vpop.permute.xlu0 %2511
    %v2514 = vadd.f32 %v2504, %v2512
    %2516 = vrot.lane.b32.xlu0 %v2408, 4
    %v2517 = vpop.permute.xlu0 %2516
    %v2519 = vmul.f32 %v1297, %v2517
    %v2520 = vadd.f32 %v2519, 0.0
    %2522 = vrot.lane.b32.xlu0 %v2414, 12
    %v2523 = vpop.permute.xlu0 %2522
    %v2525 = vmul.f32 %v1296, %v2523
    %2527 = vrot.lane.b32.xlu0 %v2525, 116
    %v2528 = vpop.permute.xlu0 %2527
    %v2530 = vadd.f32 %v2520, %v2528
    %2532 = vrot.lane.b32.xlu0 %v2420, 12
    %v2533 = vpop.permute.xlu0 %2532
    %v2535 = vmul.f32 %v1297, %v2533
    %2537 = vrot.lane.b32.xlu0 %v2535, 112
    %v2538 = vpop.permute.xlu0 %2537
    %v2540 = vadd.f32 %v2530, %v2538
    %2541 = vrot.lane.b32.xlu0 %v2404, 8
    %v2542 = vpop.permute.xlu0 %2541
    %v2544 = vmul.f32 %v1298, %v2542
    %v2545 = vadd.f32 %v2544, 0.0
    %2546 = vrot.lane.b32.xlu0 %v2410, 16
    %v2547 = vpop.permute.xlu0 %2546
    %v2549 = vmul.f32 %v1297, %v2547
    %2551 = vrot.lane.b32.xlu0 %v2549, 116
    %v2552 = vpop.permute.xlu0 %2551
    %v2554 = vadd.f32 %v2545, %v2552
    %2555 = vrot.lane.b32.xlu0 %v2416, 24
    %v2556 = vpop.permute.xlu0 %2555
    %v2558 = vmul.f32 %v1296, %v2556
    %2560 = vrot.lane.b32.xlu0 %v2558, 104
    %v2561 = vpop.permute.xlu0 %2560
    %v2563 = vadd.f32 %v2554, %v2561
    %2564 = vrot.lane.b32.xlu0 %v2406, 8
    %v2565 = vpop.permute.xlu0 %2564
    %v2567 = vmul.f32 %v1298, %v2565
    %v2568 = vadd.f32 %v2567, 0.0
    %2569 = vrot.lane.b32.xlu0 %v2412, 16
    %v2570 = vpop.permute.xlu0 %2569
    %v2572 = vmul.f32 %v1297, %v2570
    %2574 = vrot.lane.b32.xlu0 %v2572, 116
    %v2575 = vpop.permute.xlu0 %2574
    %v2577 = vadd.f32 %v2568, %v2575
    %2578 = vrot.lane.b32.xlu0 %v2418, 24
    %v2579 = vpop.permute.xlu0 %2578
    %v2581 = vmul.f32 %v1296, %v2579
    %2583 = vrot.lane.b32.xlu0 %v2581, 104
    %v2584 = vpop.permute.xlu0 %2583
    %v2586 = vadd.f32 %v2577, %v2584
    %2587 = vrot.lane.b32.xlu0 %v2408, 8
    %v2588 = vpop.permute.xlu0 %2587
    %v2590 = vmul.f32 %v1298, %v2588
    %v2591 = vadd.f32 %v2590, 0.0
    %2592 = vrot.lane.b32.xlu0 %v2414, 16
    %v2593 = vpop.permute.xlu0 %2592
    %v2595 = vmul.f32 %v1297, %v2593
    %2597 = vrot.lane.b32.xlu0 %v2595, 116
    %v2598 = vpop.permute.xlu0 %2597
    %v2600 = vadd.f32 %v2591, %v2598
    %2601 = vrot.lane.b32.xlu0 %v2420, 24
    %v2602 = vpop.permute.xlu0 %2601
    %v2604 = vmul.f32 %v1296, %v2602
    %2606 = vrot.lane.b32.xlu0 %v2604, 104
    %v2607 = vpop.permute.xlu0 %2606
    %v2609 = vadd.f32 %v2600, %v2607
    %v2610 = vmul.f32 %v2434, 0.5
    %v2611 = vadd.f32 %v2610, 1.0
    %v2612 = vmul.f32 %v2448, 0.5
    %v2613 = vadd.f32 %v2612, 0.0
    %v2614 = vmul.f32 %v2462, 0.5
    %v2615 = vadd.f32 %v2614, 0.0
    %v2616 = vmul.f32 %v2488, 0.5
    %v2617 = vadd.f32 %v2616, 0.0
    %v2618 = vmul.f32 %v2514, 0.5
    %v2619 = vadd.f32 %v2618, 1.0
    %v2620 = vmul.f32 %v2540, 0.5
    %v2621 = vadd.f32 %v2620, 0.0
    %v2622 = vmul.f32 %v2563, 0.5
    %v2623 = vadd.f32 %v2622, 0.0
    %v2624 = vmul.f32 %v2586, 0.5
    %v2625 = vadd.f32 %v2624, 0.0
    %v2626 = vmul.f32 %v2609, 0.5
    %v2627 = vadd.f32 %v2626, 1.0
    %v2628 = vmul.f32 %v1296, %v2611
    %v2629 = vadd.f32 %v2628, 0.0
    %v2630 = vmul.f32 %v1297, %v2617
    %2632 = vrot.lane.b32.xlu0 %v2630, 124
    %v2633 = vpop.permute.xlu0 %2632
    %v2635 = vadd.f32 %v2629, %v2633
    %v2636 = vmul.f32 %v1298, %v2623
    %2638 = vrot.lane.b32.xlu0 %v2636, 120
    %v2639 = vpop.permute.xlu0 %2638
    %v2641 = vadd.f32 %v2635, %v2639
    %v2642 = vmul.f32 %v1296, %v2613
    %v2643 = vadd.f32 %v2642, 0.0
    %v2644 = vmul.f32 %v1297, %v2619
    %2646 = vrot.lane.b32.xlu0 %v2644, 124
    %v2647 = vpop.permute.xlu0 %2646
    %v2649 = vadd.f32 %v2643, %v2647
    %v2650 = vmul.f32 %v1298, %v2625
    %2652 = vrot.lane.b32.xlu0 %v2650, 120
    %v2653 = vpop.permute.xlu0 %2652
    %v2655 = vadd.f32 %v2649, %v2653
    %v2656 = vmul.f32 %v1296, %v2615
    %v2657 = vadd.f32 %v2656, 0.0
    %v2658 = vmul.f32 %v1297, %v2621
    %2660 = vrot.lane.b32.xlu0 %v2658, 124
    %v2661 = vpop.permute.xlu0 %2660
    %v2663 = vadd.f32 %v2657, %v2661
    %v2664 = vmul.f32 %v1298, %v2627
    %2666 = vrot.lane.b32.xlu0 %v2664, 120
    %v2667 = vpop.permute.xlu0 %2666
    %v2669 = vadd.f32 %v2663, %v2667
    %2671 = vrot.lane.b32.xlu0 %v2611, 4
    %v2672 = vpop.permute.xlu0 %2671
    %v2674 = vmul.f32 %v1297, %v2672
    %v2675 = vadd.f32 %v2674, 0.0
    %2677 = vrot.lane.b32.xlu0 %v2617, 12
    %v2678 = vpop.permute.xlu0 %2677
    %v2680 = vmul.f32 %v1296, %v2678
    %2682 = vrot.lane.b32.xlu0 %v2680, 116
    %v2683 = vpop.permute.xlu0 %2682
    %v2685 = vadd.f32 %v2675, %v2683
    %2687 = vrot.lane.b32.xlu0 %v2623, 12
    %v2688 = vpop.permute.xlu0 %2687
    %v2690 = vmul.f32 %v1297, %v2688
    %2692 = vrot.lane.b32.xlu0 %v2690, 112
    %v2693 = vpop.permute.xlu0 %2692
    %v2695 = vadd.f32 %v2685, %v2693
    %2697 = vrot.lane.b32.xlu0 %v2613, 4
    %v2698 = vpop.permute.xlu0 %2697
    %v2700 = vmul.f32 %v1297, %v2698
    %v2701 = vadd.f32 %v2700, 0.0
    %2703 = vrot.lane.b32.xlu0 %v2619, 12
    %v2704 = vpop.permute.xlu0 %2703
    %v2706 = vmul.f32 %v1296, %v2704
    %2708 = vrot.lane.b32.xlu0 %v2706, 116
    %v2709 = vpop.permute.xlu0 %2708
    %v2711 = vadd.f32 %v2701, %v2709
    %2713 = vrot.lane.b32.xlu0 %v2625, 12
    %v2714 = vpop.permute.xlu0 %2713
    %v2716 = vmul.f32 %v1297, %v2714
    %2718 = vrot.lane.b32.xlu0 %v2716, 112
    %v2719 = vpop.permute.xlu0 %2718
    %v2721 = vadd.f32 %v2711, %v2719
    %2723 = vrot.lane.b32.xlu0 %v2615, 4
    %v2724 = vpop.permute.xlu0 %2723
    %v2726 = vmul.f32 %v1297, %v2724
    %v2727 = vadd.f32 %v2726, 0.0
    %2729 = vrot.lane.b32.xlu0 %v2621, 12
    %v2730 = vpop.permute.xlu0 %2729
    %v2732 = vmul.f32 %v1296, %v2730
    %2734 = vrot.lane.b32.xlu0 %v2732, 116
    %v2735 = vpop.permute.xlu0 %2734
    %v2737 = vadd.f32 %v2727, %v2735
    %2739 = vrot.lane.b32.xlu0 %v2627, 12
    %v2740 = vpop.permute.xlu0 %2739
    %v2742 = vmul.f32 %v1297, %v2740
    %2744 = vrot.lane.b32.xlu0 %v2742, 112
    %v2745 = vpop.permute.xlu0 %2744
    %v2747 = vadd.f32 %v2737, %v2745
    %2748 = vrot.lane.b32.xlu0 %v2611, 8
    %v2749 = vpop.permute.xlu0 %2748
    %v2751 = vmul.f32 %v1298, %v2749
    %v2752 = vadd.f32 %v2751, 0.0
    %2753 = vrot.lane.b32.xlu0 %v2617, 16
    %v2754 = vpop.permute.xlu0 %2753
    %v2756 = vmul.f32 %v1297, %v2754
    %2758 = vrot.lane.b32.xlu0 %v2756, 116
    %v2759 = vpop.permute.xlu0 %2758
    %v2761 = vadd.f32 %v2752, %v2759
    %2762 = vrot.lane.b32.xlu0 %v2623, 24
    %v2763 = vpop.permute.xlu0 %2762
    %v2765 = vmul.f32 %v1296, %v2763
    %2767 = vrot.lane.b32.xlu0 %v2765, 104
    %v2768 = vpop.permute.xlu0 %2767
    %v2770 = vadd.f32 %v2761, %v2768
    %2771 = vrot.lane.b32.xlu0 %v2613, 8
    %v2772 = vpop.permute.xlu0 %2771
    %v2774 = vmul.f32 %v1298, %v2772
    %v2775 = vadd.f32 %v2774, 0.0
    %2776 = vrot.lane.b32.xlu0 %v2619, 16
    %v2777 = vpop.permute.xlu0 %2776
    %v2779 = vmul.f32 %v1297, %v2777
    %2781 = vrot.lane.b32.xlu0 %v2779, 116
    %v2782 = vpop.permute.xlu0 %2781
    %v2784 = vadd.f32 %v2775, %v2782
    %2785 = vrot.lane.b32.xlu0 %v2625, 24
    %v2786 = vpop.permute.xlu0 %2785
    %v2788 = vmul.f32 %v1296, %v2786
    %2790 = vrot.lane.b32.xlu0 %v2788, 104
    %v2791 = vpop.permute.xlu0 %2790
    %v2793 = vadd.f32 %v2784, %v2791
    %2794 = vrot.lane.b32.xlu0 %v2615, 8
    %v2795 = vpop.permute.xlu0 %2794
    %v2797 = vmul.f32 %v1298, %v2795
    %v2798 = vadd.f32 %v2797, 0.0
    %2799 = vrot.lane.b32.xlu0 %v2621, 16
    %v2800 = vpop.permute.xlu0 %2799
    %v2802 = vmul.f32 %v1297, %v2800
    %2804 = vrot.lane.b32.xlu0 %v2802, 116
    %v2805 = vpop.permute.xlu0 %2804
    %v2807 = vadd.f32 %v2798, %v2805
    %2808 = vrot.lane.b32.xlu0 %v2627, 24
    %v2809 = vpop.permute.xlu0 %2808
    %v2811 = vmul.f32 %v1296, %v2809
    %2813 = vrot.lane.b32.xlu0 %v2811, 104
    %v2814 = vpop.permute.xlu0 %2813
    %v2816 = vadd.f32 %v2807, %v2814
    %v2817 = vadd.f32 %v2641, 1.0
    %v2818 = vadd.f32 %v2655, 0.0
    %v2819 = vadd.f32 %v2669, 0.0
    %v2820 = vadd.f32 %v2695, 0.0
    %v2821 = vadd.f32 %v2721, 1.0
    %v2822 = vadd.f32 %v2747, 0.0
    %v2823 = vadd.f32 %v2770, 0.0
    %v2824 = vadd.f32 %v2793, 0.0
    %v2825 = vadd.f32 %v2816, 1.0
    %v2826 = vmul.f32 %v2817, %v2817
    %v2827 = vadd.f32 %v2826, 0.0
    %2829 = vrot.lane.b32.xlu0 %v2820, 124
    %v2830 = vpop.permute.xlu0 %2829
    %v2832 = vmul.f32 %v2818, %v2830
    %v2833 = vadd.f32 %v2827, %v2832
    %2835 = vrot.lane.b32.xlu0 %v2823, 120
    %v2836 = vpop.permute.xlu0 %2835
    %v2838 = vmul.f32 %v2819, %v2836
    %v2839 = vadd.f32 %v2833, %v2838
    %v2840 = vmul.f32 %v2817, %v2818
    %v2841 = vadd.f32 %v2840, 0.0
    %2843 = vrot.lane.b32.xlu0 %v2821, 124
    %v2844 = vpop.permute.xlu0 %2843
    %v2846 = vmul.f32 %v2818, %v2844
    %v2847 = vadd.f32 %v2841, %v2846
    %2849 = vrot.lane.b32.xlu0 %v2824, 120
    %v2850 = vpop.permute.xlu0 %2849
    %v2852 = vmul.f32 %v2819, %v2850
    %v2853 = vadd.f32 %v2847, %v2852
    %v2854 = vmul.f32 %v2817, %v2819
    %v2855 = vadd.f32 %v2854, 0.0
    %2857 = vrot.lane.b32.xlu0 %v2822, 124
    %v2858 = vpop.permute.xlu0 %2857
    %v2860 = vmul.f32 %v2818, %v2858
    %v2861 = vadd.f32 %v2855, %v2860
    %2863 = vrot.lane.b32.xlu0 %v2825, 120
    %v2864 = vpop.permute.xlu0 %2863
    %v2866 = vmul.f32 %v2819, %v2864
    %v2867 = vadd.f32 %v2861, %v2866
    %2869 = vrot.lane.b32.xlu0 %v2817, 4
    %v2870 = vpop.permute.xlu0 %2869
    %v2872 = vmul.f32 %v2820, %v2870
    %v2873 = vadd.f32 %v2872, 0.0
    %v2874 = vmul.f32 %v2821, %v2820
    %v2875 = vadd.f32 %v2873, %v2874
    %2876 = vrot.lane.b32.xlu0 %v2823, 124
    %v2877 = vpop.permute.xlu0 %2876
    %v2879 = vmul.f32 %v2822, %v2877
    %v2880 = vadd.f32 %v2875, %v2879
    %v2881 = vadd.f32 %v2832, 0.0
    %v2882 = vmul.f32 %v2821, %v2821
    %2884 = vrot.lane.b32.xlu0 %v2882, 124
    %v2885 = vpop.permute.xlu0 %2884
    %v2887 = vadd.f32 %v2881, %v2885
    %2888 = vrot.lane.b32.xlu0 %v2824, 124
    %v2889 = vpop.permute.xlu0 %2888
    %v2891 = vmul.f32 %v2822, %v2889
    %2893 = vrot.lane.b32.xlu0 %v2891, 124
    %v2894 = vpop.permute.xlu0 %2893
    %v2896 = vadd.f32 %v2887, %v2894
    %2898 = vrot.lane.b32.xlu0 %v2819, 4
    %v2899 = vpop.permute.xlu0 %2898
    %v2901 = vmul.f32 %v2820, %v2899
    %v2902 = vadd.f32 %v2901, 0.0
    %v2903 = vmul.f32 %v2821, %v2822
    %v2904 = vadd.f32 %v2902, %v2903
    %2905 = vrot.lane.b32.xlu0 %v2825, 124
    %v2906 = vpop.permute.xlu0 %2905
    %v2908 = vmul.f32 %v2822, %v2906
    %v2909 = vadd.f32 %v2904, %v2908
    %2910 = vrot.lane.b32.xlu0 %v2817, 8
    %v2911 = vpop.permute.xlu0 %2910
    %v2913 = vmul.f32 %v2823, %v2911
    %v2914 = vadd.f32 %v2913, 0.0
    %2915 = vrot.lane.b32.xlu0 %v2820, 4
    %v2916 = vpop.permute.xlu0 %2915
    %v2918 = vmul.f32 %v2824, %v2916
    %v2919 = vadd.f32 %v2914, %v2918
    %v2920 = vmul.f32 %v2825, %v2823
    %v2921 = vadd.f32 %v2919, %v2920
    %2923 = vrot.lane.b32.xlu0 %v2818, 8
    %v2924 = vpop.permute.xlu0 %2923
    %v2926 = vmul.f32 %v2823, %v2924
    %v2927 = vadd.f32 %v2926, 0.0
    %2928 = vrot.lane.b32.xlu0 %v2821, 4
    %v2929 = vpop.permute.xlu0 %2928
    %v2931 = vmul.f32 %v2824, %v2929
    %v2932 = vadd.f32 %v2927, %v2931
    %v2933 = vmul.f32 %v2825, %v2824
    %v2934 = vadd.f32 %v2932, %v2933
    %v2935 = vadd.f32 %v2838, 0.0
    %v2936 = vadd.f32 %v2935, %v2894
    %v2937 = vmul.f32 %v2825, %v2825
    %2939 = vrot.lane.b32.xlu0 %v2937, 120
    %v2940 = vpop.permute.xlu0 %2939
    %v2942 = vadd.f32 %v2936, %v2940
    %v2943 = vmul.f32 %v2839, %v2839
    %v2944 = vadd.f32 %v2943, 0.0
    %2946 = vrot.lane.b32.xlu0 %v2880, 124
    %v2947 = vpop.permute.xlu0 %2946
    %v2949 = vmul.f32 %v2853, %v2947
    %v2950 = vadd.f32 %v2944, %v2949
    %2952 = vrot.lane.b32.xlu0 %v2921, 120
    %v2953 = vpop.permute.xlu0 %2952
    %v2955 = vmul.f32 %v2867, %v2953
    %v2956 = vadd.f32 %v2950, %v2955
    %v2957 = vmul.f32 %v2839, %v2853
    %v2958 = vadd.f32 %v2957, 0.0
    %v2959 = vmul.f32 %v2853, %v2896
    %v2960 = vadd.f32 %v2958, %v2959
    %2962 = vrot.lane.b32.xlu0 %v2934, 120
    %v2963 = vpop.permute.xlu0 %2962
    %v2965 = vmul.f32 %v2867, %v2963
    %v2966 = vadd.f32 %v2960, %v2965
    %v2967 = vmul.f32 %v2839, %v2867
    %v2968 = vadd.f32 %v2967, 0.0
    %2970 = vrot.lane.b32.xlu0 %v2909, 124
    %v2971 = vpop.permute.xlu0 %2970
    %v2973 = vmul.f32 %v2853, %v2971
    %v2974 = vadd.f32 %v2968, %v2973
    %v2975 = vmul.f32 %v2867, %v2942
    %v2976 = vadd.f32 %v2974, %v2975
    %2978 = vrot.lane.b32.xlu0 %v2839, 4
    %v2979 = vpop.permute.xlu0 %2978
    %v2981 = vmul.f32 %v2880, %v2979
    %v2982 = vadd.f32 %v2981, 0.0
    %v2983 = vmul.f32 %v2896, %v2947
    %2985 = vrot.lane.b32.xlu0 %v2983, 4
    %v2986 = vpop.permute.xlu0 %2985
    %v2988 = vadd.f32 %v2982, %v2986
    %2989 = vrot.lane.b32.xlu0 %v2921, 124
    %v2990 = vpop.permute.xlu0 %2989
    %v2992 = vmul.f32 %v2909, %v2990
    %v2993 = vadd.f32 %v2988, %v2992
    %v2994 = vadd.f32 %v2949, 0.0
    %v2995 = vmul.f32 %v2896, %v2896
    %v2996 = vadd.f32 %v2994, %v2995
    %2997 = vrot.lane.b32.xlu0 %v2934, 124
    %v2998 = vpop.permute.xlu0 %2997
    %v3000 = vmul.f32 %v2909, %v2998
    %3002 = vrot.lane.b32.xlu0 %v3000, 124
    %v3003 = vpop.permute.xlu0 %3002
    %v3005 = vadd.f32 %v2996, %v3003
    %3007 = vrot.lane.b32.xlu0 %v2867, 4
    %v3008 = vpop.permute.xlu0 %3007
    %v3010 = vmul.f32 %v2880, %v3008
    %v3011 = vadd.f32 %v3010, 0.0
    %v3012 = vmul.f32 %v2896, %v2971
    %3014 = vrot.lane.b32.xlu0 %v3012, 4
    %v3015 = vpop.permute.xlu0 %3014
    %v3017 = vadd.f32 %v3011, %v3015
    %3019 = vrot.lane.b32.xlu0 %v2942, 4
    %v3020 = vpop.permute.xlu0 %3019
    %v3022 = vmul.f32 %v2909, %v3020
    %v3023 = vadd.f32 %v3017, %v3022
    %3024 = vrot.lane.b32.xlu0 %v2839, 8
    %v3025 = vpop.permute.xlu0 %3024
    %v3027 = vmul.f32 %v2921, %v3025
    %v3028 = vadd.f32 %v3027, 0.0
    %3029 = vrot.lane.b32.xlu0 %v2880, 4
    %v3030 = vpop.permute.xlu0 %3029
    %v3032 = vmul.f32 %v2934, %v3030
    %v3033 = vadd.f32 %v3028, %v3032
    %v3034 = vmul.f32 %v2942, %v2953
    %3036 = vrot.lane.b32.xlu0 %v3034, 8
    %v3037 = vpop.permute.xlu0 %3036
    %v3039 = vadd.f32 %v3033, %v3037
    %3041 = vrot.lane.b32.xlu0 %v2853, 8
    %v3042 = vpop.permute.xlu0 %3041
    %v3044 = vmul.f32 %v2921, %v3042
    %v3045 = vadd.f32 %v3044, 0.0
    %3047 = vrot.lane.b32.xlu0 %v2896, 8
    %v3048 = vpop.permute.xlu0 %3047
    %v3050 = vmul.f32 %v2934, %v3048
    %v3051 = vadd.f32 %v3045, %v3050
    %v3052 = vmul.f32 %v2942, %v2963
    %3054 = vrot.lane.b32.xlu0 %v3052, 8
    %v3055 = vpop.permute.xlu0 %3054
    %v3057 = vadd.f32 %v3051, %v3055
    %v3058 = vadd.f32 %v2955, 0.0
    %v3059 = vadd.f32 %v3058, %v3003
    %v3060 = vmul.f32 %v2942, %v2942
    %v3061 = vadd.f32 %v3059, %v3060
    %v3062 = vmul.f32 %v2956, %v2956
    %v3063 = vadd.f32 %v3062, 0.0
    %3065 = vrot.lane.b32.xlu0 %v2993, 124
    %v3066 = vpop.permute.xlu0 %3065
    %v3068 = vmul.f32 %v2966, %v3066
    %v3069 = vadd.f32 %v3063, %v3068
    %3071 = vrot.lane.b32.xlu0 %v3039, 120
    %v3072 = vpop.permute.xlu0 %3071
    %v3074 = vmul.f32 %v2976, %v3072
    %v3075 = vadd.f32 %v3069, %v3074
    %v3076 = vmul.f32 %v2956, %v2966
    %v3077 = vadd.f32 %v3076, 0.0
    %v3078 = vmul.f32 %v2966, %v3005
    %v3079 = vadd.f32 %v3077, %v3078
    %3081 = vrot.lane.b32.xlu0 %v3057, 120
    %v3082 = vpop.permute.xlu0 %3081
    %v3084 = vmul.f32 %v2976, %v3082
    %v3085 = vadd.f32 %v3079, %v3084
    %v3086 = vmul.f32 %v2956, %v2976
    %v3087 = vadd.f32 %v3086, 0.0
    %3089 = vrot.lane.b32.xlu0 %v3023, 124
    %v3090 = vpop.permute.xlu0 %3089
    %v3092 = vmul.f32 %v2966, %v3090
    %v3093 = vadd.f32 %v3087, %v3092
    %v3094 = vmul.f32 %v2976, %v3061
    %v3095 = vadd.f32 %v3093, %v3094
    %3097 = vrot.lane.b32.xlu0 %v2956, 4
    %v3098 = vpop.permute.xlu0 %3097
    %v3100 = vmul.f32 %v2993, %v3098
    %v3101 = vadd.f32 %v3100, 0.0
    %v3102 = vmul.f32 %v3005, %v3066
    %3104 = vrot.lane.b32.xlu0 %v3102, 4
    %v3105 = vpop.permute.xlu0 %3104
    %v3107 = vadd.f32 %v3101, %v3105
    %3108 = vrot.lane.b32.xlu0 %v3039, 124
    %v3109 = vpop.permute.xlu0 %3108
    %v3111 = vmul.f32 %v3023, %v3109
    %v3112 = vadd.f32 %v3107, %v3111
    %v3113 = vadd.f32 %v3068, 0.0
    %v3114 = vmul.f32 %v3005, %v3005
    %v3115 = vadd.f32 %v3113, %v3114
    %3116 = vrot.lane.b32.xlu0 %v3057, 124
    %v3117 = vpop.permute.xlu0 %3116
    %v3119 = vmul.f32 %v3023, %v3117
    %3121 = vrot.lane.b32.xlu0 %v3119, 124
    %v3122 = vpop.permute.xlu0 %3121
    %v3124 = vadd.f32 %v3115, %v3122
    %3126 = vrot.lane.b32.xlu0 %v2976, 4
    %v3127 = vpop.permute.xlu0 %3126
    %v3129 = vmul.f32 %v2993, %v3127
    %v3130 = vadd.f32 %v3129, 0.0
    %v3131 = vmul.f32 %v3005, %v3090
    %3133 = vrot.lane.b32.xlu0 %v3131, 4
    %v3134 = vpop.permute.xlu0 %3133
    %v3136 = vadd.f32 %v3130, %v3134
    %3138 = vrot.lane.b32.xlu0 %v3061, 4
    %v3139 = vpop.permute.xlu0 %3138
    %v3141 = vmul.f32 %v3023, %v3139
    %v3142 = vadd.f32 %v3136, %v3141
    %3143 = vrot.lane.b32.xlu0 %v2956, 8
    %v3144 = vpop.permute.xlu0 %3143
    %v3146 = vmul.f32 %v3039, %v3144
    %v3147 = vadd.f32 %v3146, 0.0
    %3148 = vrot.lane.b32.xlu0 %v2993, 4
    %v3149 = vpop.permute.xlu0 %3148
    %v3151 = vmul.f32 %v3057, %v3149
    %v3152 = vadd.f32 %v3147, %v3151
    %v3153 = vmul.f32 %v3061, %v3072
    %3155 = vrot.lane.b32.xlu0 %v3153, 8
    %v3156 = vpop.permute.xlu0 %3155
    %v3158 = vadd.f32 %v3152, %v3156
    %3160 = vrot.lane.b32.xlu0 %v2966, 8
    %v3161 = vpop.permute.xlu0 %3160
    %v3163 = vmul.f32 %v3039, %v3161
    %v3164 = vadd.f32 %v3163, 0.0
    %3166 = vrot.lane.b32.xlu0 %v3005, 8
    %v3167 = vpop.permute.xlu0 %3166
    %v3169 = vmul.f32 %v3057, %v3167
    %v3170 = vadd.f32 %v3164, %v3169
    %v3171 = vmul.f32 %v3061, %v3082
    %3173 = vrot.lane.b32.xlu0 %v3171, 8
    %v3174 = vpop.permute.xlu0 %3173
    %v3176 = vadd.f32 %v3170, %v3174
    %v3177 = vadd.f32 %v3074, 0.0
    %v3178 = vadd.f32 %v3177, %v3122
    %v3179 = vmul.f32 %v3061, %v3061
    %v3180 = vadd.f32 %v3178, %v3179
    %v3181 = vmul.f32 %v3075, %v3075
    %v3182 = vadd.f32 %v3181, 0.0
    %3184 = vrot.lane.b32.xlu0 %v3112, 124
    %v3185 = vpop.permute.xlu0 %3184
    %v3187 = vmul.f32 %v3085, %v3185
    %v3188 = vadd.f32 %v3182, %v3187
    %3190 = vrot.lane.b32.xlu0 %v3158, 120
    %v3191 = vpop.permute.xlu0 %3190
    %v3193 = vmul.f32 %v3095, %v3191
    %v3194 = vadd.f32 %v3188, %v3193
    %v3195 = vmul.f32 %v3075, %v3085
    %v3196 = vadd.f32 %v3195, 0.0
    %v3197 = vmul.f32 %v3085, %v3124
    %v3198 = vadd.f32 %v3196, %v3197
    %3200 = vrot.lane.b32.xlu0 %v3176, 120
    %v3201 = vpop.permute.xlu0 %3200
    %v3203 = vmul.f32 %v3095, %v3201
    %v3204 = vadd.f32 %v3198, %v3203
    %v3205 = vmul.f32 %v3075, %v3095
    %v3206 = vadd.f32 %v3205, 0.0
    %3208 = vrot.lane.b32.xlu0 %v3142, 124
    %v3209 = vpop.permute.xlu0 %3208
    %v3211 = vmul.f32 %v3085, %v3209
    %v3212 = vadd.f32 %v3206, %v3211
    %v3213 = vmul.f32 %v3095, %v3180
    %v3214 = vadd.f32 %v3212, %v3213
    %3216 = vrot.lane.b32.xlu0 %v3075, 4
    %v3217 = vpop.permute.xlu0 %3216
    %v3219 = vmul.f32 %v3112, %v3217
    %v3220 = vadd.f32 %v3219, 0.0
    %v3221 = vmul.f32 %v3124, %v3185
    %3223 = vrot.lane.b32.xlu0 %v3221, 4
    %v3224 = vpop.permute.xlu0 %3223
    %v3226 = vadd.f32 %v3220, %v3224
    %3227 = vrot.lane.b32.xlu0 %v3158, 124
    %v3228 = vpop.permute.xlu0 %3227
    %v3230 = vmul.f32 %v3142, %v3228
    %v3231 = vadd.f32 %v3226, %v3230
    %v3232 = vadd.f32 %v3187, 0.0
    %v3233 = vmul.f32 %v3124, %v3124
    %v3234 = vadd.f32 %v3232, %v3233
    %3235 = vrot.lane.b32.xlu0 %v3176, 124
    %v3236 = vpop.permute.xlu0 %3235
    %v3238 = vmul.f32 %v3142, %v3236
    %3240 = vrot.lane.b32.xlu0 %v3238, 124
    %v3241 = vpop.permute.xlu0 %3240
    %v3243 = vadd.f32 %v3234, %v3241
    %3245 = vrot.lane.b32.xlu0 %v3095, 4
    %v3246 = vpop.permute.xlu0 %3245
    %v3248 = vmul.f32 %v3112, %v3246
    %v3249 = vadd.f32 %v3248, 0.0
    %v3250 = vmul.f32 %v3124, %v3209
    %3252 = vrot.lane.b32.xlu0 %v3250, 4
    %v3253 = vpop.permute.xlu0 %3252
    %v3255 = vadd.f32 %v3249, %v3253
    %3257 = vrot.lane.b32.xlu0 %v3180, 4
    %v3258 = vpop.permute.xlu0 %3257
    %v3260 = vmul.f32 %v3142, %v3258
    %v3261 = vadd.f32 %v3255, %v3260
    %3262 = vrot.lane.b32.xlu0 %v3075, 8
    %v3263 = vpop.permute.xlu0 %3262
    %v3265 = vmul.f32 %v3158, %v3263
    %v3266 = vadd.f32 %v3265, 0.0
    %3267 = vrot.lane.b32.xlu0 %v3112, 4
    %v3268 = vpop.permute.xlu0 %3267
    %v3270 = vmul.f32 %v3176, %v3268
    %v3271 = vadd.f32 %v3266, %v3270
    %v3272 = vmul.f32 %v3180, %v3191
    %3274 = vrot.lane.b32.xlu0 %v3272, 8
    %v3275 = vpop.permute.xlu0 %3274
    %v3277 = vadd.f32 %v3271, %v3275
    %3279 = vrot.lane.b32.xlu0 %v3085, 8
    %v3280 = vpop.permute.xlu0 %3279
    %v3282 = vmul.f32 %v3158, %v3280
    %v3283 = vadd.f32 %v3282, 0.0
    %3285 = vrot.lane.b32.xlu0 %v3124, 8
    %v3286 = vpop.permute.xlu0 %3285
    %v3288 = vmul.f32 %v3176, %v3286
    %v3289 = vadd.f32 %v3283, %v3288
    %v3290 = vmul.f32 %v3180, %v3201
    %3292 = vrot.lane.b32.xlu0 %v3290, 8
    %v3293 = vpop.permute.xlu0 %3292
    %v3295 = vadd.f32 %v3289, %v3293
    %v3296 = vadd.f32 %v3193, 0.0
    %v3297 = vadd.f32 %v3296, %v3241
    %v3298 = vmul.f32 %v3180, %v3180
    %v3299 = vadd.f32 %v3297, %v3298
    %v3300 = vmul.f32 %v3194, %v3194
    %v3301 = vadd.f32 %v3300, 0.0
    %3303 = vrot.lane.b32.xlu0 %v3231, 124
    %v3304 = vpop.permute.xlu0 %3303
    %v3306 = vmul.f32 %v3204, %v3304
    %v3307 = vadd.f32 %v3301, %v3306
    %3309 = vrot.lane.b32.xlu0 %v3277, 120
    %v3310 = vpop.permute.xlu0 %3309
    %v3312 = vmul.f32 %v3214, %v3310
    %v3313 = vadd.f32 %v3307, %v3312
    %v3314 = vmul.f32 %v3194, %v3204
    %v3315 = vadd.f32 %v3314, 0.0
    %v3316 = vmul.f32 %v3204, %v3243
    %v3317 = vadd.f32 %v3315, %v3316
    %3319 = vrot.lane.b32.xlu0 %v3295, 120
    %v3320 = vpop.permute.xlu0 %3319
    %v3322 = vmul.f32 %v3214, %v3320
    %v3323 = vadd.f32 %v3317, %v3322
    %v3324 = vmul.f32 %v3194, %v3214
    %v3325 = vadd.f32 %v3324, 0.0
    %3327 = vrot.lane.b32.xlu0 %v3261, 124
    %v3328 = vpop.permute.xlu0 %3327
    %v3330 = vmul.f32 %v3204, %v3328
    %v3331 = vadd.f32 %v3325, %v3330
    %v3332 = vmul.f32 %v3214, %v3299
    %v3333 = vadd.f32 %v3331, %v3332
    %3335 = vrot.lane.b32.xlu0 %v3194, 4
    %v3336 = vpop.permute.xlu0 %3335
    %v3338 = vmul.f32 %v3231, %v3336
    %v3339 = vadd.f32 %v3338, 0.0
    %v3340 = vmul.f32 %v3243, %v3304
    %3342 = vrot.lane.b32.xlu0 %v3340, 4
    %v3343 = vpop.permute.xlu0 %3342
    %v3345 = vadd.f32 %v3339, %v3343
    %3346 = vrot.lane.b32.xlu0 %v3277, 124
    %v3347 = vpop.permute.xlu0 %3346
    %v3349 = vmul.f32 %v3261, %v3347
    %v3350 = vadd.f32 %v3345, %v3349
    %v3351 = vadd.f32 %v3306, 0.0
    %v3352 = vmul.f32 %v3243, %v3243
    %v3353 = vadd.f32 %v3351, %v3352
    %3354 = vrot.lane.b32.xlu0 %v3295, 124
    %v3355 = vpop.permute.xlu0 %3354
    %v3357 = vmul.f32 %v3261, %v3355
    %3359 = vrot.lane.b32.xlu0 %v3357, 124
    %v3360 = vpop.permute.xlu0 %3359
    %v3362 = vadd.f32 %v3353, %v3360
    %3364 = vrot.lane.b32.xlu0 %v3214, 4
    %v3365 = vpop.permute.xlu0 %3364
    %v3367 = vmul.f32 %v3231, %v3365
    %v3368 = vadd.f32 %v3367, 0.0
    %v3369 = vmul.f32 %v3243, %v3328
    %3371 = vrot.lane.b32.xlu0 %v3369, 4
    %v3372 = vpop.permute.xlu0 %3371
    %v3374 = vadd.f32 %v3368, %v3372
    %3376 = vrot.lane.b32.xlu0 %v3299, 4
    %v3377 = vpop.permute.xlu0 %3376
    %v3379 = vmul.f32 %v3261, %v3377
    %v3380 = vadd.f32 %v3374, %v3379
    %3381 = vrot.lane.b32.xlu0 %v3194, 8
    %v3382 = vpop.permute.xlu0 %3381
    %v3384 = vmul.f32 %v3277, %v3382
    %v3385 = vadd.f32 %v3384, 0.0
    %3386 = vrot.lane.b32.xlu0 %v3231, 4
    %v3387 = vpop.permute.xlu0 %3386
    %v3389 = vmul.f32 %v3295, %v3387
    %v3390 = vadd.f32 %v3385, %v3389
    %v3391 = vmul.f32 %v3299, %v3310
    %3393 = vrot.lane.b32.xlu0 %v3391, 8
    %v3394 = vpop.permute.xlu0 %3393
    %v3396 = vadd.f32 %v3390, %v3394
    %3398 = vrot.lane.b32.xlu0 %v3204, 8
    %v3399 = vpop.permute.xlu0 %3398
    %v3401 = vmul.f32 %v3277, %v3399
    %v3402 = vadd.f32 %v3401, 0.0
    %3404 = vrot.lane.b32.xlu0 %v3243, 8
    %v3405 = vpop.permute.xlu0 %3404
    %v3407 = vmul.f32 %v3295, %v3405
    %v3408 = vadd.f32 %v3402, %v3407
    %v3409 = vmul.f32 %v3299, %v3320
    %3411 = vrot.lane.b32.xlu0 %v3409, 8
    %v3412 = vpop.permute.xlu0 %3411
    %v3414 = vadd.f32 %v3408, %v3412
    %v3415 = vadd.f32 %v3312, 0.0
    %v3416 = vadd.f32 %v3415, %v3360
    %v3417 = vmul.f32 %v3299, %v3299
    %v3418 = vadd.f32 %v3416, %v3417
    %v3419 = vmul.f32 %v3313, %v3313
    %v3420 = vadd.f32 %v3419, 0.0
    %3422 = vrot.lane.b32.xlu0 %v3350, 124
    %v3423 = vpop.permute.xlu0 %3422
    %v3425 = vmul.f32 %v3323, %v3423
    %v3426 = vadd.f32 %v3420, %v3425
    %3428 = vrot.lane.b32.xlu0 %v3396, 120
    %v3429 = vpop.permute.xlu0 %3428
    %v3431 = vmul.f32 %v3333, %v3429
    %v3432 = vadd.f32 %v3426, %v3431
    %v3433 = vmul.f32 %v3313, %v3323
    %v3434 = vadd.f32 %v3433, 0.0
    %v3435 = vmul.f32 %v3323, %v3362
    %v3436 = vadd.f32 %v3434, %v3435
    %3438 = vrot.lane.b32.xlu0 %v3414, 120
    %v3439 = vpop.permute.xlu0 %3438
    %v3441 = vmul.f32 %v3333, %v3439
    %v3442 = vadd.f32 %v3436, %v3441
    %v3443 = vmul.f32 %v3313, %v3333
    %v3444 = vadd.f32 %v3443, 0.0
    %3446 = vrot.lane.b32.xlu0 %v3380, 124
    %v3447 = vpop.permute.xlu0 %3446
    %v3449 = vmul.f32 %v3323, %v3447
    %v3450 = vadd.f32 %v3444, %v3449
    %v3451 = vmul.f32 %v3333, %v3418
    %v3452 = vadd.f32 %v3450, %v3451
    %3454 = vrot.lane.b32.xlu0 %v3313, 4
    %v3455 = vpop.permute.xlu0 %3454
    %v3457 = vmul.f32 %v3350, %v3455
    %v3458 = vadd.f32 %v3457, 0.0
    %v3459 = vmul.f32 %v3362, %v3423
    %3461 = vrot.lane.b32.xlu0 %v3459, 4
    %v3462 = vpop.permute.xlu0 %3461
    %v3464 = vadd.f32 %v3458, %v3462
    %3465 = vrot.lane.b32.xlu0 %v3396, 124
    %v3466 = vpop.permute.xlu0 %3465
    %v3468 = vmul.f32 %v3380, %v3466
    %v3469 = vadd.f32 %v3464, %v3468
    %v3470 = vadd.f32 %v3425, 0.0
    %v3471 = vmul.f32 %v3362, %v3362
    %v3472 = vadd.f32 %v3470, %v3471
    %3473 = vrot.lane.b32.xlu0 %v3414, 124
    %v3474 = vpop.permute.xlu0 %3473
    %v3476 = vmul.f32 %v3380, %v3474
    %3478 = vrot.lane.b32.xlu0 %v3476, 124
    %v3479 = vpop.permute.xlu0 %3478
    %v3481 = vadd.f32 %v3472, %v3479
    %3483 = vrot.lane.b32.xlu0 %v3333, 4
    %v3484 = vpop.permute.xlu0 %3483
    %v3486 = vmul.f32 %v3350, %v3484
    %v3487 = vadd.f32 %v3486, 0.0
    %v3488 = vmul.f32 %v3362, %v3447
    %3490 = vrot.lane.b32.xlu0 %v3488, 4
    %v3491 = vpop.permute.xlu0 %3490
    %v3493 = vadd.f32 %v3487, %v3491
    %3495 = vrot.lane.b32.xlu0 %v3418, 4
    %v3496 = vpop.permute.xlu0 %3495
    %v3498 = vmul.f32 %v3380, %v3496
    %v3499 = vadd.f32 %v3493, %v3498
    %3500 = vrot.lane.b32.xlu0 %v3313, 8
    %v3501 = vpop.permute.xlu0 %3500
    %v3503 = vmul.f32 %v3396, %v3501
    %v3504 = vadd.f32 %v3503, 0.0
    %3505 = vrot.lane.b32.xlu0 %v3350, 4
    %v3506 = vpop.permute.xlu0 %3505
    %v3508 = vmul.f32 %v3414, %v3506
    %v3509 = vadd.f32 %v3504, %v3508
    %v3510 = vmul.f32 %v3418, %v3429
    %3512 = vrot.lane.b32.xlu0 %v3510, 8
    %v3513 = vpop.permute.xlu0 %3512
    %v3515 = vadd.f32 %v3509, %v3513
    %3517 = vrot.lane.b32.xlu0 %v3323, 8
    %v3518 = vpop.permute.xlu0 %3517
    %v3520 = vmul.f32 %v3396, %v3518
    %v3521 = vadd.f32 %v3520, 0.0
    %3523 = vrot.lane.b32.xlu0 %v3362, 8
    %v3524 = vpop.permute.xlu0 %3523
    %v3526 = vmul.f32 %v3414, %v3524
    %v3527 = vadd.f32 %v3521, %v3526
    %v3528 = vmul.f32 %v3418, %v3439
    %3530 = vrot.lane.b32.xlu0 %v3528, 8
    %v3531 = vpop.permute.xlu0 %3530
    %v3533 = vadd.f32 %v3527, %v3531
    %v3534 = vadd.f32 %v3431, 0.0
    %v3535 = vadd.f32 %v3534, %v3479
    %v3536 = vmul.f32 %v3418, %v3418
    %v3537 = vadd.f32 %v3535, %v3536
    %v3538 = vmul.f32 %v3432, %v3432
    %v3539 = vadd.f32 %v3538, 0.0
    %3541 = vrot.lane.b32.xlu0 %v3469, 124
    %v3542 = vpop.permute.xlu0 %3541
    %v3544 = vmul.f32 %v3442, %v3542
    %v3545 = vadd.f32 %v3539, %v3544
    %3547 = vrot.lane.b32.xlu0 %v3515, 120
    %v3548 = vpop.permute.xlu0 %3547
    %v3550 = vmul.f32 %v3452, %v3548
    %v3551 = vadd.f32 %v3545, %v3550
    %v3552 = vmul.f32 %v3432, %v3442
    %v3553 = vadd.f32 %v3552, 0.0
    %v3554 = vmul.f32 %v3442, %v3481
    %v3555 = vadd.f32 %v3553, %v3554
    %3557 = vrot.lane.b32.xlu0 %v3533, 120
    %v3558 = vpop.permute.xlu0 %3557
    %v3560 = vmul.f32 %v3452, %v3558
    %v3561 = vadd.f32 %v3555, %v3560
    %v3562 = vmul.f32 %v3432, %v3452
    %v3563 = vadd.f32 %v3562, 0.0
    %3565 = vrot.lane.b32.xlu0 %v3499, 124
    %v3566 = vpop.permute.xlu0 %3565
    %v3568 = vmul.f32 %v3442, %v3566
    %v3569 = vadd.f32 %v3563, %v3568
    %v3570 = vmul.f32 %v3452, %v3537
    %v3571 = vadd.f32 %v3569, %v3570
    %3573 = vrot.lane.b32.xlu0 %v3432, 4
    %v3574 = vpop.permute.xlu0 %3573
    %v3576 = vmul.f32 %v3469, %v3574
    %v3577 = vadd.f32 %v3576, 0.0
    %v3578 = vmul.f32 %v3481, %v3542
    %3580 = vrot.lane.b32.xlu0 %v3578, 4
    %v3581 = vpop.permute.xlu0 %3580
    %v3583 = vadd.f32 %v3577, %v3581
    %3584 = vrot.lane.b32.xlu0 %v3515, 124
    %v3585 = vpop.permute.xlu0 %3584
    %v3587 = vmul.f32 %v3499, %v3585
    %v3588 = vadd.f32 %v3583, %v3587
    %v3589 = vadd.f32 %v3544, 0.0
    %v3590 = vmul.f32 %v3481, %v3481
    %v3591 = vadd.f32 %v3589, %v3590
    %3592 = vrot.lane.b32.xlu0 %v3533, 124
    %v3593 = vpop.permute.xlu0 %3592
    %v3595 = vmul.f32 %v3499, %v3593
    %3597 = vrot.lane.b32.xlu0 %v3595, 124
    %v3598 = vpop.permute.xlu0 %3597
    %v3600 = vadd.f32 %v3591, %v3598
    %3602 = vrot.lane.b32.xlu0 %v3452, 4
    %v3603 = vpop.permute.xlu0 %3602
    %v3605 = vmul.f32 %v3469, %v3603
    %v3606 = vadd.f32 %v3605, 0.0
    %v3607 = vmul.f32 %v3481, %v3566
    %3609 = vrot.lane.b32.xlu0 %v3607, 4
    %v3610 = vpop.permute.xlu0 %3609
    %v3612 = vadd.f32 %v3606, %v3610
    %3614 = vrot.lane.b32.xlu0 %v3537, 4
    %v3615 = vpop.permute.xlu0 %3614
    %v3617 = vmul.f32 %v3499, %v3615
    %v3618 = vadd.f32 %v3612, %v3617
    %3619 = vrot.lane.b32.xlu0 %v3432, 8
    %v3620 = vpop.permute.xlu0 %3619
    %v3622 = vmul.f32 %v3515, %v3620
    %v3623 = vadd.f32 %v3622, 0.0
    %3624 = vrot.lane.b32.xlu0 %v3469, 4
    %v3625 = vpop.permute.xlu0 %3624
    %v3627 = vmul.f32 %v3533, %v3625
    %v3628 = vadd.f32 %v3623, %v3627
    %v3629 = vmul.f32 %v3537, %v3548
    %3631 = vrot.lane.b32.xlu0 %v3629, 8
    %v3632 = vpop.permute.xlu0 %3631
    %v3634 = vadd.f32 %v3628, %v3632
    %3636 = vrot.lane.b32.xlu0 %v3442, 8
    %v3637 = vpop.permute.xlu0 %3636
    %v3639 = vmul.f32 %v3515, %v3637
    %v3640 = vadd.f32 %v3639, 0.0
    %3642 = vrot.lane.b32.xlu0 %v3481, 8
    %v3643 = vpop.permute.xlu0 %3642
    %v3645 = vmul.f32 %v3533, %v3643
    %v3646 = vadd.f32 %v3640, %v3645
    %v3647 = vmul.f32 %v3537, %v3558
    %3649 = vrot.lane.b32.xlu0 %v3647, 8
    %v3650 = vpop.permute.xlu0 %3649
    %v3652 = vadd.f32 %v3646, %v3650
    %v3653 = vadd.f32 %v3550, 0.0
    %v3654 = vadd.f32 %v3653, %v3598
    %v3655 = vmul.f32 %v3537, %v3537
    %v3656 = vadd.f32 %v3654, %v3655
    %3658 = vrot.lane.b32.xlu0 %v3551, 112
    %v3659 = vpop.permute.xlu0 %3658
    %3662 = vrot.lane.b32.xlu0 %v3561, 116
    %v3663 = vpop.permute.xlu0 %3662
    %3666 = vrot.lane.b32.xlu0 %v3571, 120
    %v3667 = vpop.permute.xlu0 %3666
    %3670 = vrot.lane.b32.xlu0 %v3588, 120
    %v3671 = vpop.permute.xlu0 %3670
    %3674 = vrot.lane.b32.xlu0 %v3652, 4
    %v3675 = vpop.permute.xlu0 %3674
    %3678 = vrot.lane.b32.xlu0 %v3656, 16
    %v3679 = vpop.permute.xlu0 %3678
    %vm3681 = vcmask 31744
    %v3682 = vsel %vm3681, %v3659, %v3663
    %v3683 = vsel %vm99, %v3682, %v3667
    %vm3684 = vcmask 97280
    %v3685 = vsel %vm3684, %v3683, %v3671
    %vm3686 = vcmask 130048
    %v3687 = vsel %vm3686, %v3685, %v3600
    %vm3688 = vcmask 162816
    %v3689 = vsel %vm3688, %v3687, %v3618
    %vm3690 = vcmask 195584
    %v3691 = vsel %vm3690, %v3689, %v3634
    %vm3692 = vcmask 228352
    %v3693 = vsel %vm3692, %v3691, %v3675
    %v3694 = vsel %vm788, %v3693, %v3679
    %vm3695 = vcmask 124000
    %v3696 = vsel %vm3695, %v1279, -inf
    %3697 = vmax.xlane.f32.xlu0 %v3696
    %v3698 = vpop.xlane.xlu0 %3697
    %v3699 = vsub.f32 %v1279, %v3698
    %v3700 = vmul.f32 %v3699, 1.442695
    %v3701 = vpow.pop %v3700
    %3703 = vrot.lane.b32.xlu0 %v3701, 116
    %v3704 = vpop.permute.xlu0 %3703
    %vm3706 = vcmask 25600
    %v3707 = vsel %vm3706, %v3704, 0.0
    %3708 = vadd.xlane.f32.xlu0 %v3707
    %v3709 = vpop.xlane.xlu0 %3708
    %v3710 = vrcp.pop %v3709
    %v3711 = vmul.f32 %v3701, %v3710
    %3713 = vrot.lane.b32.xlu0 %v3694, 12
    %v3714 = vpop.permute.xlu0 %3713
    %3717 = vrot.lane.b32.xlu0 %v3711, 36
    %v3718 = vpop.permute.xlu0 %3717
    %v3720 = vsel %vm3684, %v1279, %v3714
    %vm3721 = vcmask 392192
    %v3722 = vsel %vm3721, %v3720, %v3718
    %vm3723 = vcmask 424960
    %v3724 = vsel %vm3723, %v3722, 0.0
    %3725 = vst [vmem:[%s3] sm:$0x3] %v3724
    // Predicated region
    $region18: #{n2mnet_forward.1} parent=1 // pred_check
      _
    $region19: #{n2mnet_forward.1} parent=1 // pred_check_branch
      %3727 = sbr.rel (0) target = $region21
    $region20: #{n2mnet_forward.1} parent=1 // pred_region
      _
    $region21: #{n2mnet_forward.1} parent=1 // pred_fallthru
      _
    // Predicated region
    $region22: #{n2mnet_forward.1} parent=1 // pred_check
      _
    $region23: #{n2mnet_forward.1} parent=1 // pred_check_branch
      %3729 = sbr.rel (0) target = $region25
    $region24: #{n2mnet_forward.1} parent=1 // pred_region
      _
    $region25: #{n2mnet_forward.1} parent=1 // pred_fallthru
      _
    %3730 = vsyncpa [#allocation3], 1

</llo_original>
